<compile_context>
chip_gen: v5e
topology: v5e:2x2
jax: 0.10.0
libtpu: 0.0.40
codegen_flags: <defaults>
</compile_context>

<pallas_src>
import jax
import jax.numpy as jnp
from jax.experimental import pallas as pl
from jax.experimental.pallas import tpu as pltpu


_SLOPE = 0.02  # matches F.leaky_relu(negative_slope=0.02) in the PyTorch spec


def _round_up(x, m):
    return ((x + m - 1) // m) * m


def _choose_tile(n, max_tile):
    """Point-tile size: full N if it fits, else the largest multiple of 8
    <= max_tile (grid uses cdiv + tail mask, so TN need not divide N)."""
    if n <= max_tile:
        return n
    return max(8, (max_tile // 8) * 8)


def _use_bf16_epilogue():
    """bf16 VALU exists on v6e / v7x; keep the f32 epilogue on v5e/older."""
    try:
        kind = jax.devices()[0].device_kind.lower()
    except Exception:
        return False
    return any(tag in kind for tag in ("v6", "v7", "tpu7"))


def _vmem_capacity_bytes():
    try:
        return int(pltpu.get_tpu_info().vmem_capacity_bytes)
    except Exception:
        return 64 * 2 ** 20  # conservative (v7x-sized) fallback


def _make_kernel(n_points, tile_n, num_tiles, bf16_epilogue):
    act_dtype = jnp.bfloat16 if bf16_epilogue else jnp.float32
    has_tail = (n_points % tile_n) != 0

    def kernel(x_ref,
               w1_ref, b1_ref, w2_ref, b2_ref, w3_ref, b3_ref,
               w4_ref, b4_ref, w5_ref, b5_ref, w6_ref, b6_ref,
               out_ref, acc_ref):
        t = pl.program_id(1)

        @pl.when(t == 0)
        def _init():
            acc_ref[...] = jnp.zeros_like(acc_ref)

        def layer(h, w_ref, b_ref):
            # bf16 operands on the MXU, f32 accumulation.
            h32 = jnp.dot(h.astype(jnp.bfloat16), w_ref[...],
                          preferred_element_type=jnp.float32)
            # Epilogue (bias + leaky_relu) in bf16 on v6e/v7x, f32 on v5e.
            h = h32.astype(act_dtype) + b_ref[...]
            return jnp.maximum(h, _SLOPE * h)   # leaky_relu as vmul + vmax

        h = x_ref[0]                               # (TN, dp) bf16
        h = layer(h, w1_ref, b1_ref)
        h = layer(h, w2_ref, b2_ref)
        h = layer(h, w3_ref, b3_ref)
        h = layer(h, w4_ref, b4_ref)
        h = layer(h, w5_ref, b5_ref)               # (TN, d5p)

        if has_tail:
            # Last tile is partially out of bounds: zero invalid rows before
            # the sum (padding alone would be wrong because of the biases).
            remaining = n_points - t * tile_n
            rows = jax.lax.broadcasted_iota(jnp.int32, (tile_n, 1), 0)
            h = jnp.where(rows < remaining, h, jnp.zeros_like(h))

        # Point-sum folded through the bias-only layer 6:
        #   sum_n(h5_n @ W6 + b6) == (sum_n h5_n) @ W6 + N * b6
        acc_ref[...] += jnp.sum(h.astype(jnp.float32), axis=0, keepdims=True)

        @pl.when(t == num_tiles - 1)
        def _finalize():
            out_ref[0] = (jnp.dot(acc_ref[...], w6_ref[...],
                                  preferred_element_type=jnp.float32)
                          + float(n_points) * b6_ref[...])

    return kernel


def test_net_forward(points, params, *, max_point_tile=2048):
    """points: (B, N, point_dim) float32.  Returns the torch-equivalent
    `6-layer MLP -> sum(axis=-2) -> squeeze()` result."""
    B, N, point_dim = points.shape
    d5, gf = params["w6"].shape

    bf16_epilogue = _use_bf16_epilogue()
    act_dtype = jnp.bfloat16 if bf16_epilogue else jnp.float32

    # --- host-side padding / dtype prep ---------------------------------
    dp = _round_up(point_dim, 8)     # sublane-friendly x last dim
    d5p = _round_up(d5, 128)         # lane-dense layer-5 output / accumulator
    gfp = _round_up(gf, 128)         # lane-dense final output store

    x = points.astype(jnp.bfloat16)  # streamed operand: bf16 halves DMA bytes
    if dp != point_dim:
        x = jnp.pad(x, ((0, 0), (0, 0), (0, dp - point_dim)))

    w1 = params["w1"]
    if dp != point_dim:
        w1 = jnp.pad(w1, ((0, dp - point_dim), (0, 0)))
    w5 = params["w5"]
    b5 = params["b5"].reshape(1, -1)
    if d5p != d5:
        w5 = jnp.pad(w5, ((0, 0), (0, d5p - d5)))
        b5 = jnp.pad(b5, ((0, 0), (0, d5p - d5)))
    w6 = jnp.pad(params["w6"], ((0, d5p - d5), (0, gfp - gf)))
    b6 = jnp.pad(params["b6"].reshape(1, -1), ((0, 0), (0, gfp - gf)))

    ws = [w1, params["w2"], params["w3"], params["w4"], w5]
    bs = [params["b1"], params["b2"], params["b3"], params["b4"], b5]
    ws = [w.astype(jnp.bfloat16) for w in ws]                # MXU operands
    bs = [b.reshape(1, -1).astype(act_dtype) for b in bs]    # epilogue dtype
    w6 = w6.astype(jnp.float32)      # applied once per batch -> keep f32
    b6 = b6.astype(jnp.float32)

    TN = _choose_tile(N, max_point_tile)
    T = pl.cdiv(N, TN)

    weight_args = []
    for w, b in zip(ws, bs):
        weight_args += [w, b]
    weight_args += [w6, b6]
    args = [x] + weight_args

    x_spec = pl.BlockSpec((1, TN, dp), lambda b, t: (b, t, 0))
    out_spec = pl.BlockSpec((1, 1, gfp), lambda b, t: (b, 0, 0))

    def make_specs(single_buffer):
        specs = [x_spec]
        for a in weight_args:
            if single_buffer:
                specs.append(pl.BlockSpec(a.shape, lambda b_, t_: (0, 0),
                                          pipeline_mode=pl.Buffered(1)))
            else:
                specs.append(pl.BlockSpec(a.shape, lambda b_, t_: (0, 0)))
        return specs

    kernel = _make_kernel(N, TN, T, bf16_epilogue)

    # --- VMEM budget (weights resident, x tile double-buffered, acts) ----
    weight_bytes = sum(int(a.size) * a.dtype.itemsize for a in weight_args)
    max_width = max(max(w.shape[1] for w in ws), d5p)
    x_tile_bytes = 2 * TN * dp * 2
    act_bytes = 4 * TN * max_width * 4
    out_bytes = 2 * gfp * 4 + d5p * 4
    cap = int(0.85 * _vmem_capacity_bytes())

    def make_limit(single_buffer):
        need = (weight_bytes * (1 if single_buffer else 2)
                + x_tile_bytes + act_bytes + out_bytes)
        return int(min(cap, max(24 * 2 ** 20, int(1.5 * need))))

    def run(single_buffer):
        return pl.pallas_call(
            kernel,
            out_shape=jax.ShapeDtypeStruct((B, 1, gfp), jnp.float32),
            grid=(B, T),
            in_specs=make_specs(single_buffer),
            out_specs=out_spec,
            scratch_shapes=[pltpu.VMEM((1, d5p), jnp.float32)],
            compiler_params=pltpu.CompilerParams(
                dimension_semantics=("parallel", "arbitrary"),
                vmem_limit_bytes=make_limit(single_buffer)),
        )(*args)

    if hasattr(pl, "Buffered"):
        try:
            out = run(True)
        except Exception:
            out = run(False)
    else:
        out = run(False)

    out = out.reshape(B, gfp)[:, :gf]
    return jnp.squeeze(out)          # torch .squeeze(): drops all size-1 dims


def init_params(point_dim, gf_dim, key):
    """Deterministic init mimicking nn.Linear default (uniform +-1/sqrt(fan_in)).

    Weights are stored transposed: (in_features, out_features)."""
    dims = [point_dim, gf_dim * 8, gf_dim * 8, gf_dim * 8,
            gf_dim * 4, gf_dim * 2, gf_dim]
    params = {}
    keys = jax.random.split(key, 2 * (len(dims) - 1))
    for i in range(len(dims) - 1):
        fan_in, fan_out = dims[i], dims[i + 1]
        bound = 1.0 / jnp.sqrt(fan_in)
        params[f"w{i+1}"] = jax.random.uniform(
            keys[2 * i], (fan_in, fan_out), jnp.float32, -bound, bound)
        params[f"b{i+1}"] = jax.random.uniform(
            keys[2 * i + 1], (1, fan_out), jnp.float32, -bound, bound)
    return params


def _ref_forward(points, params, *, bf16_epilogue):
    """Pure-JAX reference mirroring the kernel's precision chain
    (bf16 MXU operands, f32 accumulate, bf16-or-f32 epilogue, folded layer 6)."""
    act_dtype = jnp.bfloat16 if bf16_epilogue else jnp.float32
    h = points.astype(jnp.bfloat16)
    for k in range(1, 6):
        w = params[f"w{k}"].astype(jnp.bfloat16)
        b = params[f"b{k}"].reshape(-1).astype(act_dtype)
        h32 = jnp.dot(h.astype(jnp.bfloat16), w,
                      preferred_element_type=jnp.float32)
        h = h32.astype(act_dtype) + b
        h = jnp.maximum(h, _SLOPE * h)
    n = points.shape[-2]
    s = jnp.sum(h.astype(jnp.float32), axis=-2)
    out = (jnp.dot(s, params["w6"].astype(jnp.float32),
                   preferred_element_type=jnp.float32)
           + float(n) * params["b6"].reshape(-1))
    return jnp.squeeze(out)


if __name__ == "__main__":
    key = jax.random.PRNGKey(0)
    k_param, k_pts = jax.random.split(key)

    point_dim = 3
    gf_dim = 32
    B, N = 2, 8  # batch of 2, 8 points each

    params = init_params(point_dim, gf_dim, k_param)
    points = jax.random.normal(k_pts, (B, N, point_dim), jnp.float32)

    out = test_net_forward(points, params)
    out = jax.block_until_ready(out)

    ref = _ref_forward(points, params, bf16_epilogue=_use_bf16_epilogue())
    assert out.shape == ref.shape == (B, gf_dim), (out.shape, ref.shape)
    err = float(jnp.max(jnp.abs(out - ref)))
    assert jnp.allclose(out, ref, atol=1e-2, rtol=1e-2), err

    print("KERNEL_OK")
</pallas_src>

<mosaic_0001>
module attributes {stable_mosaic.version = 11 : i64} {
  func.func @kernel(%arg0: i32, %arg1: i32, %arg2: memref<1x8x8xbf16, #tpu.memory_space<vmem>>, %arg3: memref<8x256xbf16, #tpu.memory_space<vmem>>, %arg4: memref<1x256xf32, #tpu.memory_space<vmem>>, %arg5: memref<256x256xbf16, #tpu.memory_space<vmem>>, %arg6: memref<1x256xf32, #tpu.memory_space<vmem>>, %arg7: memref<256x256xbf16, #tpu.memory_space<vmem>>, %arg8: memref<1x256xf32, #tpu.memory_space<vmem>>, %arg9: memref<256x128xbf16, #tpu.memory_space<vmem>>, %arg10: memref<1x128xf32, #tpu.memory_space<vmem>>, %arg11: memref<128x128xbf16, #tpu.memory_space<vmem>>, %arg12: memref<1x128xf32, #tpu.memory_space<vmem>>, %arg13: memref<128x128xf32, #tpu.memory_space<vmem>>, %arg14: memref<1x128xf32, #tpu.memory_space<vmem>>, %arg15: memref<1x1x128xf32, #tpu.memory_space<vmem>>, %arg16: memref<1x128xf32, #tpu.memory_space<vmem>>) attributes {dimension_semantics = [#tpu.dimension_semantics<parallel>, #tpu.dimension_semantics<arbitrary>], iteration_bounds = array<i64: 2, 1>, scalar_prefetch = 0 : i64, scratch_operands = 1 : i64, tpu.core_type = #tpu.core_type<tc>, window_params = [{transform_indices = @transform_0, window_bounds = array<i64: 1, 8, 8>}, {pipeline_mode = #tpu.pipeline_mode<synchronous>, transform_indices = @transform_1, window_bounds = array<i64: 8, 256>}, {pipeline_mode = #tpu.pipeline_mode<synchronous>, transform_indices = @transform_2, window_bounds = array<i64: 1, 256>}, {pipeline_mode = #tpu.pipeline_mode<synchronous>, transform_indices = @transform_3, window_bounds = array<i64: 256, 256>}, {pipeline_mode = #tpu.pipeline_mode<synchronous>, transform_indices = @transform_4, window_bounds = array<i64: 1, 256>}, {pipeline_mode = #tpu.pipeline_mode<synchronous>, transform_indices = @transform_5, window_bounds = array<i64: 256, 256>}, {pipeline_mode = #tpu.pipeline_mode<synchronous>, transform_indices = @transform_6, window_bounds = array<i64: 1, 256>}, {pipeline_mode = #tpu.pipeline_mode<synchronous>, transform_indices = @transform_7, window_bounds = array<i64: 256, 128>}, {pipeline_mode = #tpu.pipeline_mode<synchronous>, transform_indices = @transform_8, window_bounds = array<i64: 1, 128>}, {pipeline_mode = #tpu.pipeline_mode<synchronous>, transform_indices = @transform_9, window_bounds = array<i64: 128, 128>}, {pipeline_mode = #tpu.pipeline_mode<synchronous>, transform_indices = @transform_10, window_bounds = array<i64: 1, 128>}, {pipeline_mode = #tpu.pipeline_mode<synchronous>, transform_indices = @transform_11, window_bounds = array<i64: 128, 128>}, {pipeline_mode = #tpu.pipeline_mode<synchronous>, transform_indices = @transform_12, window_bounds = array<i64: 1, 128>}, {transform_indices = @transform_13, window_bounds = array<i64: 1, 1, 128>}]} {
    %c0_i32 = arith.constant 0 : i32
    %0 = arith.cmpi eq, %arg1, %c0_i32 : i32
    %1 = arith.extui %0 : i1 to i32
    %c0_i32_0 = arith.constant 0 : i32
    %2 = arith.cmpi ne, %1, %c0_i32_0 : i32
    scf.if %2 {
      %cst_39 = arith.constant 0.000000e+00 : f32
      %57 = vector.broadcast %cst_39 : f32 to vector<1x128xf32>
      %c0_40 = arith.constant 0 : index
      %c0_41 = arith.constant 0 : index
      %58 = vector.load %arg16[%c0_40, %c0_41] : memref<1x128xf32, #tpu.memory_space<vmem>>, vector<1x128xf32>
      tpu.vector_store %arg16[%c0_40, %c0_41], %57 {strides = array<i32>} : memref<1x128xf32, #tpu.memory_space<vmem>>, vector<1x128xf32>,
    } else {
    }
    %c0 = arith.constant 0 : index
    %c0_1 = arith.constant 0 : index
    %c0_2 = arith.constant 0 : index
    %3 = vector.load %arg2[%c0, %c0_1, %c0_2] : memref<1x8x8xbf16, #tpu.memory_space<vmem>>, vector<1x8x8xbf16>
    %4 = vector.shape_cast %3 : vector<1x8x8xbf16> to vector<8x8xbf16>
    %c0_3 = arith.constant 0 : index
    %c0_4 = arith.constant 0 : index
    %5 = vector.load %arg3[%c0_3, %c0_4] : memref<8x256xbf16, #tpu.memory_space<vmem>>, vector<8x256xbf16>
    %cst = arith.constant dense<0.000000e+00> : vector<8x256xf32>
    %6 = tpu.matmul %4, %5, %cst {dimension_numbers = #tpu.dot_dimension_numbers<[1], [0], [0], [1], [0, 0, 1, 1], [], []>} : vector<8x8xbf16>, vector<8x256xbf16>, vector<8x256xf32> -> vector<8x256xf32>
    %c0_5 = arith.constant 0 : index
    %c0_6 = arith.constant 0 : index
    %7 = vector.load %arg4[%c0_5, %c0_6] : memref<1x256xf32, #tpu.memory_space<vmem>>, vector<1x256xf32>
    %8 = vector.broadcast %7 : vector<1x256xf32> to vector<8x256xf32>
    %9 = arith.addf %6, %8 : vector<8x256xf32>
    %cst_7 = arith.constant 2.000000e-02 : f32
    %10 = vector.broadcast %cst_7 : f32 to vector<8x256xf32>
    %11 = arith.mulf %10, %9 : vector<8x256xf32>
    %12 = arith.maximumf %9, %11 : vector<8x256xf32>
    %13 = arith.truncf %12 : vector<8x256xf32> to vector<8x256xbf16>
    %c0_8 = arith.constant 0 : index
    %c0_9 = arith.constant 0 : index
    %14 = vector.load %arg5[%c0_8, %c0_9] : memref<256x256xbf16, #tpu.memory_space<vmem>>, vector<256x256xbf16>
    %cst_10 = arith.constant dense<0.000000e+00> : vector<8x256xf32>
    %15 = tpu.matmul %13, %14, %cst_10 {dimension_numbers = #tpu.dot_dimension_numbers<[1], [0], [0], [1], [0, 0, 1, 1], [], []>} : vector<8x256xbf16>, vector<256x256xbf16>, vector<8x256xf32> -> vector<8x256xf32>
    %c0_11 = arith.constant 0 : index
    %c0_12 = arith.constant 0 : index
    %16 = vector.load %arg6[%c0_11, %c0_12] : memref<1x256xf32, #tpu.memory_space<vmem>>, vector<1x256xf32>
    %17 = vector.broadcast %16 : vector<1x256xf32> to vector<8x256xf32>
    %18 = arith.addf %15, %17 : vector<8x256xf32>
    %cst_13 = arith.constant 2.000000e-02 : f32
    %19 = vector.broadcast %cst_13 : f32 to vector<8x256xf32>
    %20 = arith.mulf %19, %18 : vector<8x256xf32>
    %21 = arith.maximumf %18, %20 : vector<8x256xf32>
    %22 = arith.truncf %21 : vector<8x256xf32> to vector<8x256xbf16>
    %c0_14 = arith.constant 0 : index
    %c0_15 = arith.constant 0 : index
    %23 = vector.load %arg7[%c0_14, %c0_15] : memref<256x256xbf16, #tpu.memory_space<vmem>>, vector<256x256xbf16>
    %cst_16 = arith.constant dense<0.000000e+00> : vector<8x256xf32>
    %24 = tpu.matmul %22, %23, %cst_16 {dimension_numbers = #tpu.dot_dimension_numbers<[1], [0], [0], [1], [0, 0, 1, 1], [], []>} : vector<8x256xbf16>, vector<256x256xbf16>, vector<8x256xf32> -> vector<8x256xf32>
    %c0_17 = arith.constant 0 : index
    %c0_18 = arith.constant 0 : index
    %25 = vector.load %arg8[%c0_17, %c0_18] : memref<1x256xf32, #tpu.memory_space<vmem>>, vector<1x256xf32>
    %26 = vector.broadcast %25 : vector<1x256xf32> to vector<8x256xf32>
    %27 = arith.addf %24, %26 : vector<8x256xf32>
    %cst_19 = arith.constant 2.000000e-02 : f32
    %28 = vector.broadcast %cst_19 : f32 to vector<8x256xf32>
    %29 = arith.mulf %28, %27 : vector<8x256xf32>
    %30 = arith.maximumf %27, %29 : vector<8x256xf32>
    %31 = arith.truncf %30 : vector<8x256xf32> to vector<8x256xbf16>
    %c0_20 = arith.constant 0 : index
    %c0_21 = arith.constant 0 : index
    %32 = vector.load %arg9[%c0_20, %c0_21] : memref<256x128xbf16, #tpu.memory_space<vmem>>, vector<256x128xbf16>
    %cst_22 = arith.constant dense<0.000000e+00> : vector<8x128xf32>
    %33 = tpu.matmul %31, %32, %cst_22 {dimension_numbers = #tpu.dot_dimension_numbers<[1], [0], [0], [1], [0, 0, 1, 1], [], []>} : vector<8x256xbf16>, vector<256x128xbf16>, vector<8x128xf32> -> vector<8x128xf32>
    %c0_23 = arith.constant 0 : index
    %c0_24 = arith.constant 0 : index
    %34 = vector.load %arg10[%c0_23, %c0_24] : memref<1x128xf32, #tpu.memory_space<vmem>>, vector<1x128xf32>
    %35 = vector.broadcast %34 : vector<1x128xf32> to vector<8x128xf32>
    %36 = arith.addf %33, %35 : vector<8x128xf32>
    %cst_25 = arith.constant 2.000000e-02 : f32
    %37 = vector.broadcast %cst_25 : f32 to vector<8x128xf32>
    %38 = arith.mulf %37, %36 : vector<8x128xf32>
    %39 = arith.maximumf %36, %38 : vector<8x128xf32>
    %40 = arith.truncf %39 : vector<8x128xf32> to vector<8x128xbf16>
    %c0_26 = arith.constant 0 : index
    %c0_27 = arith.constant 0 : index
    %41 = vector.load %arg11[%c0_26, %c0_27] : memref<128x128xbf16, #tpu.memory_space<vmem>>, vector<128x128xbf16>
    %cst_28 = arith.constant dense<0.000000e+00> : vector<8x128xf32>
    %42 = tpu.matmul %40, %41, %cst_28 {dimension_numbers = #tpu.dot_dimension_numbers<[1], [0], [0], [1], [0, 0, 1, 1], [], []>} : vector<8x128xbf16>, vector<128x128xbf16>, vector<8x128xf32> -> vector<8x128xf32>
    %c0_29 = arith.constant 0 : index
    %c0_30 = arith.constant 0 : index
    %43 = vector.load %arg12[%c0_29, %c0_30] : memref<1x128xf32, #tpu.memory_space<vmem>>, vector<1x128xf32>
    %44 = vector.broadcast %43 : vector<1x128xf32> to vector<8x128xf32>
    %45 = arith.addf %42, %44 : vector<8x128xf32>
    %cst_31 = arith.constant 2.000000e-02 : f32
    %46 = vector.broadcast %cst_31 : f32 to vector<8x128xf32>
    %47 = arith.mulf %46, %45 : vector<8x128xf32>
    %48 = arith.maximumf %45, %47 : vector<8x128xf32>
    %c0_32 = arith.constant 0 : index
    %c0_33 = arith.constant 0 : index
    %49 = vector.load %arg16[%c0_32, %c0_33] : memref<1x128xf32, #tpu.memory_space<vmem>>, vector<1x128xf32>
    %cst_34 = arith.constant dense<0.000000e+00> : vector<128xf32>
    %50 = vector.multi_reduction <add>, %48, %cst_34 [0] : vector<8x128xf32> to vector<128xf32>
    %51 = vector.shape_cast %50 : vector<128xf32> to vector<1x128xf32>
    %52 = arith.addf %49, %51 : vector<1x128xf32>
    %c0_35 = arith.constant 0 : index
    %c0_36 = arith.constant 0 : index
    %53 = vector.load %arg16[%c0_35, %c0_36] : memref<1x128xf32, #tpu.memory_space<vmem>>, vector<1x128xf32>
    tpu.vector_store %arg16[%c0_35, %c0_36], %52 {strides = array<i32>} : memref<1x128xf32, #tpu.memory_space<vmem>>, vector<1x128xf32>,
    %c0_i32_37 = arith.constant 0 : i32
    %54 = arith.cmpi eq, %arg1, %c0_i32_37 : i32
    %55 = arith.extui %54 : i1 to i32
    %c0_i32_38 = arith.constant 0 : i32
    %56 = arith.cmpi ne, %55, %c0_i32_38 : i32
    scf.if %56 {
      %c0_39 = arith.constant 0 : index
      %c0_40 = arith.constant 0 : index
      %57 = vector.load %arg16[%c0_39, %c0_40] : memref<1x128xf32, #tpu.memory_space<vmem>>, vector<1x128xf32>
      %c0_41 = arith.constant 0 : index
      %c0_42 = arith.constant 0 : index
      %58 = vector.load %arg13[%c0_41, %c0_42] : memref<128x128xf32, #tpu.memory_space<vmem>>, vector<128x128xf32>
      %cst_43 = arith.constant dense<0.000000e+00> : vector<1x128xf32>
      %59 = tpu.matmul %57, %58, %cst_43 {dimension_numbers = #tpu.dot_dimension_numbers<[1], [0], [0], [1], [0, 0, 1, 1], [], []>} : vector<1x128xf32>, vector<128x128xf32>, vector<1x128xf32> -> vector<1x128xf32>
      %c0_44 = arith.constant 0 : index
      %c0_45 = arith.constant 0 : index
      %60 = vector.load %arg14[%c0_44, %c0_45] : memref<1x128xf32, #tpu.memory_space<vmem>>, vector<1x128xf32>
      %cst_46 = arith.constant 8.000000e+00 : f32
      %61 = vector.broadcast %cst_46 : f32 to vector<1x128xf32>
      %62 = arith.mulf %61, %60 : vector<1x128xf32>
      %63 = arith.addf %59, %62 : vector<1x128xf32>
      %c0_47 = arith.constant 0 : index
      %c0_48 = arith.constant 0 : index
      %c0_49 = arith.constant 0 : index
      %64 = vector.load %arg15[%c0_47, %c0_48, %c0_49] : memref<1x1x128xf32, #tpu.memory_space<vmem>>, vector<1x1x128xf32>
      %65 = vector.shape_cast %64 : vector<1x1x128xf32> to vector<1x128xf32>
      %66 = vector.shape_cast %63 : vector<1x128xf32> to vector<1x1x128xf32>
      tpu.vector_store %arg15[%c0_47, %c0_48, %c0_49], %66 {strides = array<i32>} : memref<1x1x128xf32, #tpu.memory_space<vmem>>, vector<1x1x128xf32>,
    } else {
    }
    return
  }
  func.func @transform_0(%arg0: i32, %arg1: i32) -> (i32, i32, i32) {
    %c0_i32 = arith.constant 0 : i32
    %c0_i32_0 = arith.constant 0 : i32
    return %arg0, %arg1, %c0_i32 : i32, i32, i32
  }
  func.func @transform_1(%arg0: i32, %arg1: i32) -> (i32, i32) {
    %c0_i32 = arith.constant 0 : i32
    %c0_i32_0 = arith.constant 0 : i32
    %c0_i32_1 = arith.constant 0 : i32
    return %c0_i32, %c0_i32_0 : i32, i32
  }
  func.func @transform_2(%arg0: i32, %arg1: i32) -> (i32, i32) {
    %c0_i32 = arith.constant 0 : i32
    %c0_i32_0 = arith.constant 0 : i32
    %c0_i32_1 = arith.constant 0 : i32
    return %c0_i32, %c0_i32_0 : i32, i32
  }
  func.func @transform_3(%arg0: i32, %arg1: i32) -> (i32, i32) {
    %c0_i32 = arith.constant 0 : i32
    %c0_i32_0 = arith.constant 0 : i32
    %c0_i32_1 = arith.constant 0 : i32
    return %c0_i32, %c0_i32_0 : i32, i32
  }
  func.func @transform_4(%arg0: i32, %arg1: i32) -> (i32, i32) {
    %c0_i32 = arith.constant 0 : i32
    %c0_i32_0 = arith.constant 0 : i32
    %c0_i32_1 = arith.constant 0 : i32
    return %c0_i32, %c0_i32_0 : i32, i32
  }
  func.func @transform_5(%arg0: i32, %arg1: i32) -> (i32, i32) {
    %c0_i32 = arith.constant 0 : i32
    %c0_i32_0 = arith.constant 0 : i32
    %c0_i32_1 = arith.constant 0 : i32
    return %c0_i32, %c0_i32_0 : i32, i32
  }
  func.func @transform_6(%arg0: i32, %arg1: i32) -> (i32, i32) {
    %c0_i32 = arith.constant 0 : i32
    %c0_i32_0 = arith.constant 0 : i32
    %c0_i32_1 = arith.constant 0 : i32
    return %c0_i32, %c0_i32_0 : i32, i32
  }
  func.func @transform_7(%arg0: i32, %arg1: i32) -> (i32, i32) {
    %c0_i32 = arith.constant 0 : i32
    %c0_i32_0 = arith.constant 0 : i32
    %c0_i32_1 = arith.constant 0 : i32
    return %c0_i32, %c0_i32_0 : i32, i32
  }
  func.func @transform_8(%arg0: i32, %arg1: i32) -> (i32, i32) {
    %c0_i32 = arith.constant 0 : i32
    %c0_i32_0 = arith.constant 0 : i32
    %c0_i32_1 = arith.constant 0 : i32
    return %c0_i32, %c0_i32_0 : i32, i32
  }
  func.func @transform_9(%arg0: i32, %arg1: i32) -> (i32, i32) {
    %c0_i32 = arith.constant 0 : i32
    %c0_i32_0 = arith.constant 0 : i32
    %c0_i32_1 = arith.constant 0 : i32
    return %c0_i32, %c0_i32_0 : i32, i32
  }
  func.func @transform_10(%arg0: i32, %arg1: i32) -> (i32, i32) {
    %c0_i32 = arith.constant 0 : i32
    %c0_i32_0 = arith.constant 0 : i32
    %c0_i32_1 = arith.constant 0 : i32
    return %c0_i32, %c0_i32_0 : i32, i32
  }
  func.func @transform_11(%arg0: i32, %arg1: i32) -> (i32, i32) {
    %c0_i32 = arith.constant 0 : i32
    %c0_i32_0 = arith.constant 0 : i32
    %c0_i32_1 = arith.constant 0 : i32
    return %c0_i32, %c0_i32_0 : i32, i32
  }
  func.func @transform_12(%arg0: i32, %arg1: i32) -> (i32, i32) {
    %c0_i32 = arith.constant 0 : i32
    %c0_i32_0 = arith.constant 0 : i32
    %c0_i32_1 = arith.constant 0 : i32
    return %c0_i32, %c0_i32_0 : i32, i32
  }
  func.func @transform_13(%arg0: i32, %arg1: i32) -> (i32, i32, i32) {
    %c0_i32 = arith.constant 0 : i32
    %c0_i32_0 = arith.constant 0 : i32
    %c0_i32_1 = arith.constant 0 : i32
    return %arg0, %c0_i32, %c0_i32_0 : i32, i32, i32
  }
}

module attributes {stable_mosaic.version = 11 : i64} {
  func.func @kernel(%arg0: i32, %arg1: i32, %arg2: memref<1x8x8xbf16, #tpu.memory_space<vmem>>, %arg3: memref<8x256xbf16, #tpu.memory_space<vmem>>, %arg4: memref<1x256xf32, #tpu.memory_space<vmem>>, %arg5: memref<256x256xbf16, #tpu.memory_space<vmem>>, %arg6: memref<1x256xf32, #tpu.memory_space<vmem>>, %arg7: memref<256x256xbf16, #tpu.memory_space<vmem>>, %arg8: memref<1x256xf32, #tpu.memory_space<vmem>>, %arg9: memref<256x128xbf16, #tpu.memory_space<vmem>>, %arg10: memref<1x128xf32, #tpu.memory_space<vmem>>, %arg11: memref<128x128xbf16, #tpu.memory_space<vmem>>, %arg12: memref<1x128xf32, #tpu.memory_space<vmem>>, %arg13: memref<128x128xf32, #tpu.memory_space<vmem>>, %arg14: memref<1x128xf32, #tpu.memory_space<vmem>>, %arg15: memref<1x1x128xf32, #tpu.memory_space<vmem>>, %arg16: memref<1x128xf32, #tpu.memory_space<vmem>>) attributes {dimension_semantics = [#tpu.dimension_semantics<parallel>, #tpu.dimension_semantics<arbitrary>], iteration_bounds = array<i64: 2, 1>, scalar_prefetch = 0 : i64, scratch_operands = 1 : i64, tpu.core_type = #tpu.core_type<tc>, window_params = [{transform_indices = @transform_0, window_bounds = array<i64: 1, 8, 8>}, {pipeline_mode = #tpu.pipeline_mode<synchronous>, transform_indices = @transform_1, window_bounds = array<i64: 8, 256>}, {pipeline_mode = #tpu.pipeline_mode<synchronous>, transform_indices = @transform_2, window_bounds = array<i64: 1, 256>}, {pipeline_mode = #tpu.pipeline_mode<synchronous>, transform_indices = @transform_3, window_bounds = array<i64: 256, 256>}, {pipeline_mode = #tpu.pipeline_mode<synchronous>, transform_indices = @transform_4, window_bounds = array<i64: 1, 256>}, {pipeline_mode = #tpu.pipeline_mode<synchronous>, transform_indices = @transform_5, window_bounds = array<i64: 256, 256>}, {pipeline_mode = #tpu.pipeline_mode<synchronous>, transform_indices = @transform_6, window_bounds = array<i64: 1, 256>}, {pipeline_mode = #tpu.pipeline_mode<synchronous>, transform_indices = @transform_7, window_bounds = array<i64: 256, 128>}, {pipeline_mode = #tpu.pipeline_mode<synchronous>, transform_indices = @transform_8, window_bounds = array<i64: 1, 128>}, {pipeline_mode = #tpu.pipeline_mode<synchronous>, transform_indices = @transform_9, window_bounds = array<i64: 128, 128>}, {pipeline_mode = #tpu.pipeline_mode<synchronous>, transform_indices = @transform_10, window_bounds = array<i64: 1, 128>}, {pipeline_mode = #tpu.pipeline_mode<synchronous>, transform_indices = @transform_11, window_bounds = array<i64: 128, 128>}, {pipeline_mode = #tpu.pipeline_mode<synchronous>, transform_indices = @transform_12, window_bounds = array<i64: 1, 128>}, {transform_indices = @transform_13, window_bounds = array<i64: 1, 1, 128>}]} {
    %c0_i32 = arith.constant 0 : i32
    %0 = arith.cmpi eq, %arg1, %c0_i32 : i32
    %1 = arith.extui %0 : i1 to i32
    %c0_i32_0 = arith.constant 0 : i32
    %2 = arith.cmpi ne, %1, %c0_i32_0 : i32
    scf.if %2 {
      %cst_39 = arith.constant 0.000000e+00 : f32
      %57 = vector.broadcast %cst_39 : f32 to vector<1x128xf32>
      %c0_40 = arith.constant 0 : index
      %c0_41 = arith.constant 0 : index
      %58 = vector.load %arg16[%c0_40, %c0_41] : memref<1x128xf32, #tpu.memory_space<vmem>>, vector<1x128xf32>
      tpu.vector_store %arg16[%c0_40, %c0_41], %57 {strides = array<i32>} : memref<1x128xf32, #tpu.memory_space<vmem>>, vector<1x128xf32>,
    } else {
    }
    %c0 = arith.constant 0 : index
    %c0_1 = arith.constant 0 : index
    %c0_2 = arith.constant 0 : index
    %3 = vector.load %arg2[%c0, %c0_1, %c0_2] : memref<1x8x8xbf16, #tpu.memory_space<vmem>>, vector<1x8x8xbf16>
    %4 = vector.shape_cast %3 : vector<1x8x8xbf16> to vector<8x8xbf16>
    %c0_3 = arith.constant 0 : index
    %c0_4 = arith.constant 0 : index
    %5 = vector.load %arg3[%c0_3, %c0_4] : memref<8x256xbf16, #tpu.memory_space<vmem>>, vector<8x256xbf16>
    %cst = arith.constant dense<0.000000e+00> : vector<8x256xf32>
    %6 = tpu.matmul %4, %5, %cst {dimension_numbers = #tpu.dot_dimension_numbers<[1], [0], [0], [1], [0, 0, 1, 1], [], []>} : vector<8x8xbf16>, vector<8x256xbf16>, vector<8x256xf32> -> vector<8x256xf32>
    %c0_5 = arith.constant 0 : index
    %c0_6 = arith.constant 0 : index
    %7 = vector.load %arg4[%c0_5, %c0_6] : memref<1x256xf32, #tpu.memory_space<vmem>>, vector<1x256xf32>
    %8 = vector.broadcast %7 : vector<1x256xf32> to vector<8x256xf32>
    %9 = arith.addf %6, %8 : vector<8x256xf32>
    %cst_7 = arith.constant 2.000000e-02 : f32
    %10 = vector.broadcast %cst_7 : f32 to vector<8x256xf32>
    %11 = arith.mulf %10, %9 : vector<8x256xf32>
    %12 = arith.maximumf %9, %11 : vector<8x256xf32>
    %13 = arith.truncf %12 : vector<8x256xf32> to vector<8x256xbf16>
    %c0_8 = arith.constant 0 : index
    %c0_9 = arith.constant 0 : index
    %14 = vector.load %arg5[%c0_8, %c0_9] : memref<256x256xbf16, #tpu.memory_space<vmem>>, vector<256x256xbf16>
    %cst_10 = arith.constant dense<0.000000e+00> : vector<8x256xf32>
    %15 = tpu.matmul %13, %14, %cst_10 {dimension_numbers = #tpu.dot_dimension_numbers<[1], [0], [0], [1], [0, 0, 1, 1], [], []>} : vector<8x256xbf16>, vector<256x256xbf16>, vector<8x256xf32> -> vector<8x256xf32>
    %c0_11 = arith.constant 0 : index
    %c0_12 = arith.constant 0 : index
    %16 = vector.load %arg6[%c0_11, %c0_12] : memref<1x256xf32, #tpu.memory_space<vmem>>, vector<1x256xf32>
    %17 = vector.broadcast %16 : vector<1x256xf32> to vector<8x256xf32>
    %18 = arith.addf %15, %17 : vector<8x256xf32>
    %cst_13 = arith.constant 2.000000e-02 : f32
    %19 = vector.broadcast %cst_13 : f32 to vector<8x256xf32>
    %20 = arith.mulf %19, %18 : vector<8x256xf32>
    %21 = arith.maximumf %18, %20 : vector<8x256xf32>
    %22 = arith.truncf %21 : vector<8x256xf32> to vector<8x256xbf16>
    %c0_14 = arith.constant 0 : index
    %c0_15 = arith.constant 0 : index
    %23 = vector.load %arg7[%c0_14, %c0_15] : memref<256x256xbf16, #tpu.memory_space<vmem>>, vector<256x256xbf16>
    %cst_16 = arith.constant dense<0.000000e+00> : vector<8x256xf32>
    %24 = tpu.matmul %22, %23, %cst_16 {dimension_numbers = #tpu.dot_dimension_numbers<[1], [0], [0], [1], [0, 0, 1, 1], [], []>} : vector<8x256xbf16>, vector<256x256xbf16>, vector<8x256xf32> -> vector<8x256xf32>
    %c0_17 = arith.constant 0 : index
    %c0_18 = arith.constant 0 : index
    %25 = vector.load %arg8[%c0_17, %c0_18] : memref<1x256xf32, #tpu.memory_space<vmem>>, vector<1x256xf32>
    %26 = vector.broadcast %25 : vector<1x256xf32> to vector<8x256xf32>
    %27 = arith.addf %24, %26 : vector<8x256xf32>
    %cst_19 = arith.constant 2.000000e-02 : f32
    %28 = vector.broadcast %cst_19 : f32 to vector<8x256xf32>
    %29 = arith.mulf %28, %27 : vector<8x256xf32>
    %30 = arith.maximumf %27, %29 : vector<8x256xf32>
    %31 = arith.truncf %30 : vector<8x256xf32> to vector<8x256xbf16>
    %c0_20 = arith.constant 0 : index
    %c0_21 = arith.constant 0 : index
    %32 = vector.load %arg9[%c0_20, %c0_21] : memref<256x128xbf16, #tpu.memory_space<vmem>>, vector<256x128xbf16>
    %cst_22 = arith.constant dense<0.000000e+00> : vector<8x128xf32>
    %33 = tpu.matmul %31, %32, %cst_22 {dimension_numbers = #tpu.dot_dimension_numbers<[1], [0], [0], [1], [0, 0, 1, 1], [], []>} : vector<8x256xbf16>, vector<256x128xbf16>, vector<8x128xf32> -> vector<8x128xf32>
    %c0_23 = arith.constant 0 : index
    %c0_24 = arith.constant 0 : index
    %34 = vector.load %arg10[%c0_23, %c0_24] : memref<1x128xf32, #tpu.memory_space<vmem>>, vector<1x128xf32>
    %35 = vector.broadcast %34 : vector<1x128xf32> to vector<8x128xf32>
    %36 = arith.addf %33, %35 : vector<8x128xf32>
    %cst_25 = arith.constant 2.000000e-02 : f32
    %37 = vector.broadcast %cst_25 : f32 to vector<8x128xf32>
    %38 = arith.mulf %37, %36 : vector<8x128xf32>
    %39 = arith.maximumf %36, %38 : vector<8x128xf32>
    %40 = arith.truncf %39 : vector<8x128xf32> to vector<8x128xbf16>
    %c0_26 = arith.constant 0 : index
    %c0_27 = arith.constant 0 : index
    %41 = vector.load %arg11[%c0_26, %c0_27] : memref<128x128xbf16, #tpu.memory_space<vmem>>, vector<128x128xbf16>
    %cst_28 = arith.constant dense<0.000000e+00> : vector<8x128xf32>
    %42 = tpu.matmul %40, %41, %cst_28 {dimension_numbers = #tpu.dot_dimension_numbers<[1], [0], [0], [1], [0, 0, 1, 1], [], []>} : vector<8x128xbf16>, vector<128x128xbf16>, vector<8x128xf32> -> vector<8x128xf32>
    %c0_29 = arith.constant 0 : index
    %c0_30 = arith.constant 0 : index
    %43 = vector.load %arg12[%c0_29, %c0_30] : memref<1x128xf32, #tpu.memory_space<vmem>>, vector<1x128xf32>
    %44 = vector.broadcast %43 : vector<1x128xf32> to vector<8x128xf32>
    %45 = arith.addf %42, %44 : vector<8x128xf32>
    %cst_31 = arith.constant 2.000000e-02 : f32
    %46 = vector.broadcast %cst_31 : f32 to vector<8x128xf32>
    %47 = arith.mulf %46, %45 : vector<8x128xf32>
    %48 = arith.maximumf %45, %47 : vector<8x128xf32>
    %c0_32 = arith.constant 0 : index
    %c0_33 = arith.constant 0 : index
    %49 = vector.load %arg16[%c0_32, %c0_33] : memref<1x128xf32, #tpu.memory_space<vmem>>, vector<1x128xf32>
    %cst_34 = arith.constant dense<0.000000e+00> : vector<128xf32>
    %50 = vector.multi_reduction <add>, %48, %cst_34 [0] : vector<8x128xf32> to vector<128xf32>
    %51 = vector.shape_cast %50 : vector<128xf32> to vector<1x128xf32>
    %52 = arith.addf %49, %51 : vector<1x128xf32>
    %c0_35 = arith.constant 0 : index
    %c0_36 = arith.constant 0 : index
    %53 = vector.load %arg16[%c0_35, %c0_36] : memref<1x128xf32, #tpu.memory_space<vmem>>, vector<1x128xf32>
    tpu.vector_store %arg16[%c0_35, %c0_36], %52 {strides = array<i32>} : memref<1x128xf32, #tpu.memory_space<vmem>>, vector<1x128xf32>,
    %c0_i32_37 = arith.constant 0 : i32
    %54 = arith.cmpi eq, %arg1, %c0_i32_37 : i32
    %55 = arith.extui %54 : i1 to i32
    %c0_i32_38 = arith.constant 0 : i32
    %56 = arith.cmpi ne, %55, %c0_i32_38 : i32
    scf.if %56 {
      %c0_39 = arith.constant 0 : index
      %c0_40 = arith.constant 0 : index
      %57 = vector.load %arg16[%c0_39, %c0_40] : memref<1x128xf32, #tpu.memory_space<vmem>>, vector<1x128xf32>
      %c0_41 = arith.constant 0 : index
      %c0_42 = arith.constant 0 : index
      %58 = vector.load %arg13[%c0_41, %c0_42] : memref<128x128xf32, #tpu.memory_space<vmem>>, vector<128x128xf32>
      %cst_43 = arith.constant dense<0.000000e+00> : vector<1x128xf32>
      %59 = tpu.matmul %57, %58, %cst_43 {dimension_numbers = #tpu.dot_dimension_numbers<[1], [0], [0], [1], [0, 0, 1, 1], [], []>} : vector<1x128xf32>, vector<128x128xf32>, vector<1x128xf32> -> vector<1x128xf32>
      %c0_44 = arith.constant 0 : index
      %c0_45 = arith.constant 0 : index
      %60 = vector.load %arg14[%c0_44, %c0_45] : memref<1x128xf32, #tpu.memory_space<vmem>>, vector<1x128xf32>
      %cst_46 = arith.constant 8.000000e+00 : f32
      %61 = vector.broadcast %cst_46 : f32 to vector<1x128xf32>
      %62 = arith.mulf %61, %60 : vector<1x128xf32>
      %63 = arith.addf %59, %62 : vector<1x128xf32>
      %c0_47 = arith.constant 0 : index
      %c0_48 = arith.constant 0 : index
      %c0_49 = arith.constant 0 : index
      %64 = vector.load %arg15[%c0_47, %c0_48, %c0_49] : memref<1x1x128xf32, #tpu.memory_space<vmem>>, vector<1x1x128xf32>
      %65 = vector.shape_cast %64 : vector<1x1x128xf32> to vector<1x128xf32>
      %66 = vector.shape_cast %63 : vector<1x128xf32> to vector<1x1x128xf32>
      tpu.vector_store %arg15[%c0_47, %c0_48, %c0_49], %66 {strides = array<i32>} : memref<1x1x128xf32, #tpu.memory_space<vmem>>, vector<1x1x128xf32>,
    } else {
    }
    return
  }
  func.func @transform_0(%arg0: i32, %arg1: i32) -> (i32, i32, i32) {
    %c0_i32 = arith.constant 0 : i32
    %c0_i32_0 = arith.constant 0 : i32
    return %arg0, %arg1, %c0_i32 : i32, i32, i32
  }
  func.func @transform_1(%arg0: i32, %arg1: i32) -> (i32, i32) {
    %c0_i32 = arith.constant 0 : i32
    %c0_i32_0 = arith.constant 0 : i32
    %c0_i32_1 = arith.constant 0 : i32
    return %c0_i32, %c0_i32_0 : i32, i32
  }
  func.func @transform_2(%arg0: i32, %arg1: i32) -> (i32, i32) {
    %c0_i32 = arith.constant 0 : i32
    %c0_i32_0 = arith.constant 0 : i32
    %c0_i32_1 = arith.constant 0 : i32
    return %c0_i32, %c0_i32_0 : i32, i32
  }
  func.func @transform_3(%arg0: i32, %arg1: i32) -> (i32, i32) {
    %c0_i32 = arith.constant 0 : i32
    %c0_i32_0 = arith.constant 0 : i32
    %c0_i32_1 = arith.constant 0 : i32
    return %c0_i32, %c0_i32_0 : i32, i32
  }
  func.func @transform_4(%arg0: i32, %arg1: i32) -> (i32, i32) {
    %c0_i32 = arith.constant 0 : i32
    %c0_i32_0 = arith.constant 0 : i32
    %c0_i32_1 = arith.constant 0 : i32
    return %c0_i32, %c0_i32_0 : i32, i32
  }
  func.func @transform_5(%arg0: i32, %arg1: i32) -> (i32, i32) {
    %c0_i32 = arith.constant 0 : i32
    %c0_i32_0 = arith.constant 0 : i32
    %c0_i32_1 = arith.constant 0 : i32
    return %c0_i32, %c0_i32_0 : i32, i32
  }
  func.func @transform_6(%arg0: i32, %arg1: i32) -> (i32, i32) {
    %c0_i32 = arith.constant 0 : i32
    %c0_i32_0 = arith.constant 0 : i32
    %c0_i32_1 = arith.constant 0 : i32
    return %c0_i32, %c0_i32_0 : i32, i32
  }
  func.func @transform_7(%arg0: i32, %arg1: i32) -> (i32, i32) {
    %c0_i32 = arith.constant 0 : i32
    %c0_i32_0 = arith.constant 0 : i32
    %c0_i32_1 = arith.constant 0 : i32
    return %c0_i32, %c0_i32_0 : i32, i32
  }
  func.func @transform_8(%arg0: i32, %arg1: i32) -> (i32, i32) {
    %c0_i32 = arith.constant 0 : i32
    %c0_i32_0 = arith.constant 0 : i32
    %c0_i32_1 = arith.constant 0 : i32
    return %c0_i32, %c0_i32_0 : i32, i32
  }
  func.func @transform_9(%arg0: i32, %arg1: i32) -> (i32, i32) {
    %c0_i32 = arith.constant 0 : i32
    %c0_i32_0 = arith.constant 0 : i32
    %c0_i32_1 = arith.constant 0 : i32
    return %c0_i32, %c0_i32_0 : i32, i32
  }
  func.func @transform_10(%arg0: i32, %arg1: i32) -> (i32, i32) {
    %c0_i32 = arith.constant 0 : i32
    %c0_i32_0 = arith.constant 0 : i32
    %c0_i32_1 = arith.constant 0 : i32
    return %c0_i32, %c0_i32_0 : i32, i32
  }
  func.func @transform_11(%arg0: i32, %arg1: i32) -> (i32, i32) {
    %c0_i32 = arith.constant 0 : i32
    %c0_i32_0 = arith.constant 0 : i32
    %c0_i32_1 = arith.constant 0 : i32
    return %c0_i32, %c0_i32_0 : i32, i32
  }
  func.func @transform_12(%arg0: i32, %arg1: i32) -> (i32, i32) {
    %c0_i32 = arith.constant 0 : i32
    %c0_i32_0 = arith.constant 0 : i32
    %c0_i32_1 = arith.constant 0 : i32
    return %c0_i32, %c0_i32_0 : i32, i32
  }
  func.func @transform_13(%arg0: i32, %arg1: i32) -> (i32, i32, i32) {
    %c0_i32 = arith.constant 0 : i32
    %c0_i32_0 = arith.constant 0 : i32
    %c0_i32_1 = arith.constant 0 : i32
    return %arg0, %c0_i32, %c0_i32_0 : i32, i32, i32
  }
}

</mosaic_0001>

<llo_original>
// kernel: tpu_custom_call.1
$region0: #{tpu_custom_call.1}
  #allocation0 [shape = 'u32[]', space=smem, size = 0x4, offset = 0x4, fixed_abs, tag = 'smem constant byte address 0x4 - core index']
  #allocation1 [shape = 'u32[72,128]{1,0:T(1,128)}', space=vmem, size = 0x9000, scoped, tag = 'internal scratch']
  #allocation2 [shape = 'f32[1,128]{1,0:T(1,128)}', space=vmem, size = 0x200, scoped, tag = 'scratch operand']
  %s0 = inlined_call_operand.hbm [shape: bf16[2,8,8], index: 0, kind: input, shape index: {}]
  %s1 = inlined_call_operand.hbm [shape: bf16[8,256], index: 1, kind: input, shape index: {}]
  %s2 = inlined_call_operand.hbm [shape: f32[1,256], index: 2, kind: input, shape index: {}]
  %s3 = inlined_call_operand.hbm [shape: bf16[256,256], index: 3, kind: input, shape index: {}]
  %s4 = inlined_call_operand.vmem [shape: f32[1,256], index: 4, kind: input, shape index: {}]
  %s5 = inlined_call_operand.hbm [shape: bf16[256,256], index: 5, kind: input, shape index: {}]
  %s6 = inlined_call_operand.vmem [shape: f32[1,256], index: 6, kind: input, shape index: {}]
  %s7 = inlined_call_operand.hbm [shape: bf16[256,128], index: 7, kind: input, shape index: {}]
  %s8 = inlined_call_operand.vmem [shape: f32[1,128], index: 8, kind: input, shape index: {}]
  %s9 = inlined_call_operand.hbm [shape: bf16[128,128], index: 9, kind: input, shape index: {}]
  %s10 = inlined_call_operand.vmem [shape: f32[1,128], index: 10, kind: input, shape index: {}]
  %s11 = inlined_call_operand.hbm [shape: f32[128,128], index: 11, kind: input, shape index: {}]
  %s12 = inlined_call_operand.vmem [shape: f32[1,128], index: 12, kind: input, shape index: {}]
  %s13 = inlined_call_operand.hbm [shape: f32[2,1,128], index: 13, kind: output, shape index: {}]
  %s14 = sld [smem:[#allocation0]]
  $region125: #{tpu_custom_call.1} parent=0
    _
  %s16 = ssub.s32 1, %s14
  %s17 = scalar_select 0, %s16, %s14
  $region1: #{tpu_custom_call.1} parent=0
    #allocation3 [shape = 'u8[4096]{0}', space=vmem, size = 0x1000, scoped, tag = 'input window, operand 0']
    #allocation4 [shape = 's32[2]{0}', space=sflag, size = 0x8, scoped, tag = 'scoped memory for tpu_custom_call.1']
    #allocation5 [shape = 's32[2]{0}', space=sflag, size = 0x8, scoped, tag = 'scoped memory for tpu_custom_call.1']
    #allocation6 [shape = 'u8[4096]{0}', space=vmem, size = 0x1000, scoped, tag = 'input window, operand 1, single buffered']
    #allocation7 [shape = 's32[1]{0}', space=sflag, size = 0x4, scoped, tag = 'scoped memory for tpu_custom_call.1']
    #allocation8 [shape = 'u8[1024]{0}', space=vmem, size = 0x400, scoped, tag = 'input window, operand 2, single buffered']
    #allocation9 [shape = 'u8[131072]{0}', space=vmem, size = 0x20000, scoped, tag = 'input window, operand 3, single buffered']
    #allocation10 [shape = 's32[1]{0}', space=sflag, size = 0x4, scoped, tag = 'scoped memory for tpu_custom_call.1']
    #allocation11 [shape = 'u8[131072]{0}', space=vmem, size = 0x20000, scoped, tag = 'input window, operand 5, single buffered']
    #allocation12 [shape = 'u8[65536]{0}', space=vmem, size = 0x10000, scoped, tag = 'input window, operand 7, single buffered']
    #allocation13 [shape = 's32[1]{0}', space=sflag, size = 0x4, scoped, tag = 'scoped memory for tpu_custom_call.1']
    #allocation14 [shape = 'u8[32768]{0}', space=vmem, size = 0x8000, scoped, tag = 'input window, operand 9, single buffered']
    #allocation15 [shape = 'u8[65536]{0}', space=vmem, size = 0x10000, scoped, tag = 'input window, operand 11, single buffered']
    #allocation16 [shape = 's32[1]{0}', space=sflag, size = 0x4, scoped, tag = 'scoped memory for tpu_custom_call.1']
    #allocation17 [shape = 'u8[1024]{0}', space=vmem, size = 0x400, scoped, tag = 'output window, operand 0']
    %18 = vsyncpa [#allocation4], 0
    %s19 = scalar_lea.sflag [#allocation4], 1
    %20 = vsyncpa %s19, 0
    %21 = vsyncpa [#allocation7], 0
    %22 = vsyncpa [#allocation10], 0
    %23 = vsyncpa [#allocation13], 0
    %24 = vsyncpa [#allocation16], 0
    %25 = vsyncpa [#allocation5], 0
    %s26 = scalar_lea.sflag [#allocation5], 1
    %27 = vsyncpa %s26, 0
    loop: start=0, step=1, limit=4
    $region2: #{tpu_custom_call.1} parent=1 // loop_pre_header
      _
    $region3: #{tpu_custom_call.1} parent=1 // loop_header
      %s29 = sphi 0, %s33
      %p30 = scmp.ge.s32.totalorder %s29, 4
      %s36 = sphi 0, %s48
      %s37 = sphi 0, %s44
      %s38 = sphi 0, %s36
      %s39 = sphi 0, %s37
      %s40 = sphi 0, %s38
      %s41 = sphi 0, %s39
      %s53 = sphi 0, %s55
      %s56 = sphi 0, %s53
      %s57 = sphi 0, %s56
      %s73 = sphi 0, %s57
      %s77 = sphi 0, %s77
      %s79 = sphi 0, %s77
      %s80 = sphi 0, %s79
      %s94 = sphi 0, %s80
      %s98 = sphi 0, %s98
      %s100 = sphi 0, %s98
      %s101 = sphi 0, %s100
      %s115 = sphi 0, %s101
      %s119 = sphi 0, %s119
      %s121 = sphi 0, %s119
      %s122 = sphi 0, %s121
      %s136 = sphi 0, %s122
      %s140 = sphi 0, %s140
      %s142 = sphi 0, %s140
      %s143 = sphi 0, %s142
      %s157 = sphi 0, %s143
      %s161 = sphi 0, %s161
      %s163 = sphi 0, %s161
      %s164 = sphi 0, %s163
      %s178 = sphi 0, %s164
      %s182 = sphi 0, %s182
      %s184 = sphi 0, %s182
      %s185 = sphi 0, %s184
      %s199 = sphi 0, %s185
      %s203 = sphi 0, %s203
      %s205 = sphi 0, %s203
      %s206 = sphi 0, %s205
      %s220 = sphi 0, %s206
      %s224 = sphi 0, %s224
      %s226 = sphi 0, %s224
      %s227 = sphi 0, %s226
      %s241 = sphi 0, %s227
      %s245 = sphi 0, %s245
      %s247 = sphi 0, %s245
      %s248 = sphi 0, %s247
      %s262 = sphi 0, %s248
      %s266 = sphi 0, %s266
      %s268 = sphi 0, %s266
      %s269 = sphi 0, %s268
      %s283 = sphi 0, %s269
      %s287 = sphi 0, %s287
      %s289 = sphi 0, %s287
      %s290 = sphi 0, %s289
      %s304 = sphi 0, %s290
      %s308 = sphi 0, %s308
      %s310 = sphi 0, %s308
      %s311 = sphi 0, %s310
      %s325 = sphi 0, %s311
      %s331 = sphi 0, %s333
      %s334 = sphi 0, %s331
      %s335 = sphi 0, %s334
      %s351 = sphi 0, %s335
    $region4: #{tpu_custom_call.1} parent=1 // loop_header_branch
      %32 = sbr.rel (%p30) target = $region8
    $region5: #{tpu_custom_call.1} parent=1 // loop_body
      %s34 = ssub.s32 %s29, 1
      %s35 = ssub.s32 %s29, 2
      %s42 = sadd.s32 1, %s37
      %p43 = scmp.ge.s32.totalorder %s42, 1
      %s44 = scalar_select %p43, 0, %s42
      %s45 = sadd.s32 1, %s36
      %s46 = scalar_select %p43, %s45, %s36
      %p47 = scmp.ge.s32.totalorder %s46, 2
      %s48 = scalar_select %p47, 0, %s46
      %s49 = ssub.s32 %s36, %s48
      %s50 = ssub.s32 %s37, %s44
      %s51 = sor.u32 %s49, %s50
      %p52 = scmp.eq.s32.totalorder %s51, 0
      %s54 = sadd.s32 %s53, 1
      %s55 = scalar_select %p52, %s53, %s54
      %p58 = pneg %p52
      %p59 = scmp.eq.s32.totalorder %s29, 1
      %p60 = por %p58, %p59
      %p61 = scmp.ne.s32.totalorder %s53, %s56
      %p62 = scmp.eq.s32.totalorder %s29, 0
      %p63 = por %p61, %p62
      %p64 = scmp.ne.s32.totalorder %s53, %s56
      %p65 = scmp.eq.s32.totalorder %s34, 1
      %p66 = por %p64, %p65
      %p67 = scmp.ne.s32.totalorder %s56, %s57
      %p68 = scmp.eq.s32.totalorder %s34, 0
      %p69 = por %p67, %p68
      %p70 = scmp.ne.s32.totalorder %s56, %s57
      %p71 = scmp.eq.s32.totalorder %s35, 1
      %p72 = por %p70, %p71
      %p74 = scmp.ne.s32.totalorder %s57, %s73
      %p75 = scmp.eq.s32.totalorder %s35, 0
      %p76 = por %p74, %p75
      %s78 = sadd.s32 %s77, 1
      %p81 = scmp.eq.s32.totalorder %s29, 1
      %p82 = scmp.ne.s32.totalorder %s77, %s79
      %p83 = scmp.eq.s32.totalorder %s29, 0
      %p84 = por %p82, %p83
      %p85 = scmp.ne.s32.totalorder %s77, %s79
      %p86 = scmp.eq.s32.totalorder %s34, 1
      %p87 = por %p85, %p86
      %p88 = scmp.ne.s32.totalorder %s79, %s80
      %p89 = scmp.eq.s32.totalorder %s34, 0
      %p90 = por %p88, %p89
      %p91 = scmp.ne.s32.totalorder %s79, %s80
      %p92 = scmp.eq.s32.totalorder %s35, 1
      %p93 = por %p91, %p92
      %p95 = scmp.ne.s32.totalorder %s80, %s94
      %p96 = scmp.eq.s32.totalorder %s35, 0
      %p97 = por %p95, %p96
      %s99 = sadd.s32 %s98, 1
      %p102 = scmp.eq.s32.totalorder %s29, 1
      %p103 = scmp.ne.s32.totalorder %s98, %s100
      %p104 = scmp.eq.s32.totalorder %s29, 0
      %p105 = por %p103, %p104
      %p106 = scmp.ne.s32.totalorder %s98, %s100
      %p107 = scmp.eq.s32.totalorder %s34, 1
      %p108 = por %p106, %p107
      %p109 = scmp.ne.s32.totalorder %s100, %s101
      %p110 = scmp.eq.s32.totalorder %s34, 0
      %p111 = por %p109, %p110
      %p112 = scmp.ne.s32.totalorder %s100, %s101
      %p113 = scmp.eq.s32.totalorder %s35, 1
      %p114 = por %p112, %p113
      %p116 = scmp.ne.s32.totalorder %s101, %s115
      %p117 = scmp.eq.s32.totalorder %s35, 0
      %p118 = por %p116, %p117
      %s120 = sadd.s32 %s119, 1
      %p123 = scmp.eq.s32.totalorder %s29, 1
      %p124 = scmp.ne.s32.totalorder %s119, %s121
      %p125 = scmp.eq.s32.totalorder %s29, 0
      %p126 = por %p124, %p125
      %p127 = scmp.ne.s32.totalorder %s119, %s121
      %p128 = scmp.eq.s32.totalorder %s34, 1
      %p129 = por %p127, %p128
      %p130 = scmp.ne.s32.totalorder %s121, %s122
      %p131 = scmp.eq.s32.totalorder %s34, 0
      %p132 = por %p130, %p131
      %p133 = scmp.ne.s32.totalorder %s121, %s122
      %p134 = scmp.eq.s32.totalorder %s35, 1
      %p135 = por %p133, %p134
      %p137 = scmp.ne.s32.totalorder %s122, %s136
      %p138 = scmp.eq.s32.totalorder %s35, 0
      %p139 = por %p137, %p138
      %s141 = sadd.s32 %s140, 1
      %p144 = scmp.eq.s32.totalorder %s29, 1
      %p145 = scmp.ne.s32.totalorder %s140, %s142
      %p146 = scmp.eq.s32.totalorder %s29, 0
      %p147 = por %p145, %p146
      %p148 = scmp.ne.s32.totalorder %s140, %s142
      %p149 = scmp.eq.s32.totalorder %s34, 1
      %p150 = por %p148, %p149
      %p151 = scmp.ne.s32.totalorder %s142, %s143
      %p152 = scmp.eq.s32.totalorder %s34, 0
      %p153 = por %p151, %p152
      %p154 = scmp.ne.s32.totalorder %s142, %s143
      %p155 = scmp.eq.s32.totalorder %s35, 1
      %p156 = por %p154, %p155
      %p158 = scmp.ne.s32.totalorder %s143, %s157
      %p159 = scmp.eq.s32.totalorder %s35, 0
      %p160 = por %p158, %p159
      %s162 = sadd.s32 %s161, 1
      %p165 = scmp.eq.s32.totalorder %s29, 1
      %p166 = scmp.ne.s32.totalorder %s161, %s163
      %p167 = scmp.eq.s32.totalorder %s29, 0
      %p168 = por %p166, %p167
      %p169 = scmp.ne.s32.totalorder %s161, %s163
      %p170 = scmp.eq.s32.totalorder %s34, 1
      %p171 = por %p169, %p170
      %p172 = scmp.ne.s32.totalorder %s163, %s164
      %p173 = scmp.eq.s32.totalorder %s34, 0
      %p174 = por %p172, %p173
      %p175 = scmp.ne.s32.totalorder %s163, %s164
      %p176 = scmp.eq.s32.totalorder %s35, 1
      %p177 = por %p175, %p176
      %p179 = scmp.ne.s32.totalorder %s164, %s178
      %p180 = scmp.eq.s32.totalorder %s35, 0
      %p181 = por %p179, %p180
      %s183 = sadd.s32 %s182, 1
      %p186 = scmp.eq.s32.totalorder %s29, 1
      %p187 = scmp.ne.s32.totalorder %s182, %s184
      %p188 = scmp.eq.s32.totalorder %s29, 0
      %p189 = por %p187, %p188
      %p190 = scmp.ne.s32.totalorder %s182, %s184
      %p191 = scmp.eq.s32.totalorder %s34, 1
      %p192 = por %p190, %p191
      %p193 = scmp.ne.s32.totalorder %s184, %s185
      %p194 = scmp.eq.s32.totalorder %s34, 0
      %p195 = por %p193, %p194
      %p196 = scmp.ne.s32.totalorder %s184, %s185
      %p197 = scmp.eq.s32.totalorder %s35, 1
      %p198 = por %p196, %p197
      %p200 = scmp.ne.s32.totalorder %s185, %s199
      %p201 = scmp.eq.s32.totalorder %s35, 0
      %p202 = por %p200, %p201
      %s204 = sadd.s32 %s203, 1
      %p207 = scmp.eq.s32.totalorder %s29, 1
      %p208 = scmp.ne.s32.totalorder %s203, %s205
      %p209 = scmp.eq.s32.totalorder %s29, 0
      %p210 = por %p208, %p209
      %p211 = scmp.ne.s32.totalorder %s203, %s205
      %p212 = scmp.eq.s32.totalorder %s34, 1
      %p213 = por %p211, %p212
      %p214 = scmp.ne.s32.totalorder %s205, %s206
      %p215 = scmp.eq.s32.totalorder %s34, 0
      %p216 = por %p214, %p215
      %p217 = scmp.ne.s32.totalorder %s205, %s206
      %p218 = scmp.eq.s32.totalorder %s35, 1
      %p219 = por %p217, %p218
      %p221 = scmp.ne.s32.totalorder %s206, %s220
      %p222 = scmp.eq.s32.totalorder %s35, 0
      %p223 = por %p221, %p222
      %s225 = sadd.s32 %s224, 1
      %p228 = scmp.eq.s32.totalorder %s29, 1
      %p229 = scmp.ne.s32.totalorder %s224, %s226
      %p230 = scmp.eq.s32.totalorder %s29, 0
      %p231 = por %p229, %p230
      %p232 = scmp.ne.s32.totalorder %s224, %s226
      %p233 = scmp.eq.s32.totalorder %s34, 1
      %p234 = por %p232, %p233
      %p235 = scmp.ne.s32.totalorder %s226, %s227
      %p236 = scmp.eq.s32.totalorder %s34, 0
      %p237 = por %p235, %p236
      %p238 = scmp.ne.s32.totalorder %s226, %s227
      %p239 = scmp.eq.s32.totalorder %s35, 1
      %p240 = por %p238, %p239
      %p242 = scmp.ne.s32.totalorder %s227, %s241
      %p243 = scmp.eq.s32.totalorder %s35, 0
      %p244 = por %p242, %p243
      %s246 = sadd.s32 %s245, 1
      %p249 = scmp.eq.s32.totalorder %s29, 1
      %p250 = scmp.ne.s32.totalorder %s245, %s247
      %p251 = scmp.eq.s32.totalorder %s29, 0
      %p252 = por %p250, %p251
      %p253 = scmp.ne.s32.totalorder %s245, %s247
      %p254 = scmp.eq.s32.totalorder %s34, 1
      %p255 = por %p253, %p254
      %p256 = scmp.ne.s32.totalorder %s247, %s248
      %p257 = scmp.eq.s32.totalorder %s34, 0
      %p258 = por %p256, %p257
      %p259 = scmp.ne.s32.totalorder %s247, %s248
      %p260 = scmp.eq.s32.totalorder %s35, 1
      %p261 = por %p259, %p260
      %p263 = scmp.ne.s32.totalorder %s248, %s262
      %p264 = scmp.eq.s32.totalorder %s35, 0
      %p265 = por %p263, %p264
      %s267 = sadd.s32 %s266, 1
      %p270 = scmp.eq.s32.totalorder %s29, 1
      %p271 = scmp.ne.s32.totalorder %s266, %s268
      %p272 = scmp.eq.s32.totalorder %s29, 0
      %p273 = por %p271, %p272
      %p274 = scmp.ne.s32.totalorder %s266, %s268
      %p275 = scmp.eq.s32.totalorder %s34, 1
      %p276 = por %p274, %p275
      %p277 = scmp.ne.s32.totalorder %s268, %s269
      %p278 = scmp.eq.s32.totalorder %s34, 0
      %p279 = por %p277, %p278
      %p280 = scmp.ne.s32.totalorder %s268, %s269
      %p281 = scmp.eq.s32.totalorder %s35, 1
      %p282 = por %p280, %p281
      %p284 = scmp.ne.s32.totalorder %s269, %s283
      %p285 = scmp.eq.s32.totalorder %s35, 0
      %p286 = por %p284, %p285
      %s288 = sadd.s32 %s287, 1
      %p291 = scmp.eq.s32.totalorder %s29, 1
      %p292 = scmp.ne.s32.totalorder %s287, %s289
      %p293 = scmp.eq.s32.totalorder %s29, 0
      %p294 = por %p292, %p293
      %p295 = scmp.ne.s32.totalorder %s287, %s289
      %p296 = scmp.eq.s32.totalorder %s34, 1
      %p297 = por %p295, %p296
      %p298 = scmp.ne.s32.totalorder %s289, %s290
      %p299 = scmp.eq.s32.totalorder %s34, 0
      %p300 = por %p298, %p299
      %p301 = scmp.ne.s32.totalorder %s289, %s290
      %p302 = scmp.eq.s32.totalorder %s35, 1
      %p303 = por %p301, %p302
      %p305 = scmp.ne.s32.totalorder %s290, %s304
      %p306 = scmp.eq.s32.totalorder %s35, 0
      %p307 = por %p305, %p306
      %s309 = sadd.s32 %s308, 1
      %p312 = scmp.eq.s32.totalorder %s29, 1
      %p313 = scmp.ne.s32.totalorder %s308, %s310
      %p314 = scmp.eq.s32.totalorder %s29, 0
      %p315 = por %p313, %p314
      %p316 = scmp.ne.s32.totalorder %s308, %s310
      %p317 = scmp.eq.s32.totalorder %s34, 1
      %p318 = por %p316, %p317
      %p319 = scmp.ne.s32.totalorder %s310, %s311
      %p320 = scmp.eq.s32.totalorder %s34, 0
      %p321 = por %p319, %p320
      %p322 = scmp.ne.s32.totalorder %s310, %s311
      %p323 = scmp.eq.s32.totalorder %s35, 1
      %p324 = por %p322, %p323
      %p326 = scmp.ne.s32.totalorder %s311, %s325
      %p327 = scmp.eq.s32.totalorder %s35, 0
      %p328 = por %p326, %p327
      %s329 = ssub.s32 %s36, %s48
      %p330 = scmp.eq.s32.totalorder %s329, 0
      %s332 = sadd.s32 %s331, 1
      %s333 = scalar_select %p330, %s331, %s332
      %p336 = pneg %p330
      %p337 = scmp.eq.s32.totalorder %s29, 1
      %p338 = por %p336, %p337
      %p339 = scmp.ne.s32.totalorder %s331, %s334
      %p340 = scmp.eq.s32.totalorder %s29, 0
      %p341 = por %p339, %p340
      %p342 = scmp.ne.s32.totalorder %s331, %s334
      %p343 = scmp.eq.s32.totalorder %s34, 1
      %p344 = por %p342, %p343
      %p345 = scmp.ne.s32.totalorder %s334, %s335
      %p346 = scmp.eq.s32.totalorder %s34, 0
      %p347 = por %p345, %p346
      %p348 = scmp.ne.s32.totalorder %s334, %s335
      %p349 = scmp.eq.s32.totalorder %s35, 1
      %p350 = por %p348, %p349
      %p352 = scmp.ne.s32.totalorder %s335, %s351
      %p353 = scmp.eq.s32.totalorder %s35, 0
      %p354 = por %p352, %p353
      %p355 = scmp.le.s32.totalorder 1, %s29
      %p356 = scmp.lt.s32.totalorder %s29, 3
      %p357 = pnand %p355, %p356
      %p358 = pneg %p357
      // Predicated region
      $region9: #{tpu_custom_call.1} parent=5 // pred_check
        _
      $region10: #{tpu_custom_call.1} parent=5 // pred_check_branch
        %360 = sbr.rel (%p357) target = $region12
      $region11: #{tpu_custom_call.1} parent=5 // pred_region
        %s361 = ssub.s32 %s29, 1
        // Predicated region
        $region13: #{tpu_custom_call.1} parent=11 // pred_check
          %p362 = pneg %p90
        $region14: #{tpu_custom_call.1} parent=11 // pred_check_branch
          %364 = sbr.rel (%p362) target = $region16
        $region15: #{tpu_custom_call.1} parent=11 // pred_region
          %366 = vsyncadd [#allocation7], 0
          %s368 = sshll.u32 %s1, 4
          %s369 = int_to_ptr.hbm [resolvable:$true] %s368
          %s370 = sshll.u32 [#allocation6], 4
          %s371 = int_to_ptr.vmem [resolvable:$true] %s370
          %373 = dma.hbm_to_vmem [thread:$0]  %s369, 128, %s371, [#allocation7]
        $region16: #{tpu_custom_call.1} parent=11 // pred_fallthru
          _
        // Predicated region
        $region17: #{tpu_custom_call.1} parent=11 // pred_check
          %p374 = pneg %p111
        $region18: #{tpu_custom_call.1} parent=11 // pred_check_branch
          %376 = sbr.rel (%p374) target = $region20
        $region19: #{tpu_custom_call.1} parent=11 // pred_region
          %378 = vsyncadd [#allocation7], 0
          %s380 = sshll.u32 %s2, 4
          %s381 = int_to_ptr.hbm [resolvable:$true] %s380
          %s382 = sshll.u32 [#allocation8], 4
          %s383 = int_to_ptr.vmem [resolvable:$true] %s382
          %385 = dma.hbm_to_vmem [thread:$0]  %s381, 32, %s383, [#allocation7]
        $region20: #{tpu_custom_call.1} parent=11 // pred_fallthru
          _
        // Predicated region
        $region21: #{tpu_custom_call.1} parent=11 // pred_check
          %p386 = pneg %p132
        $region22: #{tpu_custom_call.1} parent=11 // pred_check_branch
          %388 = sbr.rel (%p386) target = $region24
        $region23: #{tpu_custom_call.1} parent=11 // pred_region
          %390 = vsyncadd [#allocation10], 0
          %s391 = sshll.u32 %s3, 4
          %s392 = int_to_ptr.hbm [resolvable:$true] %s391
          %s393 = sshll.u32 [#allocation9], 4
          %s394 = int_to_ptr.vmem [resolvable:$true] %s393
          %399 = dma.hbm_to_vmem [thread:$0]  %s392, 4096, %s394, [#allocation10], 128, 128, 8
        $region24: #{tpu_custom_call.1} parent=11 // pred_fallthru
          _
        // Predicated region
        $region25: #{tpu_custom_call.1} parent=11 // pred_check
          %p400 = pneg %p153
        $region26: #{tpu_custom_call.1} parent=11 // pred_check_branch
          %402 = sbr.rel (%p400) target = $region28
        $region27: #{tpu_custom_call.1} parent=11 // pred_region
          _
        $region28: #{tpu_custom_call.1} parent=11 // pred_fallthru
          _
        // Predicated region
        $region29: #{tpu_custom_call.1} parent=11 // pred_check
          %p403 = pneg %p174
        $region30: #{tpu_custom_call.1} parent=11 // pred_check_branch
          %405 = sbr.rel (%p403) target = $region32
        $region31: #{tpu_custom_call.1} parent=11 // pred_region
          %407 = vsyncadd [#allocation10], 0
          %s408 = sshll.u32 %s5, 4
          %s409 = int_to_ptr.hbm [resolvable:$true] %s408
          %s410 = sshll.u32 [#allocation11], 4
          %s411 = int_to_ptr.vmem [resolvable:$true] %s410
          %416 = dma.hbm_to_vmem [thread:$0]  %s409, 4096, %s411, [#allocation10], 128, 128, 8
        $region32: #{tpu_custom_call.1} parent=11 // pred_fallthru
          _
        // Predicated region
        $region33: #{tpu_custom_call.1} parent=11 // pred_check
          %p417 = pneg %p195
        $region34: #{tpu_custom_call.1} parent=11 // pred_check_branch
          %419 = sbr.rel (%p417) target = $region36
        $region35: #{tpu_custom_call.1} parent=11 // pred_region
          _
        $region36: #{tpu_custom_call.1} parent=11 // pred_fallthru
          _
        // Predicated region
        $region37: #{tpu_custom_call.1} parent=11 // pred_check
          %p420 = pneg %p216
        $region38: #{tpu_custom_call.1} parent=11 // pred_check_branch
          %422 = sbr.rel (%p420) target = $region40
        $region39: #{tpu_custom_call.1} parent=11 // pred_region
          %424 = vsyncadd [#allocation13], 0
          %s425 = sshll.u32 %s7, 4
          %s426 = int_to_ptr.hbm [resolvable:$true] %s425
          %s427 = sshll.u32 [#allocation12], 4
          %s428 = int_to_ptr.vmem [resolvable:$true] %s427
          %433 = dma.hbm_to_vmem [thread:$0]  %s426, 2048, %s428, [#allocation13], 64, 64, 4
        $region40: #{tpu_custom_call.1} parent=11 // pred_fallthru
          _
        // Predicated region
        $region41: #{tpu_custom_call.1} parent=11 // pred_check
          %p434 = pneg %p237
        $region42: #{tpu_custom_call.1} parent=11 // pred_check_branch
          %436 = sbr.rel (%p434) target = $region44
        $region43: #{tpu_custom_call.1} parent=11 // pred_region
          _
        $region44: #{tpu_custom_call.1} parent=11 // pred_fallthru
          _
        // Predicated region
        $region45: #{tpu_custom_call.1} parent=11 // pred_check
          %p437 = pneg %p258
        $region46: #{tpu_custom_call.1} parent=11 // pred_check_branch
          %439 = sbr.rel (%p437) target = $region48
        $region47: #{tpu_custom_call.1} parent=11 // pred_region
          %441 = vsyncadd [#allocation13], 0
          %s442 = sshll.u32 %s9, 4
          %s443 = int_to_ptr.hbm [resolvable:$true] %s442
          %s444 = sshll.u32 [#allocation14], 4
          %s445 = int_to_ptr.vmem [resolvable:$true] %s444
          %450 = dma.hbm_to_vmem [thread:$0]  %s443, 1024, %s445, [#allocation13], 64, 64, 4
        $region48: #{tpu_custom_call.1} parent=11 // pred_fallthru
          _
        // Predicated region
        $region49: #{tpu_custom_call.1} parent=11 // pred_check
          %p451 = pneg %p279
        $region50: #{tpu_custom_call.1} parent=11 // pred_check_branch
          %453 = sbr.rel (%p451) target = $region52
        $region51: #{tpu_custom_call.1} parent=11 // pred_region
          _
        $region52: #{tpu_custom_call.1} parent=11 // pred_fallthru
          _
        // Predicated region
        $region53: #{tpu_custom_call.1} parent=11 // pred_check
          %p454 = pneg %p300
        $region54: #{tpu_custom_call.1} parent=11 // pred_check_branch
          %456 = sbr.rel (%p454) target = $region56
        $region55: #{tpu_custom_call.1} parent=11 // pred_region
          %458 = vsyncadd [#allocation16], 0
          %s459 = sshll.u32 %s11, 4
          %s460 = int_to_ptr.hbm [resolvable:$true] %s459
          %s461 = sshll.u32 [#allocation15], 4
          %s462 = int_to_ptr.vmem [resolvable:$true] %s461
          %467 = dma.hbm_to_vmem [thread:$0]  %s460, 2048, %s462, [#allocation16], 128, 128, 8
        $region56: #{tpu_custom_call.1} parent=11 // pred_fallthru
          _
        // Predicated region
        $region57: #{tpu_custom_call.1} parent=11 // pred_check
          %p468 = pneg %p321
        $region58: #{tpu_custom_call.1} parent=11 // pred_check_branch
          %470 = sbr.rel (%p468) target = $region60
        $region59: #{tpu_custom_call.1} parent=11 // pred_region
          _
        $region60: #{tpu_custom_call.1} parent=11 // pred_fallthru
          _
      $region12: #{tpu_custom_call.1} parent=5 // pred_fallthru
        _
      %p471 = scmp.lt.s32.totalorder %s29, 2
      // Predicated region
      $region61: #{tpu_custom_call.1} parent=5 // pred_check
        %p472 = pneg %p471
      $region62: #{tpu_custom_call.1} parent=5 // pred_check_branch
        %474 = sbr.rel (%p472) target = $region64
      $region63: #{tpu_custom_call.1} parent=5 // pred_region
        // Predicated region
        $region65: #{tpu_custom_call.1} parent=63 // pred_check
          %p475 = pneg %p63
        $region66: #{tpu_custom_call.1} parent=63 // pred_check_branch
          %477 = sbr.rel (%p475) target = $region68
        $region67: #{tpu_custom_call.1} parent=63 // pred_region
          %s478 = sand.u32 %s53, 1
          %s479 = scalar_lea.sflag [#allocation4], %s478
          %s480 = sand.u32 %s53, 1
          %s481 = smul.addr %s480, 4
          %s482 = scalar_lea.vmem [#allocation3], %s481
          %484 = vsyncadd %s479, 0
          %s485 = sadd.s32 %s37, %s36
          %s486 = smul.addr %s485, 4
          %s487 = scalar_lea.hbm %s0, %s486
          %s489 = sshll.u32 %s487, 4
          %s490 = int_to_ptr.hbm [resolvable:$true] %s489
          %s491 = sshll.u32 %s482, 4
          %s492 = int_to_ptr.vmem [resolvable:$true] %s491
          %494 = dma.hbm_to_vmem [thread:$0]  %s490, 64, %s492, %s479
        $region68: #{tpu_custom_call.1} parent=63 // pred_fallthru
          _
      $region64: #{tpu_custom_call.1} parent=5 // pred_fallthru
        _
      %p495 = scmp.le.s32.totalorder 1, %s29
      %p496 = scmp.lt.s32.totalorder %s29, 3
      %p497 = pnand %p495, %p496
      %p498 = pneg %p497
      // Predicated region
      $region69: #{tpu_custom_call.1} parent=5 // pred_check
        _
      $region70: #{tpu_custom_call.1} parent=5 // pred_check_branch
        %500 = sbr.rel (%p497) target = $region72
      $region71: #{tpu_custom_call.1} parent=5 // pred_region
        %s501 = ssub.s32 %s29, 1
        %s502 = sand.u32 %s56, 1
        %s503 = scalar_lea.sflag [#allocation4], %s502
        %s504 = sand.u32 %s56, 1
        %s505 = smul.addr %s504, 4
        %s506 = scalar_lea.vmem [#allocation3], %s505
        // Predicated region
        $region73: #{tpu_custom_call.1} parent=71 // pred_check
          %p507 = pneg %p69
        $region74: #{tpu_custom_call.1} parent=71 // pred_check_branch
          %509 = sbr.rel (%p507) target = $region76
        $region75: #{tpu_custom_call.1} parent=71 // pred_region
          %511 = dma.done %s503, 64
        $region76: #{tpu_custom_call.1} parent=71 // pred_fallthru
          _
        // Predicated region
        $region77: #{tpu_custom_call.1} parent=71 // pred_check
          %p512 = pneg %p90
        $region78: #{tpu_custom_call.1} parent=71 // pred_check_branch
          %514 = sbr.rel (%p512) target = $region80
        $region79: #{tpu_custom_call.1} parent=71 // pred_region
          %516 = dma.done [#allocation7], 128
        $region80: #{tpu_custom_call.1} parent=71 // pred_fallthru
          _
        // Predicated region
        $region81: #{tpu_custom_call.1} parent=71 // pred_check
          %p517 = pneg %p111
        $region82: #{tpu_custom_call.1} parent=71 // pred_check_branch
          %519 = sbr.rel (%p517) target = $region84
        $region83: #{tpu_custom_call.1} parent=71 // pred_region
          %521 = dma.done [#allocation7], 32
        $region84: #{tpu_custom_call.1} parent=71 // pred_fallthru
          _
        // Predicated region
        $region85: #{tpu_custom_call.1} parent=71 // pred_check
          %p522 = pneg %p132
        $region86: #{tpu_custom_call.1} parent=71 // pred_check_branch
          %524 = sbr.rel (%p522) target = $region88
        $region87: #{tpu_custom_call.1} parent=71 // pred_region
          %526 = dma.done [#allocation10], 4096
        $region88: #{tpu_custom_call.1} parent=71 // pred_fallthru
          _
        // Predicated region
        $region89: #{tpu_custom_call.1} parent=71 // pred_check
          %p527 = pneg %p174
        $region90: #{tpu_custom_call.1} parent=71 // pred_check_branch
          %529 = sbr.rel (%p527) target = $region92
        $region91: #{tpu_custom_call.1} parent=71 // pred_region
          %531 = dma.done [#allocation10], 4096
        $region92: #{tpu_custom_call.1} parent=71 // pred_fallthru
          _
        // Predicated region
        $region93: #{tpu_custom_call.1} parent=71 // pred_check
          %p532 = pneg %p216
        $region94: #{tpu_custom_call.1} parent=71 // pred_check_branch
          %534 = sbr.rel (%p532) target = $region96
        $region95: #{tpu_custom_call.1} parent=71 // pred_region
          %536 = dma.done [#allocation13], 2048
        $region96: #{tpu_custom_call.1} parent=71 // pred_fallthru
          _
        // Predicated region
        $region97: #{tpu_custom_call.1} parent=71 // pred_check
          %p537 = pneg %p258
        $region98: #{tpu_custom_call.1} parent=71 // pred_check_branch
          %539 = sbr.rel (%p537) target = $region100
        $region99: #{tpu_custom_call.1} parent=71 // pred_region
          %541 = dma.done [#allocation13], 1024
        $region100: #{tpu_custom_call.1} parent=71 // pred_fallthru
          _
        // Predicated region
        $region101: #{tpu_custom_call.1} parent=71 // pred_check
          %p542 = pneg %p300
        $region102: #{tpu_custom_call.1} parent=71 // pred_check_branch
          %544 = sbr.rel (%p542) target = $region104
        $region103: #{tpu_custom_call.1} parent=71 // pred_region
          %546 = dma.done [#allocation16], 2048
        $region104: #{tpu_custom_call.1} parent=71 // pred_fallthru
          _
        %s547 = sand.u32 %s56, 1
        %s548 = scalar_lea.sflag [#allocation4], %s547
        %s549 = sand.u32 %s56, 1
        %s550 = smul.addr %s549, 4
        %s551 = scalar_lea.vmem [#allocation3], %s550
        %p552 = pneg %p69
        %p553 = pneg %p66
        %p554 = pneg %p90
        %p555 = pneg %p87
        %p556 = pneg %p111
        %p557 = pneg %p108
        %p558 = pneg %p132
        %p559 = pneg %p129
        %p560 = pneg %p153
        %p561 = pneg %p150
        %p562 = pneg %p174
        %p563 = pneg %p171
        %p564 = pneg %p195
        %p565 = pneg %p192
        %p566 = pneg %p216
        %p567 = pneg %p213
        %p568 = pneg %p237
        %p569 = pneg %p234
        %p570 = pneg %p258
        %p571 = pneg %p255
        %p572 = pneg %p279
        %p573 = pneg %p276
        %p574 = pneg %p300
        %p575 = pneg %p297
        %p576 = pneg %p321
        %p577 = pneg %p318
        %p578 = pneg %p347
        %p579 = pneg %p344
        %s580 = sand.u32 %s334, 1
        %s581 = scalar_lea.sflag [#allocation5], %s580
        %s582 = sand.u32 %s334, 1
        %s583 = scalar_lea.vmem [#allocation17], %s582
        %p585 = scmp.eq.s32.totalorder %s39, 0
        // Predicated region
        $region105: #{tpu_custom_call.1} parent=71 // pred_check
          %p586 = pneg %p585
        $region106: #{tpu_custom_call.1} parent=71 // pred_check_branch
          %588 = sbr.rel (%p586) target = $region108
        $region107: #{tpu_custom_call.1} parent=71 // pred_region
          %589 = vst [vmem:[#allocation2] sm:$0x1] 0.0
        $region108: #{tpu_custom_call.1} parent=71 // pred_fallthru
          _
        %v590 = vld [vmem:[%s506] sm:$0xf]
        %v591 = vld [vmem:[#allocation6] sm:$0xff]
        %v592 = vld [vmem:[#allocation8] sm:$0x3]
        %v594 = vperm.slane %v592, 0
        %v595 = vperm.slane %v592, 1
        %v599 = vunpack.c.l.b16 %v591
        %v600 = vunpack.c.h.b16 %v591
        %v601 = vpack.c.b16 %v599, %v599
        %v602 = vpack.c.b16 %v600, %v600
        %vm603 = vcmask 64512
        %v605 = vsel %vm603, %v590, 0
        %vm607 = vcmask 1043456
        %v609 = vsel %vm607, %v601, 0
        %v612 = vsel %vm607, %v602, 0
        %614 = vmatpush.bf16.msra.mxu0 0
        %615 = vmatpush.bf16.msra.mxu0 0
        %616 = vmatpush.bf16.msra.mxu0 0
        %617 = vmatpush.bf16.msra.mxu0 0
        %618 = vmatpush.bf16.msra.mxu0 0
        %619 = vmatpush.bf16.msra.mxu0 0
        %620 = vmatpush.bf16.msra.mxu0 0
        %621 = vmatpush.bf16.msra.mxu0 %v609
        %622 = vmatmul.bf16.gmra.mxu0 %v605
        %v623 = vpop.f32.mrf.mxu0
        %v624 = vadd.f32 %v594, %v623
        %v625 = vpop.f32.mrf.mxu0
        %626 = vdwg.mxu0
        %627 = vmatpush.bf16.msra.mxu0 0
        %628 = vmatpush.bf16.msra.mxu0 0
        %629 = vmatpush.bf16.msra.mxu0 0
        %630 = vmatpush.bf16.msra.mxu0 0
        %631 = vmatpush.bf16.msra.mxu0 0
        %632 = vmatpush.bf16.msra.mxu0 0
        %633 = vmatpush.bf16.msra.mxu0 0
        %634 = vmatpush.bf16.msra.mxu0 %v612
        %635 = vmatmul.bf16.gmra.mxu0 %v605
        %v636 = vpop.f32.mrf.mxu0
        %v637 = vadd.f32 %v595, %v636
        %v638 = vpop.f32.mrf.mxu0
        %639 = vdwg.mxu0
        %v640 = vmul.f32 %v624, 0.02
        %v641 = vmul.f32 %v637, 0.02
        %v642 = vmax.f32 %v624, %v640
        %v643 = vmax.f32 %v637, %v641
        %v644 = vpack.c.bf16 %v642, %v642
        %v645 = vpack.c.bf16 %v643, %v643
        %v646 = vld [vmem:[#allocation9] sm:$0xff]
        %v647 = vld [vmem:[#allocation9 + $0x8] sm:$0xff]
        %v648 = vld [vmem:[#allocation9 + $0x10] sm:$0xff]
        %v649 = vld [vmem:[#allocation9 + $0x18] sm:$0xff]
        %v650 = vld [vmem:[#allocation9 + $0x20] sm:$0xff]
        %v651 = vld [vmem:[#allocation9 + $0x28] sm:$0xff]
        %v652 = vld [vmem:[#allocation9 + $0x30] sm:$0xff]
        %v653 = vld [vmem:[#allocation9 + $0x38] sm:$0xff]
        %v654 = vld [vmem:[#allocation9 + $0x40] sm:$0xff]
        %v655 = vld [vmem:[#allocation9 + $0x48] sm:$0xff]
        %v656 = vld [vmem:[#allocation9 + $0x50] sm:$0xff]
        %v657 = vld [vmem:[#allocation9 + $0x58] sm:$0xff]
        %v658 = vld [vmem:[#allocation9 + $0x60] sm:$0xff]
        %v659 = vld [vmem:[#allocation9 + $0x68] sm:$0xff]
        %v660 = vld [vmem:[#allocation9 + $0x70] sm:$0xff]
        %v661 = vld [vmem:[#allocation9 + $0x78] sm:$0xff]
        %v662 = vld [vmem:[#allocation9 + $0x80] sm:$0xff]
        %v663 = vld [vmem:[#allocation9 + $0x88] sm:$0xff]
        %v664 = vld [vmem:[#allocation9 + $0x90] sm:$0xff]
        %v665 = vld [vmem:[#allocation9 + $0x98] sm:$0xff]
        %v666 = vld [vmem:[#allocation9 + $0xa0] sm:$0xff]
        %v667 = vld [vmem:[#allocation9 + $0xa8] sm:$0xff]
        %v668 = vld [vmem:[#allocation9 + $0xb0] sm:$0xff]
        %v669 = vld [vmem:[#allocation9 + $0xb8] sm:$0xff]
        %v670 = vld [vmem:[#allocation9 + $0xc0] sm:$0xff]
        %v671 = vld [vmem:[#allocation9 + $0xc8] sm:$0xff]
        %v672 = vld [vmem:[#allocation9 + $0xd0] sm:$0xff]
        %v673 = vld [vmem:[#allocation9 + $0xd8] sm:$0xff]
        %v674 = vld [vmem:[#allocation9 + $0xe0] sm:$0xff]
        %v675 = vld [vmem:[#allocation9 + $0xe8] sm:$0xff]
        %v676 = vld [vmem:[#allocation9 + $0xf0] sm:$0xff]
        %v677 = vld [vmem:[#allocation9 + $0xf8] sm:$0xff]
        %v678 = vld [vmem:[%s4] sm:$0x3]
        %v680 = vperm.slane %v678, 0
        %v681 = vperm.slane %v678, 1
        %v716 = vunpack.c.l.b16 %v646
        %v717 = vunpack.c.h.b16 %v646
        %v718 = vunpack.c.l.b16 %v647
        %v719 = vunpack.c.h.b16 %v647
        %v720 = vunpack.c.l.b16 %v648
        %v721 = vunpack.c.h.b16 %v648
        %v722 = vunpack.c.l.b16 %v649
        %v723 = vunpack.c.h.b16 %v649
        %v724 = vunpack.c.l.b16 %v650
        %v725 = vunpack.c.h.b16 %v650
        %v726 = vunpack.c.l.b16 %v651
        %v727 = vunpack.c.h.b16 %v651
        %v728 = vunpack.c.l.b16 %v652
        %v729 = vunpack.c.h.b16 %v652
        %v730 = vunpack.c.l.b16 %v653
        %v731 = vunpack.c.h.b16 %v653
        %v732 = vunpack.c.l.b16 %v654
        %v733 = vunpack.c.h.b16 %v654
        %v734 = vunpack.c.l.b16 %v655
        %v735 = vunpack.c.h.b16 %v655
        %v736 = vunpack.c.l.b16 %v656
        %v737 = vunpack.c.h.b16 %v656
        %v738 = vunpack.c.l.b16 %v657
        %v739 = vunpack.c.h.b16 %v657
        %v740 = vunpack.c.l.b16 %v658
        %v741 = vunpack.c.h.b16 %v658
        %v742 = vunpack.c.l.b16 %v659
        %v743 = vunpack.c.h.b16 %v659
        %v744 = vunpack.c.l.b16 %v660
        %v745 = vunpack.c.h.b16 %v660
        %v746 = vunpack.c.l.b16 %v661
        %v747 = vunpack.c.h.b16 %v661
        %v748 = vunpack.c.l.b16 %v662
        %v749 = vunpack.c.h.b16 %v662
        %v750 = vunpack.c.l.b16 %v663
        %v751 = vunpack.c.h.b16 %v663
        %v752 = vunpack.c.l.b16 %v664
        %v753 = vunpack.c.h.b16 %v664
        %v754 = vunpack.c.l.b16 %v665
        %v755 = vunpack.c.h.b16 %v665
        %v756 = vunpack.c.l.b16 %v666
        %v757 = vunpack.c.h.b16 %v666
        %v758 = vunpack.c.l.b16 %v667
        %v759 = vunpack.c.h.b16 %v667
        %v760 = vunpack.c.l.b16 %v668
        %v761 = vunpack.c.h.b16 %v668
        %v762 = vunpack.c.l.b16 %v669
        %v763 = vunpack.c.h.b16 %v669
        %v764 = vunpack.c.l.b16 %v670
        %v765 = vunpack.c.h.b16 %v670
        %v766 = vunpack.c.l.b16 %v671
        %v767 = vunpack.c.h.b16 %v671
        %v768 = vunpack.c.l.b16 %v672
        %v769 = vunpack.c.h.b16 %v672
        %v770 = vunpack.c.l.b16 %v673
        %v771 = vunpack.c.h.b16 %v673
        %v772 = vunpack.c.l.b16 %v674
        %v773 = vunpack.c.h.b16 %v674
        %v774 = vunpack.c.l.b16 %v675
        %v775 = vunpack.c.h.b16 %v675
        %v776 = vunpack.c.l.b16 %v676
        %v777 = vunpack.c.h.b16 %v676
        %v778 = vunpack.c.l.b16 %v677
        %v779 = vunpack.c.h.b16 %v677
        %v780 = vpack.c.b16 %v718, %v716
        %v781 = vpack.c.b16 %v719, %v717
        %v782 = vpack.c.b16 %v722, %v720
        %v783 = vpack.c.b16 %v723, %v721
        %v784 = vpack.c.b16 %v726, %v724
        %v785 = vpack.c.b16 %v727, %v725
        %v786 = vpack.c.b16 %v730, %v728
        %v787 = vpack.c.b16 %v731, %v729
        %v788 = vpack.c.b16 %v734, %v732
        %v789 = vpack.c.b16 %v735, %v733
        %v790 = vpack.c.b16 %v738, %v736
        %v791 = vpack.c.b16 %v739, %v737
        %v792 = vpack.c.b16 %v742, %v740
        %v793 = vpack.c.b16 %v743, %v741
        %v794 = vpack.c.b16 %v746, %v744
        %v795 = vpack.c.b16 %v747, %v745
        %v796 = vpack.c.b16 %v750, %v748
        %v797 = vpack.c.b16 %v751, %v749
        %v798 = vpack.c.b16 %v754, %v752
        %v799 = vpack.c.b16 %v755, %v753
        %v800 = vpack.c.b16 %v758, %v756
        %v801 = vpack.c.b16 %v759, %v757
        %v802 = vpack.c.b16 %v762, %v760
        %v803 = vpack.c.b16 %v763, %v761
        %v804 = vpack.c.b16 %v766, %v764
        %v805 = vpack.c.b16 %v767, %v765
        %v806 = vpack.c.b16 %v770, %v768
        %v807 = vpack.c.b16 %v771, %v769
        %v808 = vpack.c.b16 %v774, %v772
        %v809 = vpack.c.b16 %v775, %v773
        %v810 = vpack.c.b16 %v778, %v776
        %v811 = vpack.c.b16 %v779, %v777
        %844 = vmatpush.bf16.msra.mxu0 %v794
        %845 = vmatpush.bf16.msra.mxu0 %v792
        %846 = vmatpush.bf16.msra.mxu0 %v790
        %847 = vmatpush.bf16.msra.mxu0 %v788
        %848 = vmatpush.bf16.msra.mxu0 %v786
        %849 = vmatpush.bf16.msra.mxu0 %v784
        %850 = vmatpush.bf16.msra.mxu0 %v782
        %851 = vmatpush.bf16.msra.mxu0 %v780
        %852 = vmatmul.bf16.gmra.mxu0 %v644
        %v853 = vpop.f32.mrf.mxu0
        %v854 = vadd.f32 %v680, %v853
        %v855 = vpop.f32.mrf.mxu0
        %856 = vdwg.mxu0
        %857 = vmatpush.bf16.msra.mxu0 %v810
        %858 = vmatpush.bf16.msra.mxu0 %v808
        %859 = vmatpush.bf16.msra.mxu0 %v806
        %860 = vmatpush.bf16.msra.mxu0 %v804
        %861 = vmatpush.bf16.msra.mxu0 %v802
        %862 = vmatpush.bf16.msra.mxu0 %v800
        %863 = vmatpush.bf16.msra.mxu0 %v798
        %864 = vmatpush.bf16.msra.mxu0 %v796
        %865 = vmatmul.bf16.gmra.mxu0 %v645
        %v866 = vpop.f32.mrf.mxu0
        %v867 = vadd.f32 %v854, %v866
        %v868 = vpop.f32.mrf.mxu0
        %869 = vdwg.mxu0
        %870 = vmatpush.bf16.msra.mxu0 %v795
        %871 = vmatpush.bf16.msra.mxu0 %v793
        %872 = vmatpush.bf16.msra.mxu0 %v791
        %873 = vmatpush.bf16.msra.mxu0 %v789
        %874 = vmatpush.bf16.msra.mxu0 %v787
        %875 = vmatpush.bf16.msra.mxu0 %v785
        %876 = vmatpush.bf16.msra.mxu0 %v783
        %877 = vmatpush.bf16.msra.mxu0 %v781
        %878 = vmatmul.bf16.gmra.mxu0 %v644
        %v879 = vpop.f32.mrf.mxu0
        %v880 = vadd.f32 %v681, %v879
        %v881 = vpop.f32.mrf.mxu0
        %882 = vdwg.mxu0
        %883 = vmatpush.bf16.msra.mxu0 %v811
        %884 = vmatpush.bf16.msra.mxu0 %v809
        %885 = vmatpush.bf16.msra.mxu0 %v807
        %886 = vmatpush.bf16.msra.mxu0 %v805
        %887 = vmatpush.bf16.msra.mxu0 %v803
        %888 = vmatpush.bf16.msra.mxu0 %v801
        %889 = vmatpush.bf16.msra.mxu0 %v799
        %890 = vmatpush.bf16.msra.mxu0 %v797
        %891 = vmatmul.bf16.gmra.mxu0 %v645
        %v892 = vpop.f32.mrf.mxu0
        %v893 = vadd.f32 %v880, %v892
        %v894 = vpop.f32.mrf.mxu0
        %895 = vdwg.mxu0
        %v896 = vmul.f32 %v867, 0.02
        %v897 = vmul.f32 %v893, 0.02
        %v898 = vmax.f32 %v867, %v896
        %v899 = vmax.f32 %v893, %v897
        %v900 = vpack.c.bf16 %v898, %v898
        %v901 = vpack.c.bf16 %v899, %v899
        %v902 = vld [vmem:[#allocation11] sm:$0xff]
        %v903 = vld [vmem:[#allocation11 + $0x8] sm:$0xff]
        %v904 = vld [vmem:[#allocation11 + $0x10] sm:$0xff]
        %v905 = vld [vmem:[#allocation11 + $0x18] sm:$0xff]
        %v906 = vld [vmem:[#allocation11 + $0x20] sm:$0xff]
        %v907 = vld [vmem:[#allocation11 + $0x28] sm:$0xff]
        %v908 = vld [vmem:[#allocation11 + $0x30] sm:$0xff]
        %v909 = vld [vmem:[#allocation11 + $0x38] sm:$0xff]
        %v910 = vld [vmem:[#allocation11 + $0x40] sm:$0xff]
        %v911 = vld [vmem:[#allocation11 + $0x48] sm:$0xff]
        %v912 = vld [vmem:[#allocation11 + $0x50] sm:$0xff]
        %v913 = vld [vmem:[#allocation11 + $0x58] sm:$0xff]
        %v914 = vld [vmem:[#allocation11 + $0x60] sm:$0xff]
        %v915 = vld [vmem:[#allocation11 + $0x68] sm:$0xff]
        %v916 = vld [vmem:[#allocation11 + $0x70] sm:$0xff]
        %v917 = vld [vmem:[#allocation11 + $0x78] sm:$0xff]
        %v918 = vld [vmem:[#allocation11 + $0x80] sm:$0xff]
        %v919 = vld [vmem:[#allocation11 + $0x88] sm:$0xff]
        %v920 = vld [vmem:[#allocation11 + $0x90] sm:$0xff]
        %v921 = vld [vmem:[#allocation11 + $0x98] sm:$0xff]
        %v922 = vld [vmem:[#allocation11 + $0xa0] sm:$0xff]
        %v923 = vld [vmem:[#allocation11 + $0xa8] sm:$0xff]
        %v924 = vld [vmem:[#allocation11 + $0xb0] sm:$0xff]
        %v925 = vld [vmem:[#allocation11 + $0xb8] sm:$0xff]
        %v926 = vld [vmem:[#allocation11 + $0xc0] sm:$0xff]
        %v927 = vld [vmem:[#allocation11 + $0xc8] sm:$0xff]
        %v928 = vld [vmem:[#allocation11 + $0xd0] sm:$0xff]
        %v929 = vld [vmem:[#allocation11 + $0xd8] sm:$0xff]
        %v930 = vld [vmem:[#allocation11 + $0xe0] sm:$0xff]
        %v931 = vld [vmem:[#allocation11 + $0xe8] sm:$0xff]
        %v932 = vld [vmem:[#allocation11 + $0xf0] sm:$0xff]
        %v933 = vld [vmem:[#allocation11 + $0xf8] sm:$0xff]
        %v934 = vld [vmem:[%s6] sm:$0x3]
        %v936 = vperm.slane %v934, 0
        %v937 = vperm.slane %v934, 1
        %v972 = vunpack.c.l.b16 %v902
        %v973 = vunpack.c.h.b16 %v902
        %v974 = vunpack.c.l.b16 %v903
        %v975 = vunpack.c.h.b16 %v903
        %v976 = vunpack.c.l.b16 %v904
        %v977 = vunpack.c.h.b16 %v904
        %v978 = vunpack.c.l.b16 %v905
        %v979 = vunpack.c.h.b16 %v905
        %v980 = vunpack.c.l.b16 %v906
        %v981 = vunpack.c.h.b16 %v906
        %v982 = vunpack.c.l.b16 %v907
        %v983 = vunpack.c.h.b16 %v907
        %v984 = vunpack.c.l.b16 %v908
        %v985 = vunpack.c.h.b16 %v908
        %v986 = vunpack.c.l.b16 %v909
        %v987 = vunpack.c.h.b16 %v909
        %v988 = vunpack.c.l.b16 %v910
        %v989 = vunpack.c.h.b16 %v910
        %v990 = vunpack.c.l.b16 %v911
        %v991 = vunpack.c.h.b16 %v911
        %v992 = vunpack.c.l.b16 %v912
        %v993 = vunpack.c.h.b16 %v912
        %v994 = vunpack.c.l.b16 %v913
        %v995 = vunpack.c.h.b16 %v913
        %v996 = vunpack.c.l.b16 %v914
        %v997 = vunpack.c.h.b16 %v914
        %v998 = vunpack.c.l.b16 %v915
        %v999 = vunpack.c.h.b16 %v915
        %v1000 = vunpack.c.l.b16 %v916
        %v1001 = vunpack.c.h.b16 %v916
        %v1002 = vunpack.c.l.b16 %v917
        %v1003 = vunpack.c.h.b16 %v917
        %v1004 = vunpack.c.l.b16 %v918
        %v1005 = vunpack.c.h.b16 %v918
        %v1006 = vunpack.c.l.b16 %v919
        %v1007 = vunpack.c.h.b16 %v919
        %v1008 = vunpack.c.l.b16 %v920
        %v1009 = vunpack.c.h.b16 %v920
        %v1010 = vunpack.c.l.b16 %v921
        %v1011 = vunpack.c.h.b16 %v921
        %v1012 = vunpack.c.l.b16 %v922
        %v1013 = vunpack.c.h.b16 %v922
        %v1014 = vunpack.c.l.b16 %v923
        %v1015 = vunpack.c.h.b16 %v923
        %v1016 = vunpack.c.l.b16 %v924
        %v1017 = vunpack.c.h.b16 %v924
        %v1018 = vunpack.c.l.b16 %v925
        %v1019 = vunpack.c.h.b16 %v925
        %v1020 = vunpack.c.l.b16 %v926
        %v1021 = vunpack.c.h.b16 %v926
        %v1022 = vunpack.c.l.b16 %v927
        %v1023 = vunpack.c.h.b16 %v927
        %v1024 = vunpack.c.l.b16 %v928
        %v1025 = vunpack.c.h.b16 %v928
        %v1026 = vunpack.c.l.b16 %v929
        %v1027 = vunpack.c.h.b16 %v929
        %v1028 = vunpack.c.l.b16 %v930
        %v1029 = vunpack.c.h.b16 %v930
        %v1030 = vunpack.c.l.b16 %v931
        %v1031 = vunpack.c.h.b16 %v931
        %v1032 = vunpack.c.l.b16 %v932
        %v1033 = vunpack.c.h.b16 %v932
        %v1034 = vunpack.c.l.b16 %v933
        %v1035 = vunpack.c.h.b16 %v933
        %v1036 = vpack.c.b16 %v974, %v972
        %v1037 = vpack.c.b16 %v975, %v973
        %v1038 = vpack.c.b16 %v978, %v976
        %v1039 = vpack.c.b16 %v979, %v977
        %v1040 = vpack.c.b16 %v982, %v980
        %v1041 = vpack.c.b16 %v983, %v981
        %v1042 = vpack.c.b16 %v986, %v984
        %v1043 = vpack.c.b16 %v987, %v985
        %v1044 = vpack.c.b16 %v990, %v988
        %v1045 = vpack.c.b16 %v991, %v989
        %v1046 = vpack.c.b16 %v994, %v992
        %v1047 = vpack.c.b16 %v995, %v993
        %v1048 = vpack.c.b16 %v998, %v996
        %v1049 = vpack.c.b16 %v999, %v997
        %v1050 = vpack.c.b16 %v1002, %v1000
        %v1051 = vpack.c.b16 %v1003, %v1001
        %v1052 = vpack.c.b16 %v1006, %v1004
        %v1053 = vpack.c.b16 %v1007, %v1005
        %v1054 = vpack.c.b16 %v1010, %v1008
        %v1055 = vpack.c.b16 %v1011, %v1009
        %v1056 = vpack.c.b16 %v1014, %v1012
        %v1057 = vpack.c.b16 %v1015, %v1013
        %v1058 = vpack.c.b16 %v1018, %v1016
        %v1059 = vpack.c.b16 %v1019, %v1017
        %v1060 = vpack.c.b16 %v1022, %v1020
        %v1061 = vpack.c.b16 %v1023, %v1021
        %v1062 = vpack.c.b16 %v1026, %v1024
        %v1063 = vpack.c.b16 %v1027, %v1025
        %v1064 = vpack.c.b16 %v1030, %v1028
        %v1065 = vpack.c.b16 %v1031, %v1029
        %v1066 = vpack.c.b16 %v1034, %v1032
        %v1067 = vpack.c.b16 %v1035, %v1033
        %1100 = vmatpush.bf16.msra.mxu0 %v1050
        %1101 = vmatpush.bf16.msra.mxu0 %v1048
        %1102 = vmatpush.bf16.msra.mxu0 %v1046
        %1103 = vmatpush.bf16.msra.mxu0 %v1044
        %1104 = vmatpush.bf16.msra.mxu0 %v1042
        %1105 = vmatpush.bf16.msra.mxu0 %v1040
        %1106 = vmatpush.bf16.msra.mxu0 %v1038
        %1107 = vmatpush.bf16.msra.mxu0 %v1036
        %1108 = vmatmul.bf16.gmra.mxu0 %v900
        %v1109 = vpop.f32.mrf.mxu0
        %v1110 = vadd.f32 %v936, %v1109
        %v1111 = vpop.f32.mrf.mxu0
        %1112 = vdwg.mxu0
        %1113 = vmatpush.bf16.msra.mxu0 %v1066
        %1114 = vmatpush.bf16.msra.mxu0 %v1064
        %1115 = vmatpush.bf16.msra.mxu0 %v1062
        %1116 = vmatpush.bf16.msra.mxu0 %v1060
        %1117 = vmatpush.bf16.msra.mxu0 %v1058
        %1118 = vmatpush.bf16.msra.mxu0 %v1056
        %1119 = vmatpush.bf16.msra.mxu0 %v1054
        %1120 = vmatpush.bf16.msra.mxu0 %v1052
        %1121 = vmatmul.bf16.gmra.mxu0 %v901
        %v1122 = vpop.f32.mrf.mxu0
        %v1123 = vadd.f32 %v1110, %v1122
        %v1124 = vpop.f32.mrf.mxu0
        %1125 = vdwg.mxu0
        %1126 = vmatpush.bf16.msra.mxu0 %v1051
        %1127 = vmatpush.bf16.msra.mxu0 %v1049
        %1128 = vmatpush.bf16.msra.mxu0 %v1047
        %1129 = vmatpush.bf16.msra.mxu0 %v1045
        %1130 = vmatpush.bf16.msra.mxu0 %v1043
        %1131 = vmatpush.bf16.msra.mxu0 %v1041
        %1132 = vmatpush.bf16.msra.mxu0 %v1039
        %1133 = vmatpush.bf16.msra.mxu0 %v1037
        %1134 = vmatmul.bf16.gmra.mxu0 %v900
        %v1135 = vpop.f32.mrf.mxu0
        %v1136 = vadd.f32 %v937, %v1135
        %v1137 = vpop.f32.mrf.mxu0
        %1138 = vdwg.mxu0
        %1139 = vmatpush.bf16.msra.mxu0 %v1067
        %1140 = vmatpush.bf16.msra.mxu0 %v1065
        %1141 = vmatpush.bf16.msra.mxu0 %v1063
        %1142 = vmatpush.bf16.msra.mxu0 %v1061
        %1143 = vmatpush.bf16.msra.mxu0 %v1059
        %1144 = vmatpush.bf16.msra.mxu0 %v1057
        %1145 = vmatpush.bf16.msra.mxu0 %v1055
        %1146 = vmatpush.bf16.msra.mxu0 %v1053
        %1147 = vmatmul.bf16.gmra.mxu0 %v901
        %v1148 = vpop.f32.mrf.mxu0
        %v1149 = vadd.f32 %v1136, %v1148
        %v1150 = vpop.f32.mrf.mxu0
        %1151 = vdwg.mxu0
        %v1152 = vmul.f32 %v1123, 0.02
        %v1153 = vmul.f32 %v1149, 0.02
        %v1154 = vmax.f32 %v1123, %v1152
        %v1155 = vmax.f32 %v1149, %v1153
        %v1156 = vpack.c.bf16 %v1154, %v1154
        %v1157 = vpack.c.bf16 %v1155, %v1155
        %v1158 = vld [vmem:[#allocation12] sm:$0xf]
        %v1159 = vld [vmem:[#allocation12 + $0x4] sm:$0xf]
        %v1160 = vld [vmem:[#allocation12 + $0x8] sm:$0xf]
        %v1161 = vld [vmem:[#allocation12 + $0xc] sm:$0xf]
        %v1162 = vld [vmem:[#allocation12 + $0x10] sm:$0xf]
        %v1163 = vld [vmem:[#allocation12 + $0x14] sm:$0xf]
        %v1164 = vld [vmem:[#allocation12 + $0x18] sm:$0xf]
        %v1165 = vld [vmem:[#allocation12 + $0x1c] sm:$0xf]
        %v1166 = vld [vmem:[#allocation12 + $0x20] sm:$0xf]
        %v1167 = vld [vmem:[#allocation12 + $0x24] sm:$0xf]
        %v1168 = vld [vmem:[#allocation12 + $0x28] sm:$0xf]
        %v1169 = vld [vmem:[#allocation12 + $0x2c] sm:$0xf]
        %v1170 = vld [vmem:[#allocation12 + $0x30] sm:$0xf]
        %v1171 = vld [vmem:[#allocation12 + $0x34] sm:$0xf]
        %v1172 = vld [vmem:[#allocation12 + $0x38] sm:$0xf]
        %v1173 = vld [vmem:[#allocation12 + $0x3c] sm:$0xf]
        %v1174 = vld [vmem:[#allocation12 + $0x40] sm:$0xf]
        %v1175 = vld [vmem:[#allocation12 + $0x44] sm:$0xf]
        %v1176 = vld [vmem:[#allocation12 + $0x48] sm:$0xf]
        %v1177 = vld [vmem:[#allocation12 + $0x4c] sm:$0xf]
        %v1178 = vld [vmem:[#allocation12 + $0x50] sm:$0xf]
        %v1179 = vld [vmem:[#allocation12 + $0x54] sm:$0xf]
        %v1180 = vld [vmem:[#allocation12 + $0x58] sm:$0xf]
        %v1181 = vld [vmem:[#allocation12 + $0x5c] sm:$0xf]
        %v1182 = vld [vmem:[#allocation12 + $0x60] sm:$0xf]
        %v1183 = vld [vmem:[#allocation12 + $0x64] sm:$0xf]
        %v1184 = vld [vmem:[#allocation12 + $0x68] sm:$0xf]
        %v1185 = vld [vmem:[#allocation12 + $0x6c] sm:$0xf]
        %v1186 = vld [vmem:[#allocation12 + $0x70] sm:$0xf]
        %v1187 = vld [vmem:[#allocation12 + $0x74] sm:$0xf]
        %v1188 = vld [vmem:[#allocation12 + $0x78] sm:$0xf]
        %v1189 = vld [vmem:[#allocation12 + $0x7c] sm:$0xf]
        %v1190 = vld [vmem:[%s8] sm:$0x1]
        %v1192 = vperm.slane %v1190, 0
        %v1226 = vunpack.c.l.b16 %v1158
        %v1227 = vunpack.c.l.b16 %v1159
        %v1228 = vunpack.c.l.b16 %v1160
        %v1229 = vunpack.c.l.b16 %v1161
        %v1230 = vunpack.c.l.b16 %v1162
        %v1231 = vunpack.c.l.b16 %v1163
        %v1232 = vunpack.c.l.b16 %v1164
        %v1233 = vunpack.c.l.b16 %v1165
        %v1234 = vunpack.c.l.b16 %v1166
        %v1235 = vunpack.c.l.b16 %v1167
        %v1236 = vunpack.c.l.b16 %v1168
        %v1237 = vunpack.c.l.b16 %v1169
        %v1238 = vunpack.c.l.b16 %v1170
        %v1239 = vunpack.c.l.b16 %v1171
        %v1240 = vunpack.c.l.b16 %v1172
        %v1241 = vunpack.c.l.b16 %v1173
        %v1242 = vunpack.c.l.b16 %v1174
        %v1243 = vunpack.c.l.b16 %v1175
        %v1244 = vunpack.c.l.b16 %v1176
        %v1245 = vunpack.c.l.b16 %v1177
        %v1246 = vunpack.c.l.b16 %v1178
        %v1247 = vunpack.c.l.b16 %v1179
        %v1248 = vunpack.c.l.b16 %v1180
        %v1249 = vunpack.c.l.b16 %v1181
        %v1250 = vunpack.c.l.b16 %v1182
        %v1251 = vunpack.c.l.b16 %v1183
        %v1252 = vunpack.c.l.b16 %v1184
        %v1253 = vunpack.c.l.b16 %v1185
        %v1254 = vunpack.c.l.b16 %v1186
        %v1255 = vunpack.c.l.b16 %v1187
        %v1256 = vunpack.c.l.b16 %v1188
        %v1257 = vunpack.c.l.b16 %v1189
        %v1258 = vpack.c.b16 %v1227, %v1226
        %v1259 = vpack.c.b16 %v1229, %v1228
        %v1260 = vpack.c.b16 %v1231, %v1230
        %v1261 = vpack.c.b16 %v1233, %v1232
        %v1262 = vpack.c.b16 %v1235, %v1234
        %v1263 = vpack.c.b16 %v1237, %v1236
        %v1264 = vpack.c.b16 %v1239, %v1238
        %v1265 = vpack.c.b16 %v1241, %v1240
        %v1266 = vpack.c.b16 %v1243, %v1242
        %v1267 = vpack.c.b16 %v1245, %v1244
        %v1268 = vpack.c.b16 %v1247, %v1246
        %v1269 = vpack.c.b16 %v1249, %v1248
        %v1270 = vpack.c.b16 %v1251, %v1250
        %v1271 = vpack.c.b16 %v1253, %v1252
        %v1272 = vpack.c.b16 %v1255, %v1254
        %v1273 = vpack.c.b16 %v1257, %v1256
        %1290 = vmatpush.bf16.msra.mxu0 %v1265
        %1291 = vmatpush.bf16.msra.mxu0 %v1264
        %1292 = vmatpush.bf16.msra.mxu0 %v1263
        %1293 = vmatpush.bf16.msra.mxu0 %v1262
        %1294 = vmatpush.bf16.msra.mxu0 %v1261
        %1295 = vmatpush.bf16.msra.mxu0 %v1260
        %1296 = vmatpush.bf16.msra.mxu0 %v1259
        %1297 = vmatpush.bf16.msra.mxu0 %v1258
        %1298 = vmatmul.bf16.gmra.mxu0 %v1156
        %v1299 = vpop.f32.mrf.mxu0
        %v1300 = vadd.f32 %v1192, %v1299
        %v1301 = vpop.f32.mrf.mxu0
        %1302 = vdwg.mxu0
        %1303 = vmatpush.bf16.msra.mxu0 %v1273
        %1304 = vmatpush.bf16.msra.mxu0 %v1272
        %1305 = vmatpush.bf16.msra.mxu0 %v1271
        %1306 = vmatpush.bf16.msra.mxu0 %v1270
        %1307 = vmatpush.bf16.msra.mxu0 %v1269
        %1308 = vmatpush.bf16.msra.mxu0 %v1268
        %1309 = vmatpush.bf16.msra.mxu0 %v1267
        %1310 = vmatpush.bf16.msra.mxu0 %v1266
        %1311 = vmatmul.bf16.gmra.mxu0 %v1157
        %v1312 = vpop.f32.mrf.mxu0
        %v1313 = vadd.f32 %v1300, %v1312
        %v1314 = vpop.f32.mrf.mxu0
        %1315 = vdwg.mxu0
        %v1316 = vmul.f32 %v1313, 0.02
        %v1317 = vmax.f32 %v1313, %v1316
        %v1318 = vpack.c.bf16 %v1317, %v1317
        %v1319 = vld [vmem:[#allocation14] sm:$0xf]
        %v1320 = vld [vmem:[#allocation14 + $0x4] sm:$0xf]
        %v1321 = vld [vmem:[#allocation14 + $0x8] sm:$0xf]
        %v1322 = vld [vmem:[#allocation14 + $0xc] sm:$0xf]
        %v1323 = vld [vmem:[#allocation14 + $0x10] sm:$0xf]
        %v1324 = vld [vmem:[#allocation14 + $0x14] sm:$0xf]
        %v1325 = vld [vmem:[#allocation14 + $0x18] sm:$0xf]
        %v1326 = vld [vmem:[#allocation14 + $0x1c] sm:$0xf]
        %v1327 = vld [vmem:[#allocation14 + $0x20] sm:$0xf]
        %v1328 = vld [vmem:[#allocation14 + $0x24] sm:$0xf]
        %v1329 = vld [vmem:[#allocation14 + $0x28] sm:$0xf]
        %v1330 = vld [vmem:[#allocation14 + $0x2c] sm:$0xf]
        %v1331 = vld [vmem:[#allocation14 + $0x30] sm:$0xf]
        %v1332 = vld [vmem:[#allocation14 + $0x34] sm:$0xf]
        %v1333 = vld [vmem:[#allocation14 + $0x38] sm:$0xf]
        %v1334 = vld [vmem:[#allocation14 + $0x3c] sm:$0xf]
        %v1335 = vld [vmem:[%s10] sm:$0x1]
        %v1337 = vperm.slane %v1335, 0
        %v1355 = vunpack.c.l.b16 %v1319
        %v1356 = vunpack.c.l.b16 %v1320
        %v1357 = vunpack.c.l.b16 %v1321
        %v1358 = vunpack.c.l.b16 %v1322
        %v1359 = vunpack.c.l.b16 %v1323
        %v1360 = vunpack.c.l.b16 %v1324
        %v1361 = vunpack.c.l.b16 %v1325
        %v1362 = vunpack.c.l.b16 %v1326
        %v1363 = vunpack.c.l.b16 %v1327
        %v1364 = vunpack.c.l.b16 %v1328
        %v1365 = vunpack.c.l.b16 %v1329
        %v1366 = vunpack.c.l.b16 %v1330
        %v1367 = vunpack.c.l.b16 %v1331
        %v1368 = vunpack.c.l.b16 %v1332
        %v1369 = vunpack.c.l.b16 %v1333
        %v1370 = vunpack.c.l.b16 %v1334
        %v1371 = vpack.c.b16 %v1356, %v1355
        %v1372 = vpack.c.b16 %v1358, %v1357
        %v1373 = vpack.c.b16 %v1360, %v1359
        %v1374 = vpack.c.b16 %v1362, %v1361
        %v1375 = vpack.c.b16 %v1364, %v1363
        %v1376 = vpack.c.b16 %v1366, %v1365
        %v1377 = vpack.c.b16 %v1368, %v1367
        %v1378 = vpack.c.b16 %v1370, %v1369
        %1387 = vmatpush.bf16.msra.mxu0 %v1378
        %1388 = vmatpush.bf16.msra.mxu0 %v1377
        %1389 = vmatpush.bf16.msra.mxu0 %v1376
        %1390 = vmatpush.bf16.msra.mxu0 %v1375
        %1391 = vmatpush.bf16.msra.mxu0 %v1374
        %1392 = vmatpush.bf16.msra.mxu0 %v1373
        %1393 = vmatpush.bf16.msra.mxu0 %v1372
        %1394 = vmatpush.bf16.msra.mxu0 %v1371
        %1395 = vmatmul.bf16.gmra.mxu0 %v1318
        %v1396 = vpop.f32.mrf.mxu0
        %v1397 = vadd.f32 %v1337, %v1396
        %v1398 = vpop.f32.mrf.mxu0
        %1399 = vdwg.mxu0
        %v1400 = vmul.f32 %v1397, 0.02
        %v1401 = vmax.f32 %v1397, %v1400
        %v1402 = vld [vmem:[#allocation2] sm:$0x1]
        %v1403 = vrot.slane %v1401, 4
        %v1404 = vadd.f32 %v1401, %v1403
        %v1405 = vrot.slane %v1404, 2
        %v1406 = vadd.f32 %v1404, %v1405
        %v1407 = vrot.slane %v1406, 1
        %v1408 = vadd.f32 %v1406, %v1407
        %v1409 = vadd.f32 %v1402, %v1408
        %1410 = vst [vmem:[#allocation2] sm:$0x1] %v1409
        // Predicated region
        $region109: #{tpu_custom_call.1} parent=71 // pred_check
          %p1411 = pneg %p585
        $region110: #{tpu_custom_call.1} parent=71 // pred_check_branch
          %1413 = sbr.rel (%p1411) target = $region112
        $region111: #{tpu_custom_call.1} parent=71 // pred_region
          %v1414 = vld [vmem:[#allocation2] sm:$0x1]
          %v1415 = vld [vmem:[#allocation15] sm:$0xff]
          %v1416 = vld [vmem:[#allocation15 + $0x8] sm:$0xff]
          %v1417 = vld [vmem:[#allocation15 + $0x10] sm:$0xff]
          %v1418 = vld [vmem:[#allocation15 + $0x18] sm:$0xff]
          %v1419 = vld [vmem:[#allocation15 + $0x20] sm:$0xff]
          %v1420 = vld [vmem:[#allocation15 + $0x28] sm:$0xff]
          %v1421 = vld [vmem:[#allocation15 + $0x30] sm:$0xff]
          %v1422 = vld [vmem:[#allocation15 + $0x38] sm:$0xff]
          %v1423 = vld [vmem:[#allocation15 + $0x40] sm:$0xff]
          %v1424 = vld [vmem:[#allocation15 + $0x48] sm:$0xff]
          %v1425 = vld [vmem:[#allocation15 + $0x50] sm:$0xff]
          %v1426 = vld [vmem:[#allocation15 + $0x58] sm:$0xff]
          %v1427 = vld [vmem:[#allocation15 + $0x60] sm:$0xff]
          %v1428 = vld [vmem:[#allocation15 + $0x68] sm:$0xff]
          %v1429 = vld [vmem:[#allocation15 + $0x70] sm:$0xff]
          %v1430 = vld [vmem:[#allocation15 + $0x78] sm:$0xff]
          %v1431 = vld [vmem:[%s12] sm:$0x1]
          %v1432 = vmul.f32 %v1431, 8.0
          %1433 = vmatpush.msra.mxu0 %v1430
          %1434 = vmatpush.msra.mxu0 %v1429
          %1435 = vmatpush.msra.mxu0 %v1428
          %1436 = vmatpush.msra.mxu0 %v1427
          %1437 = vmatpush.msra.mxu0 %v1426
          %1438 = vmatpush.msra.mxu0 %v1425
          %1439 = vmatpush.msra.mxu0 %v1424
          %1440 = vmatpush.msra.mxu0 %v1423
          %1441 = vmatpush.msra.mxu0 %v1422
          %1442 = vmatpush.msra.mxu0 %v1421
          %1443 = vmatpush.msra.mxu0 %v1420
          %1444 = vmatpush.msra.mxu0 %v1419
          %1445 = vmatpush.msra.mxu0 %v1418
          %1446 = vmatpush.msra.mxu0 %v1417
          %1447 = vmatpush.msra.mxu0 %v1416
          %1448 = vmatpush.msra.mxu0 %v1415
          %1449 = vmatmul.f32.gmra.mxu0 %v1414
          %v1450 = vpop.f32.mrf.mxu0
          %v1451 = vadd.f32 %v1432, %v1450
          %1452 = vdwg.mxu0
          %1453 = vst [vmem:[%s583] sm:$0x1] %v1451
        $region112: #{tpu_custom_call.1} parent=71 // pred_fallthru
          _
        %s1454 = sand.u32 %s334, 1
        %s1455 = scalar_lea.sflag [#allocation5], %s1454
        %s1456 = sand.u32 %s334, 1
        %s1457 = scalar_lea.vmem [#allocation17], %s1456
        // Predicated region
        $region113: #{tpu_custom_call.1} parent=71 // pred_check
          %p1458 = pneg %p344
        $region114: #{tpu_custom_call.1} parent=71 // pred_check_branch
          %1460 = sbr.rel (%p1458) target = $region116
        $region115: #{tpu_custom_call.1} parent=71 // pred_region
          %1462 = vsyncadd %s1455, 0
          %s1463 = scalar_lea.hbm %s13, %s38
          %s1465 = sshll.u32 %s1457, 4
          %s1466 = int_to_ptr.vmem [resolvable:$true] %s1465
          %s1467 = sshll.u32 %s1463, 4
          %s1468 = int_to_ptr.hbm [resolvable:$true] %s1467
          %1470 = dma.vmem_to_hbm [thread:$0]  %s1466, 16, %s1468, %s1455
        $region116: #{tpu_custom_call.1} parent=71 // pred_fallthru
          _
      $region72: #{tpu_custom_call.1} parent=5 // pred_fallthru
        _
      %p1471 = scmp.le.s32.totalorder 2, %s29
      // Predicated region
      $region117: #{tpu_custom_call.1} parent=5 // pred_check
        %p1472 = pneg %p1471
      $region118: #{tpu_custom_call.1} parent=5 // pred_check_branch
        %1474 = sbr.rel (%p1472) target = $region120
      $region119: #{tpu_custom_call.1} parent=5 // pred_region
        %s1475 = ssub.s32 %s29, 2
        // Predicated region
        $region121: #{tpu_custom_call.1} parent=119 // pred_check
          %p1476 = pneg %p350
        $region122: #{tpu_custom_call.1} parent=119 // pred_check_branch
          %1478 = sbr.rel (%p1476) target = $region124
        $region123: #{tpu_custom_call.1} parent=119 // pred_region
          %s1479 = sand.u32 %s335, 1
          %s1480 = scalar_lea.sflag [#allocation5], %s1479
          %s1481 = sand.u32 %s335, 1
          %s1482 = scalar_lea.vmem [#allocation17], %s1481
          %1484 = dma.done %s1480, 16
        $region124: #{tpu_custom_call.1} parent=119 // pred_fallthru
          _
      $region120: #{tpu_custom_call.1} parent=5 // pred_fallthru
        _
    $region6: #{tpu_custom_call.1} parent=1 // loop_footer
      %s33 = sadd.s32 1, %s29
    $region7: #{tpu_custom_call.1} parent=1 // loop_footer_branch
      %28 = sbr.rel target = $region3
    $region8: #{tpu_custom_call.1} parent=1 // loop_exit
      _
    %1485 = vsyncpa [#allocation4], 1
    %s1486 = scalar_lea.sflag [#allocation4], 1
    %1487 = vsyncpa %s1486, 1
    %1488 = vsyncpa [#allocation7], 1
    %1489 = vsyncpa [#allocation10], 1
    %1490 = vsyncpa [#allocation13], 1
    %1491 = vsyncpa [#allocation16], 1
    %1492 = vsyncpa [#allocation5], 1
    %s1493 = scalar_lea.sflag [#allocation5], 1
    %1494 = vsyncpa %s1493, 1

// kernel: tpu_custom_call.1
$region0: #{tpu_custom_call.1}
  #allocation0 [shape = 'u32[]', space=smem, size = 0x4, offset = 0x4, fixed_abs, tag = 'smem constant byte address 0x4 - core index']
  #allocation1 [shape = 'u32[72,128]{1,0:T(1,128)}', space=vmem, size = 0x9000, scoped, tag = 'internal scratch']
  #allocation2 [shape = 'f32[1,128]{1,0:T(1,128)}', space=vmem, size = 0x200, scoped, tag = 'scratch operand']
  %s0 = inlined_call_operand.hbm [shape: bf16[2,8,8], index: 0, kind: input, shape index: {}]
  %s1 = inlined_call_operand.hbm [shape: bf16[8,256], index: 1, kind: input, shape index: {}]
  %s2 = inlined_call_operand.hbm [shape: f32[1,256], index: 2, kind: input, shape index: {}]
  %s3 = inlined_call_operand.hbm [shape: bf16[256,256], index: 3, kind: input, shape index: {}]
  %s4 = inlined_call_operand.vmem [shape: f32[1,256], index: 4, kind: input, shape index: {}]
  %s5 = inlined_call_operand.hbm [shape: bf16[256,256], index: 5, kind: input, shape index: {}]
  %s6 = inlined_call_operand.vmem [shape: f32[1,256], index: 6, kind: input, shape index: {}]
  %s7 = inlined_call_operand.hbm [shape: bf16[256,128], index: 7, kind: input, shape index: {}]
  %s8 = inlined_call_operand.vmem [shape: f32[1,128], index: 8, kind: input, shape index: {}]
  %s9 = inlined_call_operand.hbm [shape: bf16[128,128], index: 9, kind: input, shape index: {}]
  %s10 = inlined_call_operand.vmem [shape: f32[1,128], index: 10, kind: input, shape index: {}]
  %s11 = inlined_call_operand.hbm [shape: f32[128,128], index: 11, kind: input, shape index: {}]
  %s12 = inlined_call_operand.vmem [shape: f32[1,128], index: 12, kind: input, shape index: {}]
  %s13 = inlined_call_operand.hbm [shape: f32[2,1,128], index: 13, kind: output, shape index: {}]
  %s14 = sld [smem:[#allocation0]]
  $region125: #{tpu_custom_call.1} parent=0
    _
  %s16 = ssub.s32 1, %s14
  %s17 = scalar_select 0, %s16, %s14
  $region1: #{tpu_custom_call.1} parent=0
    #allocation3 [shape = 'u8[4096]{0}', space=vmem, size = 0x1000, scoped, tag = 'input window, operand 0']
    #allocation4 [shape = 's32[2]{0}', space=sflag, size = 0x8, scoped, tag = 'scoped memory for tpu_custom_call.1']
    #allocation5 [shape = 's32[2]{0}', space=sflag, size = 0x8, scoped, tag = 'scoped memory for tpu_custom_call.1']
    #allocation6 [shape = 'u8[4096]{0}', space=vmem, size = 0x1000, scoped, tag = 'input window, operand 1, single buffered']
    #allocation7 [shape = 's32[1]{0}', space=sflag, size = 0x4, scoped, tag = 'scoped memory for tpu_custom_call.1']
    #allocation8 [shape = 'u8[1024]{0}', space=vmem, size = 0x400, scoped, tag = 'input window, operand 2, single buffered']
    #allocation9 [shape = 'u8[131072]{0}', space=vmem, size = 0x20000, scoped, tag = 'input window, operand 3, single buffered']
    #allocation10 [shape = 's32[1]{0}', space=sflag, size = 0x4, scoped, tag = 'scoped memory for tpu_custom_call.1']
    #allocation11 [shape = 'u8[131072]{0}', space=vmem, size = 0x20000, scoped, tag = 'input window, operand 5, single buffered']
    #allocation12 [shape = 'u8[65536]{0}', space=vmem, size = 0x10000, scoped, tag = 'input window, operand 7, single buffered']
    #allocation13 [shape = 's32[1]{0}', space=sflag, size = 0x4, scoped, tag = 'scoped memory for tpu_custom_call.1']
    #allocation14 [shape = 'u8[32768]{0}', space=vmem, size = 0x8000, scoped, tag = 'input window, operand 9, single buffered']
    #allocation15 [shape = 'u8[65536]{0}', space=vmem, size = 0x10000, scoped, tag = 'input window, operand 11, single buffered']
    #allocation16 [shape = 's32[1]{0}', space=sflag, size = 0x4, scoped, tag = 'scoped memory for tpu_custom_call.1']
    #allocation17 [shape = 'u8[1024]{0}', space=vmem, size = 0x400, scoped, tag = 'output window, operand 0']
    %18 = vsyncpa [#allocation4], 0
    %s19 = scalar_lea.sflag [#allocation4], 1
    %20 = vsyncpa %s19, 0
    %21 = vsyncpa [#allocation7], 0
    %22 = vsyncpa [#allocation10], 0
    %23 = vsyncpa [#allocation13], 0
    %24 = vsyncpa [#allocation16], 0
    %25 = vsyncpa [#allocation5], 0
    %s26 = scalar_lea.sflag [#allocation5], 1
    %27 = vsyncpa %s26, 0
    loop: start=0, step=1, limit=4
    $region2: #{tpu_custom_call.1} parent=1 // loop_pre_header
      _
    $region3: #{tpu_custom_call.1} parent=1 // loop_header
      %s29 = sphi 0, %s33
      %p30 = scmp.ge.s32.totalorder %s29, 4
      %s36 = sphi 0, %s48
      %s37 = sphi 0, %s44
      %s38 = sphi 0, %s36
      %s39 = sphi 0, %s37
      %s40 = sphi 0, %s38
      %s41 = sphi 0, %s39
      %s53 = sphi 0, %s55
      %s56 = sphi 0, %s53
      %s57 = sphi 0, %s56
      %s73 = sphi 0, %s57
      %s77 = sphi 0, %s77
      %s79 = sphi 0, %s77
      %s80 = sphi 0, %s79
      %s94 = sphi 0, %s80
      %s98 = sphi 0, %s98
      %s100 = sphi 0, %s98
      %s101 = sphi 0, %s100
      %s115 = sphi 0, %s101
      %s119 = sphi 0, %s119
      %s121 = sphi 0, %s119
      %s122 = sphi 0, %s121
      %s136 = sphi 0, %s122
      %s140 = sphi 0, %s140
      %s142 = sphi 0, %s140
      %s143 = sphi 0, %s142
      %s157 = sphi 0, %s143
      %s161 = sphi 0, %s161
      %s163 = sphi 0, %s161
      %s164 = sphi 0, %s163
      %s178 = sphi 0, %s164
      %s182 = sphi 0, %s182
      %s184 = sphi 0, %s182
      %s185 = sphi 0, %s184
      %s199 = sphi 0, %s185
      %s203 = sphi 0, %s203
      %s205 = sphi 0, %s203
      %s206 = sphi 0, %s205
      %s220 = sphi 0, %s206
      %s224 = sphi 0, %s224
      %s226 = sphi 0, %s224
      %s227 = sphi 0, %s226
      %s241 = sphi 0, %s227
      %s245 = sphi 0, %s245
      %s247 = sphi 0, %s245
      %s248 = sphi 0, %s247
      %s262 = sphi 0, %s248
      %s266 = sphi 0, %s266
      %s268 = sphi 0, %s266
      %s269 = sphi 0, %s268
      %s283 = sphi 0, %s269
      %s287 = sphi 0, %s287
      %s289 = sphi 0, %s287
      %s290 = sphi 0, %s289
      %s304 = sphi 0, %s290
      %s308 = sphi 0, %s308
      %s310 = sphi 0, %s308
      %s311 = sphi 0, %s310
      %s325 = sphi 0, %s311
      %s331 = sphi 0, %s333
      %s334 = sphi 0, %s331
      %s335 = sphi 0, %s334
      %s351 = sphi 0, %s335
    $region4: #{tpu_custom_call.1} parent=1 // loop_header_branch
      %32 = sbr.rel (%p30) target = $region8
    $region5: #{tpu_custom_call.1} parent=1 // loop_body
      %s34 = ssub.s32 %s29, 1
      %s35 = ssub.s32 %s29, 2
      %s42 = sadd.s32 1, %s37
      %p43 = scmp.ge.s32.totalorder %s42, 1
      %s44 = scalar_select %p43, 0, %s42
      %s45 = sadd.s32 1, %s36
      %s46 = scalar_select %p43, %s45, %s36
      %p47 = scmp.ge.s32.totalorder %s46, 2
      %s48 = scalar_select %p47, 0, %s46
      %s49 = ssub.s32 %s36, %s48
      %s50 = ssub.s32 %s37, %s44
      %s51 = sor.u32 %s49, %s50
      %p52 = scmp.eq.s32.totalorder %s51, 0
      %s54 = sadd.s32 %s53, 1
      %s55 = scalar_select %p52, %s53, %s54
      %p58 = pneg %p52
      %p59 = scmp.eq.s32.totalorder %s29, 1
      %p60 = por %p58, %p59
      %p61 = scmp.ne.s32.totalorder %s53, %s56
      %p62 = scmp.eq.s32.totalorder %s29, 0
      %p63 = por %p61, %p62
      %p64 = scmp.ne.s32.totalorder %s53, %s56
      %p65 = scmp.eq.s32.totalorder %s34, 1
      %p66 = por %p64, %p65
      %p67 = scmp.ne.s32.totalorder %s56, %s57
      %p68 = scmp.eq.s32.totalorder %s34, 0
      %p69 = por %p67, %p68
      %p70 = scmp.ne.s32.totalorder %s56, %s57
      %p71 = scmp.eq.s32.totalorder %s35, 1
      %p72 = por %p70, %p71
      %p74 = scmp.ne.s32.totalorder %s57, %s73
      %p75 = scmp.eq.s32.totalorder %s35, 0
      %p76 = por %p74, %p75
      %s78 = sadd.s32 %s77, 1
      %p81 = scmp.eq.s32.totalorder %s29, 1
      %p82 = scmp.ne.s32.totalorder %s77, %s79
      %p83 = scmp.eq.s32.totalorder %s29, 0
      %p84 = por %p82, %p83
      %p85 = scmp.ne.s32.totalorder %s77, %s79
      %p86 = scmp.eq.s32.totalorder %s34, 1
      %p87 = por %p85, %p86
      %p88 = scmp.ne.s32.totalorder %s79, %s80
      %p89 = scmp.eq.s32.totalorder %s34, 0
      %p90 = por %p88, %p89
      %p91 = scmp.ne.s32.totalorder %s79, %s80
      %p92 = scmp.eq.s32.totalorder %s35, 1
      %p93 = por %p91, %p92
      %p95 = scmp.ne.s32.totalorder %s80, %s94
      %p96 = scmp.eq.s32.totalorder %s35, 0
      %p97 = por %p95, %p96
      %s99 = sadd.s32 %s98, 1
      %p102 = scmp.eq.s32.totalorder %s29, 1
      %p103 = scmp.ne.s32.totalorder %s98, %s100
      %p104 = scmp.eq.s32.totalorder %s29, 0
      %p105 = por %p103, %p104
      %p106 = scmp.ne.s32.totalorder %s98, %s100
      %p107 = scmp.eq.s32.totalorder %s34, 1
      %p108 = por %p106, %p107
      %p109 = scmp.ne.s32.totalorder %s100, %s101
      %p110 = scmp.eq.s32.totalorder %s34, 0
      %p111 = por %p109, %p110
      %p112 = scmp.ne.s32.totalorder %s100, %s101
      %p113 = scmp.eq.s32.totalorder %s35, 1
      %p114 = por %p112, %p113
      %p116 = scmp.ne.s32.totalorder %s101, %s115
      %p117 = scmp.eq.s32.totalorder %s35, 0
      %p118 = por %p116, %p117
      %s120 = sadd.s32 %s119, 1
      %p123 = scmp.eq.s32.totalorder %s29, 1
      %p124 = scmp.ne.s32.totalorder %s119, %s121
      %p125 = scmp.eq.s32.totalorder %s29, 0
      %p126 = por %p124, %p125
      %p127 = scmp.ne.s32.totalorder %s119, %s121
      %p128 = scmp.eq.s32.totalorder %s34, 1
      %p129 = por %p127, %p128
      %p130 = scmp.ne.s32.totalorder %s121, %s122
      %p131 = scmp.eq.s32.totalorder %s34, 0
      %p132 = por %p130, %p131
      %p133 = scmp.ne.s32.totalorder %s121, %s122
      %p134 = scmp.eq.s32.totalorder %s35, 1
      %p135 = por %p133, %p134
      %p137 = scmp.ne.s32.totalorder %s122, %s136
      %p138 = scmp.eq.s32.totalorder %s35, 0
      %p139 = por %p137, %p138
      %s141 = sadd.s32 %s140, 1
      %p144 = scmp.eq.s32.totalorder %s29, 1
      %p145 = scmp.ne.s32.totalorder %s140, %s142
      %p146 = scmp.eq.s32.totalorder %s29, 0
      %p147 = por %p145, %p146
      %p148 = scmp.ne.s32.totalorder %s140, %s142
      %p149 = scmp.eq.s32.totalorder %s34, 1
      %p150 = por %p148, %p149
      %p151 = scmp.ne.s32.totalorder %s142, %s143
      %p152 = scmp.eq.s32.totalorder %s34, 0
      %p153 = por %p151, %p152
      %p154 = scmp.ne.s32.totalorder %s142, %s143
      %p155 = scmp.eq.s32.totalorder %s35, 1
      %p156 = por %p154, %p155
      %p158 = scmp.ne.s32.totalorder %s143, %s157
      %p159 = scmp.eq.s32.totalorder %s35, 0
      %p160 = por %p158, %p159
      %s162 = sadd.s32 %s161, 1
      %p165 = scmp.eq.s32.totalorder %s29, 1
      %p166 = scmp.ne.s32.totalorder %s161, %s163
      %p167 = scmp.eq.s32.totalorder %s29, 0
      %p168 = por %p166, %p167
      %p169 = scmp.ne.s32.totalorder %s161, %s163
      %p170 = scmp.eq.s32.totalorder %s34, 1
      %p171 = por %p169, %p170
      %p172 = scmp.ne.s32.totalorder %s163, %s164
      %p173 = scmp.eq.s32.totalorder %s34, 0
      %p174 = por %p172, %p173
      %p175 = scmp.ne.s32.totalorder %s163, %s164
      %p176 = scmp.eq.s32.totalorder %s35, 1
      %p177 = por %p175, %p176
      %p179 = scmp.ne.s32.totalorder %s164, %s178
      %p180 = scmp.eq.s32.totalorder %s35, 0
      %p181 = por %p179, %p180
      %s183 = sadd.s32 %s182, 1
      %p186 = scmp.eq.s32.totalorder %s29, 1
      %p187 = scmp.ne.s32.totalorder %s182, %s184
      %p188 = scmp.eq.s32.totalorder %s29, 0
      %p189 = por %p187, %p188
      %p190 = scmp.ne.s32.totalorder %s182, %s184
      %p191 = scmp.eq.s32.totalorder %s34, 1
      %p192 = por %p190, %p191
      %p193 = scmp.ne.s32.totalorder %s184, %s185
      %p194 = scmp.eq.s32.totalorder %s34, 0
      %p195 = por %p193, %p194
      %p196 = scmp.ne.s32.totalorder %s184, %s185
      %p197 = scmp.eq.s32.totalorder %s35, 1
      %p198 = por %p196, %p197
      %p200 = scmp.ne.s32.totalorder %s185, %s199
      %p201 = scmp.eq.s32.totalorder %s35, 0
      %p202 = por %p200, %p201
      %s204 = sadd.s32 %s203, 1
      %p207 = scmp.eq.s32.totalorder %s29, 1
      %p208 = scmp.ne.s32.totalorder %s203, %s205
      %p209 = scmp.eq.s32.totalorder %s29, 0
      %p210 = por %p208, %p209
      %p211 = scmp.ne.s32.totalorder %s203, %s205
      %p212 = scmp.eq.s32.totalorder %s34, 1
      %p213 = por %p211, %p212
      %p214 = scmp.ne.s32.totalorder %s205, %s206
      %p215 = scmp.eq.s32.totalorder %s34, 0
      %p216 = por %p214, %p215
      %p217 = scmp.ne.s32.totalorder %s205, %s206
      %p218 = scmp.eq.s32.totalorder %s35, 1
      %p219 = por %p217, %p218
      %p221 = scmp.ne.s32.totalorder %s206, %s220
      %p222 = scmp.eq.s32.totalorder %s35, 0
      %p223 = por %p221, %p222
      %s225 = sadd.s32 %s224, 1
      %p228 = scmp.eq.s32.totalorder %s29, 1
      %p229 = scmp.ne.s32.totalorder %s224, %s226
      %p230 = scmp.eq.s32.totalorder %s29, 0
      %p231 = por %p229, %p230
      %p232 = scmp.ne.s32.totalorder %s224, %s226
      %p233 = scmp.eq.s32.totalorder %s34, 1
      %p234 = por %p232, %p233
      %p235 = scmp.ne.s32.totalorder %s226, %s227
      %p236 = scmp.eq.s32.totalorder %s34, 0
      %p237 = por %p235, %p236
      %p238 = scmp.ne.s32.totalorder %s226, %s227
      %p239 = scmp.eq.s32.totalorder %s35, 1
      %p240 = por %p238, %p239
      %p242 = scmp.ne.s32.totalorder %s227, %s241
      %p243 = scmp.eq.s32.totalorder %s35, 0
      %p244 = por %p242, %p243
      %s246 = sadd.s32 %s245, 1
      %p249 = scmp.eq.s32.totalorder %s29, 1
      %p250 = scmp.ne.s32.totalorder %s245, %s247
      %p251 = scmp.eq.s32.totalorder %s29, 0
      %p252 = por %p250, %p251
      %p253 = scmp.ne.s32.totalorder %s245, %s247
      %p254 = scmp.eq.s32.totalorder %s34, 1
      %p255 = por %p253, %p254
      %p256 = scmp.ne.s32.totalorder %s247, %s248
      %p257 = scmp.eq.s32.totalorder %s34, 0
      %p258 = por %p256, %p257
      %p259 = scmp.ne.s32.totalorder %s247, %s248
      %p260 = scmp.eq.s32.totalorder %s35, 1
      %p261 = por %p259, %p260
      %p263 = scmp.ne.s32.totalorder %s248, %s262
      %p264 = scmp.eq.s32.totalorder %s35, 0
      %p265 = por %p263, %p264
      %s267 = sadd.s32 %s266, 1
      %p270 = scmp.eq.s32.totalorder %s29, 1
      %p271 = scmp.ne.s32.totalorder %s266, %s268
      %p272 = scmp.eq.s32.totalorder %s29, 0
      %p273 = por %p271, %p272
      %p274 = scmp.ne.s32.totalorder %s266, %s268
      %p275 = scmp.eq.s32.totalorder %s34, 1
      %p276 = por %p274, %p275
      %p277 = scmp.ne.s32.totalorder %s268, %s269
      %p278 = scmp.eq.s32.totalorder %s34, 0
      %p279 = por %p277, %p278
      %p280 = scmp.ne.s32.totalorder %s268, %s269
      %p281 = scmp.eq.s32.totalorder %s35, 1
      %p282 = por %p280, %p281
      %p284 = scmp.ne.s32.totalorder %s269, %s283
      %p285 = scmp.eq.s32.totalorder %s35, 0
      %p286 = por %p284, %p285
      %s288 = sadd.s32 %s287, 1
      %p291 = scmp.eq.s32.totalorder %s29, 1
      %p292 = scmp.ne.s32.totalorder %s287, %s289
      %p293 = scmp.eq.s32.totalorder %s29, 0
      %p294 = por %p292, %p293
      %p295 = scmp.ne.s32.totalorder %s287, %s289
      %p296 = scmp.eq.s32.totalorder %s34, 1
      %p297 = por %p295, %p296
      %p298 = scmp.ne.s32.totalorder %s289, %s290
      %p299 = scmp.eq.s32.totalorder %s34, 0
      %p300 = por %p298, %p299
      %p301 = scmp.ne.s32.totalorder %s289, %s290
      %p302 = scmp.eq.s32.totalorder %s35, 1
      %p303 = por %p301, %p302
      %p305 = scmp.ne.s32.totalorder %s290, %s304
      %p306 = scmp.eq.s32.totalorder %s35, 0
      %p307 = por %p305, %p306
      %s309 = sadd.s32 %s308, 1
      %p312 = scmp.eq.s32.totalorder %s29, 1
      %p313 = scmp.ne.s32.totalorder %s308, %s310
      %p314 = scmp.eq.s32.totalorder %s29, 0
      %p315 = por %p313, %p314
      %p316 = scmp.ne.s32.totalorder %s308, %s310
      %p317 = scmp.eq.s32.totalorder %s34, 1
      %p318 = por %p316, %p317
      %p319 = scmp.ne.s32.totalorder %s310, %s311
      %p320 = scmp.eq.s32.totalorder %s34, 0
      %p321 = por %p319, %p320
      %p322 = scmp.ne.s32.totalorder %s310, %s311
      %p323 = scmp.eq.s32.totalorder %s35, 1
      %p324 = por %p322, %p323
      %p326 = scmp.ne.s32.totalorder %s311, %s325
      %p327 = scmp.eq.s32.totalorder %s35, 0
      %p328 = por %p326, %p327
      %s329 = ssub.s32 %s36, %s48
      %p330 = scmp.eq.s32.totalorder %s329, 0
      %s332 = sadd.s32 %s331, 1
      %s333 = scalar_select %p330, %s331, %s332
      %p336 = pneg %p330
      %p337 = scmp.eq.s32.totalorder %s29, 1
      %p338 = por %p336, %p337
      %p339 = scmp.ne.s32.totalorder %s331, %s334
      %p340 = scmp.eq.s32.totalorder %s29, 0
      %p341 = por %p339, %p340
      %p342 = scmp.ne.s32.totalorder %s331, %s334
      %p343 = scmp.eq.s32.totalorder %s34, 1
      %p344 = por %p342, %p343
      %p345 = scmp.ne.s32.totalorder %s334, %s335
      %p346 = scmp.eq.s32.totalorder %s34, 0
      %p347 = por %p345, %p346
      %p348 = scmp.ne.s32.totalorder %s334, %s335
      %p349 = scmp.eq.s32.totalorder %s35, 1
      %p350 = por %p348, %p349
      %p352 = scmp.ne.s32.totalorder %s335, %s351
      %p353 = scmp.eq.s32.totalorder %s35, 0
      %p354 = por %p352, %p353
      %p355 = scmp.le.s32.totalorder 1, %s29
      %p356 = scmp.lt.s32.totalorder %s29, 3
      %p357 = pnand %p355, %p356
      %p358 = pneg %p357
      // Predicated region
      $region9: #{tpu_custom_call.1} parent=5 // pred_check
        _
      $region10: #{tpu_custom_call.1} parent=5 // pred_check_branch
        %360 = sbr.rel (%p357) target = $region12
      $region11: #{tpu_custom_call.1} parent=5 // pred_region
        %s361 = ssub.s32 %s29, 1
        // Predicated region
        $region13: #{tpu_custom_call.1} parent=11 // pred_check
          %p362 = pneg %p90
        $region14: #{tpu_custom_call.1} parent=11 // pred_check_branch
          %364 = sbr.rel (%p362) target = $region16
        $region15: #{tpu_custom_call.1} parent=11 // pred_region
          %366 = vsyncadd [#allocation7], 0
          %s368 = sshll.u32 %s1, 4
          %s369 = int_to_ptr.hbm [resolvable:$true] %s368
          %s370 = sshll.u32 [#allocation6], 4
          %s371 = int_to_ptr.vmem [resolvable:$true] %s370
          %373 = dma.hbm_to_vmem [thread:$0]  %s369, 128, %s371, [#allocation7]
        $region16: #{tpu_custom_call.1} parent=11 // pred_fallthru
          _
        // Predicated region
        $region17: #{tpu_custom_call.1} parent=11 // pred_check
          %p374 = pneg %p111
        $region18: #{tpu_custom_call.1} parent=11 // pred_check_branch
          %376 = sbr.rel (%p374) target = $region20
        $region19: #{tpu_custom_call.1} parent=11 // pred_region
          %378 = vsyncadd [#allocation7], 0
          %s380 = sshll.u32 %s2, 4
          %s381 = int_to_ptr.hbm [resolvable:$true] %s380
          %s382 = sshll.u32 [#allocation8], 4
          %s383 = int_to_ptr.vmem [resolvable:$true] %s382
          %385 = dma.hbm_to_vmem [thread:$0]  %s381, 32, %s383, [#allocation7]
        $region20: #{tpu_custom_call.1} parent=11 // pred_fallthru
          _
        // Predicated region
        $region21: #{tpu_custom_call.1} parent=11 // pred_check
          %p386 = pneg %p132
        $region22: #{tpu_custom_call.1} parent=11 // pred_check_branch
          %388 = sbr.rel (%p386) target = $region24
        $region23: #{tpu_custom_call.1} parent=11 // pred_region
          %390 = vsyncadd [#allocation10], 0
          %s391 = sshll.u32 %s3, 4
          %s392 = int_to_ptr.hbm [resolvable:$true] %s391
          %s393 = sshll.u32 [#allocation9], 4
          %s394 = int_to_ptr.vmem [resolvable:$true] %s393
          %399 = dma.hbm_to_vmem [thread:$0]  %s392, 4096, %s394, [#allocation10], 128, 128, 8
        $region24: #{tpu_custom_call.1} parent=11 // pred_fallthru
          _
        // Predicated region
        $region25: #{tpu_custom_call.1} parent=11 // pred_check
          %p400 = pneg %p153
        $region26: #{tpu_custom_call.1} parent=11 // pred_check_branch
          %402 = sbr.rel (%p400) target = $region28
        $region27: #{tpu_custom_call.1} parent=11 // pred_region
          _
        $region28: #{tpu_custom_call.1} parent=11 // pred_fallthru
          _
        // Predicated region
        $region29: #{tpu_custom_call.1} parent=11 // pred_check
          %p403 = pneg %p174
        $region30: #{tpu_custom_call.1} parent=11 // pred_check_branch
          %405 = sbr.rel (%p403) target = $region32
        $region31: #{tpu_custom_call.1} parent=11 // pred_region
          %407 = vsyncadd [#allocation10], 0
          %s408 = sshll.u32 %s5, 4
          %s409 = int_to_ptr.hbm [resolvable:$true] %s408
          %s410 = sshll.u32 [#allocation11], 4
          %s411 = int_to_ptr.vmem [resolvable:$true] %s410
          %416 = dma.hbm_to_vmem [thread:$0]  %s409, 4096, %s411, [#allocation10], 128, 128, 8
        $region32: #{tpu_custom_call.1} parent=11 // pred_fallthru
          _
        // Predicated region
        $region33: #{tpu_custom_call.1} parent=11 // pred_check
          %p417 = pneg %p195
        $region34: #{tpu_custom_call.1} parent=11 // pred_check_branch
          %419 = sbr.rel (%p417) target = $region36
        $region35: #{tpu_custom_call.1} parent=11 // pred_region
          _
        $region36: #{tpu_custom_call.1} parent=11 // pred_fallthru
          _
        // Predicated region
        $region37: #{tpu_custom_call.1} parent=11 // pred_check
          %p420 = pneg %p216
        $region38: #{tpu_custom_call.1} parent=11 // pred_check_branch
          %422 = sbr.rel (%p420) target = $region40
        $region39: #{tpu_custom_call.1} parent=11 // pred_region
          %424 = vsyncadd [#allocation13], 0
          %s425 = sshll.u32 %s7, 4
          %s426 = int_to_ptr.hbm [resolvable:$true] %s425
          %s427 = sshll.u32 [#allocation12], 4
          %s428 = int_to_ptr.vmem [resolvable:$true] %s427
          %433 = dma.hbm_to_vmem [thread:$0]  %s426, 2048, %s428, [#allocation13], 64, 64, 4
        $region40: #{tpu_custom_call.1} parent=11 // pred_fallthru
          _
        // Predicated region
        $region41: #{tpu_custom_call.1} parent=11 // pred_check
          %p434 = pneg %p237
        $region42: #{tpu_custom_call.1} parent=11 // pred_check_branch
          %436 = sbr.rel (%p434) target = $region44
        $region43: #{tpu_custom_call.1} parent=11 // pred_region
          _
        $region44: #{tpu_custom_call.1} parent=11 // pred_fallthru
          _
        // Predicated region
        $region45: #{tpu_custom_call.1} parent=11 // pred_check
          %p437 = pneg %p258
        $region46: #{tpu_custom_call.1} parent=11 // pred_check_branch
          %439 = sbr.rel (%p437) target = $region48
        $region47: #{tpu_custom_call.1} parent=11 // pred_region
          %441 = vsyncadd [#allocation13], 0
          %s442 = sshll.u32 %s9, 4
          %s443 = int_to_ptr.hbm [resolvable:$true] %s442
          %s444 = sshll.u32 [#allocation14], 4
          %s445 = int_to_ptr.vmem [resolvable:$true] %s444
          %450 = dma.hbm_to_vmem [thread:$0]  %s443, 1024, %s445, [#allocation13], 64, 64, 4
        $region48: #{tpu_custom_call.1} parent=11 // pred_fallthru
          _
        // Predicated region
        $region49: #{tpu_custom_call.1} parent=11 // pred_check
          %p451 = pneg %p279
        $region50: #{tpu_custom_call.1} parent=11 // pred_check_branch
          %453 = sbr.rel (%p451) target = $region52
        $region51: #{tpu_custom_call.1} parent=11 // pred_region
          _
        $region52: #{tpu_custom_call.1} parent=11 // pred_fallthru
          _
        // Predicated region
        $region53: #{tpu_custom_call.1} parent=11 // pred_check
          %p454 = pneg %p300
        $region54: #{tpu_custom_call.1} parent=11 // pred_check_branch
          %456 = sbr.rel (%p454) target = $region56
        $region55: #{tpu_custom_call.1} parent=11 // pred_region
          %458 = vsyncadd [#allocation16], 0
          %s459 = sshll.u32 %s11, 4
          %s460 = int_to_ptr.hbm [resolvable:$true] %s459
          %s461 = sshll.u32 [#allocation15], 4
          %s462 = int_to_ptr.vmem [resolvable:$true] %s461
          %467 = dma.hbm_to_vmem [thread:$0]  %s460, 2048, %s462, [#allocation16], 128, 128, 8
        $region56: #{tpu_custom_call.1} parent=11 // pred_fallthru
          _
        // Predicated region
        $region57: #{tpu_custom_call.1} parent=11 // pred_check
          %p468 = pneg %p321
        $region58: #{tpu_custom_call.1} parent=11 // pred_check_branch
          %470 = sbr.rel (%p468) target = $region60
        $region59: #{tpu_custom_call.1} parent=11 // pred_region
          _
        $region60: #{tpu_custom_call.1} parent=11 // pred_fallthru
          _
      $region12: #{tpu_custom_call.1} parent=5 // pred_fallthru
        _
      %p471 = scmp.lt.s32.totalorder %s29, 2
      // Predicated region
      $region61: #{tpu_custom_call.1} parent=5 // pred_check
        %p472 = pneg %p471
      $region62: #{tpu_custom_call.1} parent=5 // pred_check_branch
        %474 = sbr.rel (%p472) target = $region64
      $region63: #{tpu_custom_call.1} parent=5 // pred_region
        // Predicated region
        $region65: #{tpu_custom_call.1} parent=63 // pred_check
          %p475 = pneg %p63
        $region66: #{tpu_custom_call.1} parent=63 // pred_check_branch
          %477 = sbr.rel (%p475) target = $region68
        $region67: #{tpu_custom_call.1} parent=63 // pred_region
          %s478 = sand.u32 %s53, 1
          %s479 = scalar_lea.sflag [#allocation4], %s478
          %s480 = sand.u32 %s53, 1
          %s481 = smul.addr %s480, 4
          %s482 = scalar_lea.vmem [#allocation3], %s481
          %484 = vsyncadd %s479, 0
          %s485 = sadd.s32 %s37, %s36
          %s486 = smul.addr %s485, 4
          %s487 = scalar_lea.hbm %s0, %s486
          %s489 = sshll.u32 %s487, 4
          %s490 = int_to_ptr.hbm [resolvable:$true] %s489
          %s491 = sshll.u32 %s482, 4
          %s492 = int_to_ptr.vmem [resolvable:$true] %s491
          %494 = dma.hbm_to_vmem [thread:$0]  %s490, 64, %s492, %s479
        $region68: #{tpu_custom_call.1} parent=63 // pred_fallthru
          _
      $region64: #{tpu_custom_call.1} parent=5 // pred_fallthru
        _
      %p495 = scmp.le.s32.totalorder 1, %s29
      %p496 = scmp.lt.s32.totalorder %s29, 3
      %p497 = pnand %p495, %p496
      %p498 = pneg %p497
      // Predicated region
      $region69: #{tpu_custom_call.1} parent=5 // pred_check
        _
      $region70: #{tpu_custom_call.1} parent=5 // pred_check_branch
        %500 = sbr.rel (%p497) target = $region72
      $region71: #{tpu_custom_call.1} parent=5 // pred_region
        %s501 = ssub.s32 %s29, 1
        %s502 = sand.u32 %s56, 1
        %s503 = scalar_lea.sflag [#allocation4], %s502
        %s504 = sand.u32 %s56, 1
        %s505 = smul.addr %s504, 4
        %s506 = scalar_lea.vmem [#allocation3], %s505
        // Predicated region
        $region73: #{tpu_custom_call.1} parent=71 // pred_check
          %p507 = pneg %p69
        $region74: #{tpu_custom_call.1} parent=71 // pred_check_branch
          %509 = sbr.rel (%p507) target = $region76
        $region75: #{tpu_custom_call.1} parent=71 // pred_region
          %511 = dma.done %s503, 64
        $region76: #{tpu_custom_call.1} parent=71 // pred_fallthru
          _
        // Predicated region
        $region77: #{tpu_custom_call.1} parent=71 // pred_check
          %p512 = pneg %p90
        $region78: #{tpu_custom_call.1} parent=71 // pred_check_branch
          %514 = sbr.rel (%p512) target = $region80
        $region79: #{tpu_custom_call.1} parent=71 // pred_region
          %516 = dma.done [#allocation7], 128
        $region80: #{tpu_custom_call.1} parent=71 // pred_fallthru
          _
        // Predicated region
        $region81: #{tpu_custom_call.1} parent=71 // pred_check
          %p517 = pneg %p111
        $region82: #{tpu_custom_call.1} parent=71 // pred_check_branch
          %519 = sbr.rel (%p517) target = $region84
        $region83: #{tpu_custom_call.1} parent=71 // pred_region
          %521 = dma.done [#allocation7], 32
        $region84: #{tpu_custom_call.1} parent=71 // pred_fallthru
          _
        // Predicated region
        $region85: #{tpu_custom_call.1} parent=71 // pred_check
          %p522 = pneg %p132
        $region86: #{tpu_custom_call.1} parent=71 // pred_check_branch
          %524 = sbr.rel (%p522) target = $region88
        $region87: #{tpu_custom_call.1} parent=71 // pred_region
          %526 = dma.done [#allocation10], 4096
        $region88: #{tpu_custom_call.1} parent=71 // pred_fallthru
          _
        // Predicated region
        $region89: #{tpu_custom_call.1} parent=71 // pred_check
          %p527 = pneg %p174
        $region90: #{tpu_custom_call.1} parent=71 // pred_check_branch
          %529 = sbr.rel (%p527) target = $region92
        $region91: #{tpu_custom_call.1} parent=71 // pred_region
          %531 = dma.done [#allocation10], 4096
        $region92: #{tpu_custom_call.1} parent=71 // pred_fallthru
          _
        // Predicated region
        $region93: #{tpu_custom_call.1} parent=71 // pred_check
          %p532 = pneg %p216
        $region94: #{tpu_custom_call.1} parent=71 // pred_check_branch
          %534 = sbr.rel (%p532) target = $region96
        $region95: #{tpu_custom_call.1} parent=71 // pred_region
          %536 = dma.done [#allocation13], 2048
        $region96: #{tpu_custom_call.1} parent=71 // pred_fallthru
          _
        // Predicated region
        $region97: #{tpu_custom_call.1} parent=71 // pred_check
          %p537 = pneg %p258
        $region98: #{tpu_custom_call.1} parent=71 // pred_check_branch
          %539 = sbr.rel (%p537) target = $region100
        $region99: #{tpu_custom_call.1} parent=71 // pred_region
          %541 = dma.done [#allocation13], 1024
        $region100: #{tpu_custom_call.1} parent=71 // pred_fallthru
          _
        // Predicated region
        $region101: #{tpu_custom_call.1} parent=71 // pred_check
          %p542 = pneg %p300
        $region102: #{tpu_custom_call.1} parent=71 // pred_check_branch
          %544 = sbr.rel (%p542) target = $region104
        $region103: #{tpu_custom_call.1} parent=71 // pred_region
          %546 = dma.done [#allocation16], 2048
        $region104: #{tpu_custom_call.1} parent=71 // pred_fallthru
          _
        %s547 = sand.u32 %s56, 1
        %s548 = scalar_lea.sflag [#allocation4], %s547
        %s549 = sand.u32 %s56, 1
        %s550 = smul.addr %s549, 4
        %s551 = scalar_lea.vmem [#allocation3], %s550
        %p552 = pneg %p69
        %p553 = pneg %p66
        %p554 = pneg %p90
        %p555 = pneg %p87
        %p556 = pneg %p111
        %p557 = pneg %p108
        %p558 = pneg %p132
        %p559 = pneg %p129
        %p560 = pneg %p153
        %p561 = pneg %p150
        %p562 = pneg %p174
        %p563 = pneg %p171
        %p564 = pneg %p195
        %p565 = pneg %p192
        %p566 = pneg %p216
        %p567 = pneg %p213
        %p568 = pneg %p237
        %p569 = pneg %p234
        %p570 = pneg %p258
        %p571 = pneg %p255
        %p572 = pneg %p279
        %p573 = pneg %p276
        %p574 = pneg %p300
        %p575 = pneg %p297
        %p576 = pneg %p321
        %p577 = pneg %p318
        %p578 = pneg %p347
        %p579 = pneg %p344
        %s580 = sand.u32 %s334, 1
        %s581 = scalar_lea.sflag [#allocation5], %s580
        %s582 = sand.u32 %s334, 1
        %s583 = scalar_lea.vmem [#allocation17], %s582
        %p585 = scmp.eq.s32.totalorder %s39, 0
        // Predicated region
        $region105: #{tpu_custom_call.1} parent=71 // pred_check
          %p586 = pneg %p585
        $region106: #{tpu_custom_call.1} parent=71 // pred_check_branch
          %588 = sbr.rel (%p586) target = $region108
        $region107: #{tpu_custom_call.1} parent=71 // pred_region
          %589 = vst [vmem:[#allocation2] sm:$0x1] 0.0
        $region108: #{tpu_custom_call.1} parent=71 // pred_fallthru
          _
        %v590 = vld [vmem:[%s506] sm:$0xf]
        %v591 = vld [vmem:[#allocation6] sm:$0xff]
        %v592 = vld [vmem:[#allocation8] sm:$0x3]
        %v594 = vperm.slane %v592, 0
        %v595 = vperm.slane %v592, 1
        %v599 = vunpack.c.l.b16 %v591
        %v600 = vunpack.c.h.b16 %v591
        %v601 = vpack.c.b16 %v599, %v599
        %v602 = vpack.c.b16 %v600, %v600
        %vm603 = vcmask 64512
        %v605 = vsel %vm603, %v590, 0
        %vm607 = vcmask 1043456
        %v609 = vsel %vm607, %v601, 0
        %v612 = vsel %vm607, %v602, 0
        %614 = vmatpush.bf16.msra.mxu0 0
        %615 = vmatpush.bf16.msra.mxu0 0
        %616 = vmatpush.bf16.msra.mxu0 0
        %617 = vmatpush.bf16.msra.mxu0 0
        %618 = vmatpush.bf16.msra.mxu0 0
        %619 = vmatpush.bf16.msra.mxu0 0
        %620 = vmatpush.bf16.msra.mxu0 0
        %621 = vmatpush.bf16.msra.mxu0 %v609
        %622 = vmatmul.bf16.gmra.mxu0 %v605
        %v623 = vpop.f32.mrf.mxu0
        %v624 = vadd.f32 %v594, %v623
        %v625 = vpop.f32.mrf.mxu0
        %626 = vdwg.mxu0
        %627 = vmatpush.bf16.msra.mxu0 0
        %628 = vmatpush.bf16.msra.mxu0 0
        %629 = vmatpush.bf16.msra.mxu0 0
        %630 = vmatpush.bf16.msra.mxu0 0
        %631 = vmatpush.bf16.msra.mxu0 0
        %632 = vmatpush.bf16.msra.mxu0 0
        %633 = vmatpush.bf16.msra.mxu0 0
        %634 = vmatpush.bf16.msra.mxu0 %v612
        %635 = vmatmul.bf16.gmra.mxu0 %v605
        %v636 = vpop.f32.mrf.mxu0
        %v637 = vadd.f32 %v595, %v636
        %v638 = vpop.f32.mrf.mxu0
        %639 = vdwg.mxu0
        %v640 = vmul.f32 %v624, 0.02
        %v641 = vmul.f32 %v637, 0.02
        %v642 = vmax.f32 %v624, %v640
        %v643 = vmax.f32 %v637, %v641
        %v644 = vpack.c.bf16 %v642, %v642
        %v645 = vpack.c.bf16 %v643, %v643
        %v646 = vld [vmem:[#allocation9] sm:$0xff]
        %v647 = vld [vmem:[#allocation9 + $0x8] sm:$0xff]
        %v648 = vld [vmem:[#allocation9 + $0x10] sm:$0xff]
        %v649 = vld [vmem:[#allocation9 + $0x18] sm:$0xff]
        %v650 = vld [vmem:[#allocation9 + $0x20] sm:$0xff]
        %v651 = vld [vmem:[#allocation9 + $0x28] sm:$0xff]
        %v652 = vld [vmem:[#allocation9 + $0x30] sm:$0xff]
        %v653 = vld [vmem:[#allocation9 + $0x38] sm:$0xff]
        %v654 = vld [vmem:[#allocation9 + $0x40] sm:$0xff]
        %v655 = vld [vmem:[#allocation9 + $0x48] sm:$0xff]
        %v656 = vld [vmem:[#allocation9 + $0x50] sm:$0xff]
        %v657 = vld [vmem:[#allocation9 + $0x58] sm:$0xff]
        %v658 = vld [vmem:[#allocation9 + $0x60] sm:$0xff]
        %v659 = vld [vmem:[#allocation9 + $0x68] sm:$0xff]
        %v660 = vld [vmem:[#allocation9 + $0x70] sm:$0xff]
        %v661 = vld [vmem:[#allocation9 + $0x78] sm:$0xff]
        %v662 = vld [vmem:[#allocation9 + $0x80] sm:$0xff]
        %v663 = vld [vmem:[#allocation9 + $0x88] sm:$0xff]
        %v664 = vld [vmem:[#allocation9 + $0x90] sm:$0xff]
        %v665 = vld [vmem:[#allocation9 + $0x98] sm:$0xff]
        %v666 = vld [vmem:[#allocation9 + $0xa0] sm:$0xff]
        %v667 = vld [vmem:[#allocation9 + $0xa8] sm:$0xff]
        %v668 = vld [vmem:[#allocation9 + $0xb0] sm:$0xff]
        %v669 = vld [vmem:[#allocation9 + $0xb8] sm:$0xff]
        %v670 = vld [vmem:[#allocation9 + $0xc0] sm:$0xff]
        %v671 = vld [vmem:[#allocation9 + $0xc8] sm:$0xff]
        %v672 = vld [vmem:[#allocation9 + $0xd0] sm:$0xff]
        %v673 = vld [vmem:[#allocation9 + $0xd8] sm:$0xff]
        %v674 = vld [vmem:[#allocation9 + $0xe0] sm:$0xff]
        %v675 = vld [vmem:[#allocation9 + $0xe8] sm:$0xff]
        %v676 = vld [vmem:[#allocation9 + $0xf0] sm:$0xff]
        %v677 = vld [vmem:[#allocation9 + $0xf8] sm:$0xff]
        %v678 = vld [vmem:[%s4] sm:$0x3]
        %v680 = vperm.slane %v678, 0
        %v681 = vperm.slane %v678, 1
        %v716 = vunpack.c.l.b16 %v646
        %v717 = vunpack.c.h.b16 %v646
        %v718 = vunpack.c.l.b16 %v647
        %v719 = vunpack.c.h.b16 %v647
        %v720 = vunpack.c.l.b16 %v648
        %v721 = vunpack.c.h.b16 %v648
        %v722 = vunpack.c.l.b16 %v649
        %v723 = vunpack.c.h.b16 %v649
        %v724 = vunpack.c.l.b16 %v650
        %v725 = vunpack.c.h.b16 %v650
        %v726 = vunpack.c.l.b16 %v651
        %v727 = vunpack.c.h.b16 %v651
        %v728 = vunpack.c.l.b16 %v652
        %v729 = vunpack.c.h.b16 %v652
        %v730 = vunpack.c.l.b16 %v653
        %v731 = vunpack.c.h.b16 %v653
        %v732 = vunpack.c.l.b16 %v654
        %v733 = vunpack.c.h.b16 %v654
        %v734 = vunpack.c.l.b16 %v655
        %v735 = vunpack.c.h.b16 %v655
        %v736 = vunpack.c.l.b16 %v656
        %v737 = vunpack.c.h.b16 %v656
        %v738 = vunpack.c.l.b16 %v657
        %v739 = vunpack.c.h.b16 %v657
        %v740 = vunpack.c.l.b16 %v658
        %v741 = vunpack.c.h.b16 %v658
        %v742 = vunpack.c.l.b16 %v659
        %v743 = vunpack.c.h.b16 %v659
        %v744 = vunpack.c.l.b16 %v660
        %v745 = vunpack.c.h.b16 %v660
        %v746 = vunpack.c.l.b16 %v661
        %v747 = vunpack.c.h.b16 %v661
        %v748 = vunpack.c.l.b16 %v662
        %v749 = vunpack.c.h.b16 %v662
        %v750 = vunpack.c.l.b16 %v663
        %v751 = vunpack.c.h.b16 %v663
        %v752 = vunpack.c.l.b16 %v664
        %v753 = vunpack.c.h.b16 %v664
        %v754 = vunpack.c.l.b16 %v665
        %v755 = vunpack.c.h.b16 %v665
        %v756 = vunpack.c.l.b16 %v666
        %v757 = vunpack.c.h.b16 %v666
        %v758 = vunpack.c.l.b16 %v667
        %v759 = vunpack.c.h.b16 %v667
        %v760 = vunpack.c.l.b16 %v668
        %v761 = vunpack.c.h.b16 %v668
        %v762 = vunpack.c.l.b16 %v669
        %v763 = vunpack.c.h.b16 %v669
        %v764 = vunpack.c.l.b16 %v670
        %v765 = vunpack.c.h.b16 %v670
        %v766 = vunpack.c.l.b16 %v671
        %v767 = vunpack.c.h.b16 %v671
        %v768 = vunpack.c.l.b16 %v672
        %v769 = vunpack.c.h.b16 %v672
        %v770 = vunpack.c.l.b16 %v673
        %v771 = vunpack.c.h.b16 %v673
        %v772 = vunpack.c.l.b16 %v674
        %v773 = vunpack.c.h.b16 %v674
        %v774 = vunpack.c.l.b16 %v675
        %v775 = vunpack.c.h.b16 %v675
        %v776 = vunpack.c.l.b16 %v676
        %v777 = vunpack.c.h.b16 %v676
        %v778 = vunpack.c.l.b16 %v677
        %v779 = vunpack.c.h.b16 %v677
        %v780 = vpack.c.b16 %v718, %v716
        %v781 = vpack.c.b16 %v719, %v717
        %v782 = vpack.c.b16 %v722, %v720
        %v783 = vpack.c.b16 %v723, %v721
        %v784 = vpack.c.b16 %v726, %v724
        %v785 = vpack.c.b16 %v727, %v725
        %v786 = vpack.c.b16 %v730, %v728
        %v787 = vpack.c.b16 %v731, %v729
        %v788 = vpack.c.b16 %v734, %v732
        %v789 = vpack.c.b16 %v735, %v733
        %v790 = vpack.c.b16 %v738, %v736
        %v791 = vpack.c.b16 %v739, %v737
        %v792 = vpack.c.b16 %v742, %v740
        %v793 = vpack.c.b16 %v743, %v741
        %v794 = vpack.c.b16 %v746, %v744
        %v795 = vpack.c.b16 %v747, %v745
        %v796 = vpack.c.b16 %v750, %v748
        %v797 = vpack.c.b16 %v751, %v749
        %v798 = vpack.c.b16 %v754, %v752
        %v799 = vpack.c.b16 %v755, %v753
        %v800 = vpack.c.b16 %v758, %v756
        %v801 = vpack.c.b16 %v759, %v757
        %v802 = vpack.c.b16 %v762, %v760
        %v803 = vpack.c.b16 %v763, %v761
        %v804 = vpack.c.b16 %v766, %v764
        %v805 = vpack.c.b16 %v767, %v765
        %v806 = vpack.c.b16 %v770, %v768
        %v807 = vpack.c.b16 %v771, %v769
        %v808 = vpack.c.b16 %v774, %v772
        %v809 = vpack.c.b16 %v775, %v773
        %v810 = vpack.c.b16 %v778, %v776
        %v811 = vpack.c.b16 %v779, %v777
        %844 = vmatpush.bf16.msra.mxu0 %v794
        %845 = vmatpush.bf16.msra.mxu0 %v792
        %846 = vmatpush.bf16.msra.mxu0 %v790
        %847 = vmatpush.bf16.msra.mxu0 %v788
        %848 = vmatpush.bf16.msra.mxu0 %v786
        %849 = vmatpush.bf16.msra.mxu0 %v784
        %850 = vmatpush.bf16.msra.mxu0 %v782
        %851 = vmatpush.bf16.msra.mxu0 %v780
        %852 = vmatmul.bf16.gmra.mxu0 %v644
        %v853 = vpop.f32.mrf.mxu0
        %v854 = vadd.f32 %v680, %v853
        %v855 = vpop.f32.mrf.mxu0
        %856 = vdwg.mxu0
        %857 = vmatpush.bf16.msra.mxu0 %v810
        %858 = vmatpush.bf16.msra.mxu0 %v808
        %859 = vmatpush.bf16.msra.mxu0 %v806
        %860 = vmatpush.bf16.msra.mxu0 %v804
        %861 = vmatpush.bf16.msra.mxu0 %v802
        %862 = vmatpush.bf16.msra.mxu0 %v800
        %863 = vmatpush.bf16.msra.mxu0 %v798
        %864 = vmatpush.bf16.msra.mxu0 %v796
        %865 = vmatmul.bf16.gmra.mxu0 %v645
        %v866 = vpop.f32.mrf.mxu0
        %v867 = vadd.f32 %v854, %v866
        %v868 = vpop.f32.mrf.mxu0
        %869 = vdwg.mxu0
        %870 = vmatpush.bf16.msra.mxu0 %v795
        %871 = vmatpush.bf16.msra.mxu0 %v793
        %872 = vmatpush.bf16.msra.mxu0 %v791
        %873 = vmatpush.bf16.msra.mxu0 %v789
        %874 = vmatpush.bf16.msra.mxu0 %v787
        %875 = vmatpush.bf16.msra.mxu0 %v785
        %876 = vmatpush.bf16.msra.mxu0 %v783
        %877 = vmatpush.bf16.msra.mxu0 %v781
        %878 = vmatmul.bf16.gmra.mxu0 %v644
        %v879 = vpop.f32.mrf.mxu0
        %v880 = vadd.f32 %v681, %v879
        %v881 = vpop.f32.mrf.mxu0
        %882 = vdwg.mxu0
        %883 = vmatpush.bf16.msra.mxu0 %v811
        %884 = vmatpush.bf16.msra.mxu0 %v809
        %885 = vmatpush.bf16.msra.mxu0 %v807
        %886 = vmatpush.bf16.msra.mxu0 %v805
        %887 = vmatpush.bf16.msra.mxu0 %v803
        %888 = vmatpush.bf16.msra.mxu0 %v801
        %889 = vmatpush.bf16.msra.mxu0 %v799
        %890 = vmatpush.bf16.msra.mxu0 %v797
        %891 = vmatmul.bf16.gmra.mxu0 %v645
        %v892 = vpop.f32.mrf.mxu0
        %v893 = vadd.f32 %v880, %v892
        %v894 = vpop.f32.mrf.mxu0
        %895 = vdwg.mxu0
        %v896 = vmul.f32 %v867, 0.02
        %v897 = vmul.f32 %v893, 0.02
        %v898 = vmax.f32 %v867, %v896
        %v899 = vmax.f32 %v893, %v897
        %v900 = vpack.c.bf16 %v898, %v898
        %v901 = vpack.c.bf16 %v899, %v899
        %v902 = vld [vmem:[#allocation11] sm:$0xff]
        %v903 = vld [vmem:[#allocation11 + $0x8] sm:$0xff]
        %v904 = vld [vmem:[#allocation11 + $0x10] sm:$0xff]
        %v905 = vld [vmem:[#allocation11 + $0x18] sm:$0xff]
        %v906 = vld [vmem:[#allocation11 + $0x20] sm:$0xff]
        %v907 = vld [vmem:[#allocation11 + $0x28] sm:$0xff]
        %v908 = vld [vmem:[#allocation11 + $0x30] sm:$0xff]
        %v909 = vld [vmem:[#allocation11 + $0x38] sm:$0xff]
        %v910 = vld [vmem:[#allocation11 + $0x40] sm:$0xff]
        %v911 = vld [vmem:[#allocation11 + $0x48] sm:$0xff]
        %v912 = vld [vmem:[#allocation11 + $0x50] sm:$0xff]
        %v913 = vld [vmem:[#allocation11 + $0x58] sm:$0xff]
        %v914 = vld [vmem:[#allocation11 + $0x60] sm:$0xff]
        %v915 = vld [vmem:[#allocation11 + $0x68] sm:$0xff]
        %v916 = vld [vmem:[#allocation11 + $0x70] sm:$0xff]
        %v917 = vld [vmem:[#allocation11 + $0x78] sm:$0xff]
        %v918 = vld [vmem:[#allocation11 + $0x80] sm:$0xff]
        %v919 = vld [vmem:[#allocation11 + $0x88] sm:$0xff]
        %v920 = vld [vmem:[#allocation11 + $0x90] sm:$0xff]
        %v921 = vld [vmem:[#allocation11 + $0x98] sm:$0xff]
        %v922 = vld [vmem:[#allocation11 + $0xa0] sm:$0xff]
        %v923 = vld [vmem:[#allocation11 + $0xa8] sm:$0xff]
        %v924 = vld [vmem:[#allocation11 + $0xb0] sm:$0xff]
        %v925 = vld [vmem:[#allocation11 + $0xb8] sm:$0xff]
        %v926 = vld [vmem:[#allocation11 + $0xc0] sm:$0xff]
        %v927 = vld [vmem:[#allocation11 + $0xc8] sm:$0xff]
        %v928 = vld [vmem:[#allocation11 + $0xd0] sm:$0xff]
        %v929 = vld [vmem:[#allocation11 + $0xd8] sm:$0xff]
        %v930 = vld [vmem:[#allocation11 + $0xe0] sm:$0xff]
        %v931 = vld [vmem:[#allocation11 + $0xe8] sm:$0xff]
        %v932 = vld [vmem:[#allocation11 + $0xf0] sm:$0xff]
        %v933 = vld [vmem:[#allocation11 + $0xf8] sm:$0xff]
        %v934 = vld [vmem:[%s6] sm:$0x3]
        %v936 = vperm.slane %v934, 0
        %v937 = vperm.slane %v934, 1
        %v972 = vunpack.c.l.b16 %v902
        %v973 = vunpack.c.h.b16 %v902
        %v974 = vunpack.c.l.b16 %v903
        %v975 = vunpack.c.h.b16 %v903
        %v976 = vunpack.c.l.b16 %v904
        %v977 = vunpack.c.h.b16 %v904
        %v978 = vunpack.c.l.b16 %v905
        %v979 = vunpack.c.h.b16 %v905
        %v980 = vunpack.c.l.b16 %v906
        %v981 = vunpack.c.h.b16 %v906
        %v982 = vunpack.c.l.b16 %v907
        %v983 = vunpack.c.h.b16 %v907
        %v984 = vunpack.c.l.b16 %v908
        %v985 = vunpack.c.h.b16 %v908
        %v986 = vunpack.c.l.b16 %v909
        %v987 = vunpack.c.h.b16 %v909
        %v988 = vunpack.c.l.b16 %v910
        %v989 = vunpack.c.h.b16 %v910
        %v990 = vunpack.c.l.b16 %v911
        %v991 = vunpack.c.h.b16 %v911
        %v992 = vunpack.c.l.b16 %v912
        %v993 = vunpack.c.h.b16 %v912
        %v994 = vunpack.c.l.b16 %v913
        %v995 = vunpack.c.h.b16 %v913
        %v996 = vunpack.c.l.b16 %v914
        %v997 = vunpack.c.h.b16 %v914
        %v998 = vunpack.c.l.b16 %v915
        %v999 = vunpack.c.h.b16 %v915
        %v1000 = vunpack.c.l.b16 %v916
        %v1001 = vunpack.c.h.b16 %v916
        %v1002 = vunpack.c.l.b16 %v917
        %v1003 = vunpack.c.h.b16 %v917
        %v1004 = vunpack.c.l.b16 %v918
        %v1005 = vunpack.c.h.b16 %v918
        %v1006 = vunpack.c.l.b16 %v919
        %v1007 = vunpack.c.h.b16 %v919
        %v1008 = vunpack.c.l.b16 %v920
        %v1009 = vunpack.c.h.b16 %v920
        %v1010 = vunpack.c.l.b16 %v921
        %v1011 = vunpack.c.h.b16 %v921
        %v1012 = vunpack.c.l.b16 %v922
        %v1013 = vunpack.c.h.b16 %v922
        %v1014 = vunpack.c.l.b16 %v923
        %v1015 = vunpack.c.h.b16 %v923
        %v1016 = vunpack.c.l.b16 %v924
        %v1017 = vunpack.c.h.b16 %v924
        %v1018 = vunpack.c.l.b16 %v925
        %v1019 = vunpack.c.h.b16 %v925
        %v1020 = vunpack.c.l.b16 %v926
        %v1021 = vunpack.c.h.b16 %v926
        %v1022 = vunpack.c.l.b16 %v927
        %v1023 = vunpack.c.h.b16 %v927
        %v1024 = vunpack.c.l.b16 %v928
        %v1025 = vunpack.c.h.b16 %v928
        %v1026 = vunpack.c.l.b16 %v929
        %v1027 = vunpack.c.h.b16 %v929
        %v1028 = vunpack.c.l.b16 %v930
        %v1029 = vunpack.c.h.b16 %v930
        %v1030 = vunpack.c.l.b16 %v931
        %v1031 = vunpack.c.h.b16 %v931
        %v1032 = vunpack.c.l.b16 %v932
        %v1033 = vunpack.c.h.b16 %v932
        %v1034 = vunpack.c.l.b16 %v933
        %v1035 = vunpack.c.h.b16 %v933
        %v1036 = vpack.c.b16 %v974, %v972
        %v1037 = vpack.c.b16 %v975, %v973
        %v1038 = vpack.c.b16 %v978, %v976
        %v1039 = vpack.c.b16 %v979, %v977
        %v1040 = vpack.c.b16 %v982, %v980
        %v1041 = vpack.c.b16 %v983, %v981
        %v1042 = vpack.c.b16 %v986, %v984
        %v1043 = vpack.c.b16 %v987, %v985
        %v1044 = vpack.c.b16 %v990, %v988
        %v1045 = vpack.c.b16 %v991, %v989
        %v1046 = vpack.c.b16 %v994, %v992
        %v1047 = vpack.c.b16 %v995, %v993
        %v1048 = vpack.c.b16 %v998, %v996
        %v1049 = vpack.c.b16 %v999, %v997
        %v1050 = vpack.c.b16 %v1002, %v1000
        %v1051 = vpack.c.b16 %v1003, %v1001
        %v1052 = vpack.c.b16 %v1006, %v1004
        %v1053 = vpack.c.b16 %v1007, %v1005
        %v1054 = vpack.c.b16 %v1010, %v1008
        %v1055 = vpack.c.b16 %v1011, %v1009
        %v1056 = vpack.c.b16 %v1014, %v1012
        %v1057 = vpack.c.b16 %v1015, %v1013
        %v1058 = vpack.c.b16 %v1018, %v1016
        %v1059 = vpack.c.b16 %v1019, %v1017
        %v1060 = vpack.c.b16 %v1022, %v1020
        %v1061 = vpack.c.b16 %v1023, %v1021
        %v1062 = vpack.c.b16 %v1026, %v1024
        %v1063 = vpack.c.b16 %v1027, %v1025
        %v1064 = vpack.c.b16 %v1030, %v1028
        %v1065 = vpack.c.b16 %v1031, %v1029
        %v1066 = vpack.c.b16 %v1034, %v1032
        %v1067 = vpack.c.b16 %v1035, %v1033
        %1100 = vmatpush.bf16.msra.mxu0 %v1050
        %1101 = vmatpush.bf16.msra.mxu0 %v1048
        %1102 = vmatpush.bf16.msra.mxu0 %v1046
        %1103 = vmatpush.bf16.msra.mxu0 %v1044
        %1104 = vmatpush.bf16.msra.mxu0 %v1042
        %1105 = vmatpush.bf16.msra.mxu0 %v1040
        %1106 = vmatpush.bf16.msra.mxu0 %v1038
        %1107 = vmatpush.bf16.msra.mxu0 %v1036
        %1108 = vmatmul.bf16.gmra.mxu0 %v900
        %v1109 = vpop.f32.mrf.mxu0
        %v1110 = vadd.f32 %v936, %v1109
        %v1111 = vpop.f32.mrf.mxu0
        %1112 = vdwg.mxu0
        %1113 = vmatpush.bf16.msra.mxu0 %v1066
        %1114 = vmatpush.bf16.msra.mxu0 %v1064
        %1115 = vmatpush.bf16.msra.mxu0 %v1062
        %1116 = vmatpush.bf16.msra.mxu0 %v1060
        %1117 = vmatpush.bf16.msra.mxu0 %v1058
        %1118 = vmatpush.bf16.msra.mxu0 %v1056
        %1119 = vmatpush.bf16.msra.mxu0 %v1054
        %1120 = vmatpush.bf16.msra.mxu0 %v1052
        %1121 = vmatmul.bf16.gmra.mxu0 %v901
        %v1122 = vpop.f32.mrf.mxu0
        %v1123 = vadd.f32 %v1110, %v1122
        %v1124 = vpop.f32.mrf.mxu0
        %1125 = vdwg.mxu0
        %1126 = vmatpush.bf16.msra.mxu0 %v1051
        %1127 = vmatpush.bf16.msra.mxu0 %v1049
        %1128 = vmatpush.bf16.msra.mxu0 %v1047
        %1129 = vmatpush.bf16.msra.mxu0 %v1045
        %1130 = vmatpush.bf16.msra.mxu0 %v1043
        %1131 = vmatpush.bf16.msra.mxu0 %v1041
        %1132 = vmatpush.bf16.msra.mxu0 %v1039
        %1133 = vmatpush.bf16.msra.mxu0 %v1037
        %1134 = vmatmul.bf16.gmra.mxu0 %v900
        %v1135 = vpop.f32.mrf.mxu0
        %v1136 = vadd.f32 %v937, %v1135
        %v1137 = vpop.f32.mrf.mxu0
        %1138 = vdwg.mxu0
        %1139 = vmatpush.bf16.msra.mxu0 %v1067
        %1140 = vmatpush.bf16.msra.mxu0 %v1065
        %1141 = vmatpush.bf16.msra.mxu0 %v1063
        %1142 = vmatpush.bf16.msra.mxu0 %v1061
        %1143 = vmatpush.bf16.msra.mxu0 %v1059
        %1144 = vmatpush.bf16.msra.mxu0 %v1057
        %1145 = vmatpush.bf16.msra.mxu0 %v1055
        %1146 = vmatpush.bf16.msra.mxu0 %v1053
        %1147 = vmatmul.bf16.gmra.mxu0 %v901
        %v1148 = vpop.f32.mrf.mxu0
        %v1149 = vadd.f32 %v1136, %v1148
        %v1150 = vpop.f32.mrf.mxu0
        %1151 = vdwg.mxu0
        %v1152 = vmul.f32 %v1123, 0.02
        %v1153 = vmul.f32 %v1149, 0.02
        %v1154 = vmax.f32 %v1123, %v1152
        %v1155 = vmax.f32 %v1149, %v1153
        %v1156 = vpack.c.bf16 %v1154, %v1154
        %v1157 = vpack.c.bf16 %v1155, %v1155
        %v1158 = vld [vmem:[#allocation12] sm:$0xf]
        %v1159 = vld [vmem:[#allocation12 + $0x4] sm:$0xf]
        %v1160 = vld [vmem:[#allocation12 + $0x8] sm:$0xf]
        %v1161 = vld [vmem:[#allocation12 + $0xc] sm:$0xf]
        %v1162 = vld [vmem:[#allocation12 + $0x10] sm:$0xf]
        %v1163 = vld [vmem:[#allocation12 + $0x14] sm:$0xf]
        %v1164 = vld [vmem:[#allocation12 + $0x18] sm:$0xf]
        %v1165 = vld [vmem:[#allocation12 + $0x1c] sm:$0xf]
        %v1166 = vld [vmem:[#allocation12 + $0x20] sm:$0xf]
        %v1167 = vld [vmem:[#allocation12 + $0x24] sm:$0xf]
        %v1168 = vld [vmem:[#allocation12 + $0x28] sm:$0xf]
        %v1169 = vld [vmem:[#allocation12 + $0x2c] sm:$0xf]
        %v1170 = vld [vmem:[#allocation12 + $0x30] sm:$0xf]
        %v1171 = vld [vmem:[#allocation12 + $0x34] sm:$0xf]
        %v1172 = vld [vmem:[#allocation12 + $0x38] sm:$0xf]
        %v1173 = vld [vmem:[#allocation12 + $0x3c] sm:$0xf]
        %v1174 = vld [vmem:[#allocation12 + $0x40] sm:$0xf]
        %v1175 = vld [vmem:[#allocation12 + $0x44] sm:$0xf]
        %v1176 = vld [vmem:[#allocation12 + $0x48] sm:$0xf]
        %v1177 = vld [vmem:[#allocation12 + $0x4c] sm:$0xf]
        %v1178 = vld [vmem:[#allocation12 + $0x50] sm:$0xf]
        %v1179 = vld [vmem:[#allocation12 + $0x54] sm:$0xf]
        %v1180 = vld [vmem:[#allocation12 + $0x58] sm:$0xf]
        %v1181 = vld [vmem:[#allocation12 + $0x5c] sm:$0xf]
        %v1182 = vld [vmem:[#allocation12 + $0x60] sm:$0xf]
        %v1183 = vld [vmem:[#allocation12 + $0x64] sm:$0xf]
        %v1184 = vld [vmem:[#allocation12 + $0x68] sm:$0xf]
        %v1185 = vld [vmem:[#allocation12 + $0x6c] sm:$0xf]
        %v1186 = vld [vmem:[#allocation12 + $0x70] sm:$0xf]
        %v1187 = vld [vmem:[#allocation12 + $0x74] sm:$0xf]
        %v1188 = vld [vmem:[#allocation12 + $0x78] sm:$0xf]
        %v1189 = vld [vmem:[#allocation12 + $0x7c] sm:$0xf]
        %v1190 = vld [vmem:[%s8] sm:$0x1]
        %v1192 = vperm.slane %v1190, 0
        %v1226 = vunpack.c.l.b16 %v1158
        %v1227 = vunpack.c.l.b16 %v1159
        %v1228 = vunpack.c.l.b16 %v1160
        %v1229 = vunpack.c.l.b16 %v1161
        %v1230 = vunpack.c.l.b16 %v1162
        %v1231 = vunpack.c.l.b16 %v1163
        %v1232 = vunpack.c.l.b16 %v1164
        %v1233 = vunpack.c.l.b16 %v1165
        %v1234 = vunpack.c.l.b16 %v1166
        %v1235 = vunpack.c.l.b16 %v1167
        %v1236 = vunpack.c.l.b16 %v1168
        %v1237 = vunpack.c.l.b16 %v1169
        %v1238 = vunpack.c.l.b16 %v1170
        %v1239 = vunpack.c.l.b16 %v1171
        %v1240 = vunpack.c.l.b16 %v1172
        %v1241 = vunpack.c.l.b16 %v1173
        %v1242 = vunpack.c.l.b16 %v1174
        %v1243 = vunpack.c.l.b16 %v1175
        %v1244 = vunpack.c.l.b16 %v1176
        %v1245 = vunpack.c.l.b16 %v1177
        %v1246 = vunpack.c.l.b16 %v1178
        %v1247 = vunpack.c.l.b16 %v1179
        %v1248 = vunpack.c.l.b16 %v1180
        %v1249 = vunpack.c.l.b16 %v1181
        %v1250 = vunpack.c.l.b16 %v1182
        %v1251 = vunpack.c.l.b16 %v1183
        %v1252 = vunpack.c.l.b16 %v1184
        %v1253 = vunpack.c.l.b16 %v1185
        %v1254 = vunpack.c.l.b16 %v1186
        %v1255 = vunpack.c.l.b16 %v1187
        %v1256 = vunpack.c.l.b16 %v1188
        %v1257 = vunpack.c.l.b16 %v1189
        %v1258 = vpack.c.b16 %v1227, %v1226
        %v1259 = vpack.c.b16 %v1229, %v1228
        %v1260 = vpack.c.b16 %v1231, %v1230
        %v1261 = vpack.c.b16 %v1233, %v1232
        %v1262 = vpack.c.b16 %v1235, %v1234
        %v1263 = vpack.c.b16 %v1237, %v1236
        %v1264 = vpack.c.b16 %v1239, %v1238
        %v1265 = vpack.c.b16 %v1241, %v1240
        %v1266 = vpack.c.b16 %v1243, %v1242
        %v1267 = vpack.c.b16 %v1245, %v1244
        %v1268 = vpack.c.b16 %v1247, %v1246
        %v1269 = vpack.c.b16 %v1249, %v1248
        %v1270 = vpack.c.b16 %v1251, %v1250
        %v1271 = vpack.c.b16 %v1253, %v1252
        %v1272 = vpack.c.b16 %v1255, %v1254
        %v1273 = vpack.c.b16 %v1257, %v1256
        %1290 = vmatpush.bf16.msra.mxu0 %v1265
        %1291 = vmatpush.bf16.msra.mxu0 %v1264
        %1292 = vmatpush.bf16.msra.mxu0 %v1263
        %1293 = vmatpush.bf16.msra.mxu0 %v1262
        %1294 = vmatpush.bf16.msra.mxu0 %v1261
        %1295 = vmatpush.bf16.msra.mxu0 %v1260
        %1296 = vmatpush.bf16.msra.mxu0 %v1259
        %1297 = vmatpush.bf16.msra.mxu0 %v1258
        %1298 = vmatmul.bf16.gmra.mxu0 %v1156
        %v1299 = vpop.f32.mrf.mxu0
        %v1300 = vadd.f32 %v1192, %v1299
        %v1301 = vpop.f32.mrf.mxu0
        %1302 = vdwg.mxu0
        %1303 = vmatpush.bf16.msra.mxu0 %v1273
        %1304 = vmatpush.bf16.msra.mxu0 %v1272
        %1305 = vmatpush.bf16.msra.mxu0 %v1271
        %1306 = vmatpush.bf16.msra.mxu0 %v1270
        %1307 = vmatpush.bf16.msra.mxu0 %v1269
        %1308 = vmatpush.bf16.msra.mxu0 %v1268
        %1309 = vmatpush.bf16.msra.mxu0 %v1267
        %1310 = vmatpush.bf16.msra.mxu0 %v1266
        %1311 = vmatmul.bf16.gmra.mxu0 %v1157
        %v1312 = vpop.f32.mrf.mxu0
        %v1313 = vadd.f32 %v1300, %v1312
        %v1314 = vpop.f32.mrf.mxu0
        %1315 = vdwg.mxu0
        %v1316 = vmul.f32 %v1313, 0.02
        %v1317 = vmax.f32 %v1313, %v1316
        %v1318 = vpack.c.bf16 %v1317, %v1317
        %v1319 = vld [vmem:[#allocation14] sm:$0xf]
        %v1320 = vld [vmem:[#allocation14 + $0x4] sm:$0xf]
        %v1321 = vld [vmem:[#allocation14 + $0x8] sm:$0xf]
        %v1322 = vld [vmem:[#allocation14 + $0xc] sm:$0xf]
        %v1323 = vld [vmem:[#allocation14 + $0x10] sm:$0xf]
        %v1324 = vld [vmem:[#allocation14 + $0x14] sm:$0xf]
        %v1325 = vld [vmem:[#allocation14 + $0x18] sm:$0xf]
        %v1326 = vld [vmem:[#allocation14 + $0x1c] sm:$0xf]
        %v1327 = vld [vmem:[#allocation14 + $0x20] sm:$0xf]
        %v1328 = vld [vmem:[#allocation14 + $0x24] sm:$0xf]
        %v1329 = vld [vmem:[#allocation14 + $0x28] sm:$0xf]
        %v1330 = vld [vmem:[#allocation14 + $0x2c] sm:$0xf]
        %v1331 = vld [vmem:[#allocation14 + $0x30] sm:$0xf]
        %v1332 = vld [vmem:[#allocation14 + $0x34] sm:$0xf]
        %v1333 = vld [vmem:[#allocation14 + $0x38] sm:$0xf]
        %v1334 = vld [vmem:[#allocation14 + $0x3c] sm:$0xf]
        %v1335 = vld [vmem:[%s10] sm:$0x1]
        %v1337 = vperm.slane %v1335, 0
        %v1355 = vunpack.c.l.b16 %v1319
        %v1356 = vunpack.c.l.b16 %v1320
        %v1357 = vunpack.c.l.b16 %v1321
        %v1358 = vunpack.c.l.b16 %v1322
        %v1359 = vunpack.c.l.b16 %v1323
        %v1360 = vunpack.c.l.b16 %v1324
        %v1361 = vunpack.c.l.b16 %v1325
        %v1362 = vunpack.c.l.b16 %v1326
        %v1363 = vunpack.c.l.b16 %v1327
        %v1364 = vunpack.c.l.b16 %v1328
        %v1365 = vunpack.c.l.b16 %v1329
        %v1366 = vunpack.c.l.b16 %v1330
        %v1367 = vunpack.c.l.b16 %v1331
        %v1368 = vunpack.c.l.b16 %v1332
        %v1369 = vunpack.c.l.b16 %v1333
        %v1370 = vunpack.c.l.b16 %v1334
        %v1371 = vpack.c.b16 %v1356, %v1355
        %v1372 = vpack.c.b16 %v1358, %v1357
        %v1373 = vpack.c.b16 %v1360, %v1359
        %v1374 = vpack.c.b16 %v1362, %v1361
        %v1375 = vpack.c.b16 %v1364, %v1363
        %v1376 = vpack.c.b16 %v1366, %v1365
        %v1377 = vpack.c.b16 %v1368, %v1367
        %v1378 = vpack.c.b16 %v1370, %v1369
        %1387 = vmatpush.bf16.msra.mxu0 %v1378
        %1388 = vmatpush.bf16.msra.mxu0 %v1377
        %1389 = vmatpush.bf16.msra.mxu0 %v1376
        %1390 = vmatpush.bf16.msra.mxu0 %v1375
        %1391 = vmatpush.bf16.msra.mxu0 %v1374
        %1392 = vmatpush.bf16.msra.mxu0 %v1373
        %1393 = vmatpush.bf16.msra.mxu0 %v1372
        %1394 = vmatpush.bf16.msra.mxu0 %v1371
        %1395 = vmatmul.bf16.gmra.mxu0 %v1318
        %v1396 = vpop.f32.mrf.mxu0
        %v1397 = vadd.f32 %v1337, %v1396
        %v1398 = vpop.f32.mrf.mxu0
        %1399 = vdwg.mxu0
        %v1400 = vmul.f32 %v1397, 0.02
        %v1401 = vmax.f32 %v1397, %v1400
        %v1402 = vld [vmem:[#allocation2] sm:$0x1]
        %v1403 = vrot.slane %v1401, 4
        %v1404 = vadd.f32 %v1401, %v1403
        %v1405 = vrot.slane %v1404, 2
        %v1406 = vadd.f32 %v1404, %v1405
        %v1407 = vrot.slane %v1406, 1
        %v1408 = vadd.f32 %v1406, %v1407
        %v1409 = vadd.f32 %v1402, %v1408
        %1410 = vst [vmem:[#allocation2] sm:$0x1] %v1409
        // Predicated region
        $region109: #{tpu_custom_call.1} parent=71 // pred_check
          %p1411 = pneg %p585
        $region110: #{tpu_custom_call.1} parent=71 // pred_check_branch
          %1413 = sbr.rel (%p1411) target = $region112
        $region111: #{tpu_custom_call.1} parent=71 // pred_region
          %v1414 = vld [vmem:[#allocation2] sm:$0x1]
          %v1415 = vld [vmem:[#allocation15] sm:$0xff]
          %v1416 = vld [vmem:[#allocation15 + $0x8] sm:$0xff]
          %v1417 = vld [vmem:[#allocation15 + $0x10] sm:$0xff]
          %v1418 = vld [vmem:[#allocation15 + $0x18] sm:$0xff]
          %v1419 = vld [vmem:[#allocation15 + $0x20] sm:$0xff]
          %v1420 = vld [vmem:[#allocation15 + $0x28] sm:$0xff]
          %v1421 = vld [vmem:[#allocation15 + $0x30] sm:$0xff]
          %v1422 = vld [vmem:[#allocation15 + $0x38] sm:$0xff]
          %v1423 = vld [vmem:[#allocation15 + $0x40] sm:$0xff]
          %v1424 = vld [vmem:[#allocation15 + $0x48] sm:$0xff]
          %v1425 = vld [vmem:[#allocation15 + $0x50] sm:$0xff]
          %v1426 = vld [vmem:[#allocation15 + $0x58] sm:$0xff]
          %v1427 = vld [vmem:[#allocation15 + $0x60] sm:$0xff]
          %v1428 = vld [vmem:[#allocation15 + $0x68] sm:$0xff]
          %v1429 = vld [vmem:[#allocation15 + $0x70] sm:$0xff]
          %v1430 = vld [vmem:[#allocation15 + $0x78] sm:$0xff]
          %v1431 = vld [vmem:[%s12] sm:$0x1]
          %v1432 = vmul.f32 %v1431, 8.0
          %1433 = vmatpush.msra.mxu0 %v1430
          %1434 = vmatpush.msra.mxu0 %v1429
          %1435 = vmatpush.msra.mxu0 %v1428
          %1436 = vmatpush.msra.mxu0 %v1427
          %1437 = vmatpush.msra.mxu0 %v1426
          %1438 = vmatpush.msra.mxu0 %v1425
          %1439 = vmatpush.msra.mxu0 %v1424
          %1440 = vmatpush.msra.mxu0 %v1423
          %1441 = vmatpush.msra.mxu0 %v1422
          %1442 = vmatpush.msra.mxu0 %v1421
          %1443 = vmatpush.msra.mxu0 %v1420
          %1444 = vmatpush.msra.mxu0 %v1419
          %1445 = vmatpush.msra.mxu0 %v1418
          %1446 = vmatpush.msra.mxu0 %v1417
          %1447 = vmatpush.msra.mxu0 %v1416
          %1448 = vmatpush.msra.mxu0 %v1415
          %1449 = vmatmul.f32.gmra.mxu0 %v1414
          %v1450 = vpop.f32.mrf.mxu0
          %v1451 = vadd.f32 %v1432, %v1450
          %1452 = vdwg.mxu0
          %1453 = vst [vmem:[%s583] sm:$0x1] %v1451
        $region112: #{tpu_custom_call.1} parent=71 // pred_fallthru
          _
        %s1454 = sand.u32 %s334, 1
        %s1455 = scalar_lea.sflag [#allocation5], %s1454
        %s1456 = sand.u32 %s334, 1
        %s1457 = scalar_lea.vmem [#allocation17], %s1456
        // Predicated region
        $region113: #{tpu_custom_call.1} parent=71 // pred_check
          %p1458 = pneg %p344
        $region114: #{tpu_custom_call.1} parent=71 // pred_check_branch
          %1460 = sbr.rel (%p1458) target = $region116
        $region115: #{tpu_custom_call.1} parent=71 // pred_region
          %1462 = vsyncadd %s1455, 0
          %s1463 = scalar_lea.hbm %s13, %s38
          %s1465 = sshll.u32 %s1457, 4
          %s1466 = int_to_ptr.vmem [resolvable:$true] %s1465
          %s1467 = sshll.u32 %s1463, 4
          %s1468 = int_to_ptr.hbm [resolvable:$true] %s1467
          %1470 = dma.vmem_to_hbm [thread:$0]  %s1466, 16, %s1468, %s1455
        $region116: #{tpu_custom_call.1} parent=71 // pred_fallthru
          _
      $region72: #{tpu_custom_call.1} parent=5 // pred_fallthru
        _
      %p1471 = scmp.le.s32.totalorder 2, %s29
      // Predicated region
      $region117: #{tpu_custom_call.1} parent=5 // pred_check
        %p1472 = pneg %p1471
      $region118: #{tpu_custom_call.1} parent=5 // pred_check_branch
        %1474 = sbr.rel (%p1472) target = $region120
      $region119: #{tpu_custom_call.1} parent=5 // pred_region
        %s1475 = ssub.s32 %s29, 2
        // Predicated region
        $region121: #{tpu_custom_call.1} parent=119 // pred_check
          %p1476 = pneg %p350
        $region122: #{tpu_custom_call.1} parent=119 // pred_check_branch
          %1478 = sbr.rel (%p1476) target = $region124
        $region123: #{tpu_custom_call.1} parent=119 // pred_region
          %s1479 = sand.u32 %s335, 1
          %s1480 = scalar_lea.sflag [#allocation5], %s1479
          %s1481 = sand.u32 %s335, 1
          %s1482 = scalar_lea.vmem [#allocation17], %s1481
          %1484 = dma.done %s1480, 16
        $region124: #{tpu_custom_call.1} parent=119 // pred_fallthru
          _
      $region120: #{tpu_custom_call.1} parent=5 // pred_fallthru
        _
    $region6: #{tpu_custom_call.1} parent=1 // loop_footer
      %s33 = sadd.s32 1, %s29
    $region7: #{tpu_custom_call.1} parent=1 // loop_footer_branch
      %28 = sbr.rel target = $region3
    $region8: #{tpu_custom_call.1} parent=1 // loop_exit
      _
    %1485 = vsyncpa [#allocation4], 1
    %s1486 = scalar_lea.sflag [#allocation4], 1
    %1487 = vsyncpa %s1486, 1
    %1488 = vsyncpa [#allocation7], 1
    %1489 = vsyncpa [#allocation10], 1
    %1490 = vsyncpa [#allocation13], 1
    %1491 = vsyncpa [#allocation16], 1
    %1492 = vsyncpa [#allocation5], 1
    %s1493 = scalar_lea.sflag [#allocation5], 1
    %1494 = vsyncpa %s1493, 1

</llo_original>
